<compile_context>
chip_gen: v6e
topology: v6e:2x2x1
jax: 0.10.0
libtpu: 0.0.40
codegen_flags: <defaults>
</compile_context>

<pallas_src>
import functools

import jax
import jax.numpy as jnp
from jax import lax
from jax.experimental import pallas as pl
from jax.experimental.pallas import tpu as pltpu


def _round_up(x, m):
    return ((x + m - 1) // m) * m


# ----------------------------------------------------------------------------
# Pallas kernel: grouped implicit-GEMM conv on a space-to-depth input plane.
# One grid step = one (batch image, Cout tile).
# ----------------------------------------------------------------------------
def _conv_s2d_kernel(x_ref, w_ref, b_ref, o_ref, *, group_offsets, m_rows, relu):
    # x_ref: (1, Hq*Wq, P) bf16   space-to-depth plane, P = s*s*Cin
    # w_ref: (G, P, TN)    bf16   per-group phase-expanded weights (zero-filled)
    # b_ref: (1, TN)       f32    bias
    # o_ref: (1, m_rows, TN) bf16 flattened (Ho, Wq) output rows
    acc = None
    for g, off in enumerate(group_offsets):
        xs = x_ref[0, off:off + m_rows, :]                 # contiguous slab
        d = jnp.dot(xs, w_ref[g], preferred_element_type=jnp.float32)
        acc = d if acc is None else acc + d
    r = acc + b_ref[...]                                   # implicit (1,TN) bcast
    if relu:
        r = jnp.maximum(r, 0.0)
    o_ref[0] = r.astype(o_ref.dtype)


# ----------------------------------------------------------------------------
# Conv layer wrapper: space-to-depth prepass + Pallas kernel.
# ----------------------------------------------------------------------------
def conv2d_relu_pallas_nhwc(x, w, b, stride, pad, relu=True):
    """x: (B,H,W,Cin) NHWC (any float dtype), w: (Cout,Cin,k,k), b: (Cout,).

    Returns relu(conv(x, w) + b) as (B, Ho, Wo, Cout) bf16.
    """
    B, H, W, Cin = x.shape
    Cout, Cw, k, _ = w.shape
    assert Cw == Cin, (Cw, Cin)
    s = stride

    Ho = (H + 2 * pad - k) // s + 1
    Wo = (W + 2 * pad - k) // s + 1
    g1 = (k - 1) // s + 1                 # tap groups per spatial axis
    G = g1 * g1
    Wq = Wo + (g1 - 1)                    # phase-plane width (>= Wo)
    Hq = Ho + (g1 - 1) + (1 if g1 > 1 else 0)
    P = s * s * Cin                       # contraction length (exact, no pad)
    M = Ho * Wq                           # output rows per image (junk cols sliced)

    # --- space-to-depth: single HBM pass over the input (replaces im2col) ---
    x = x.astype(jnp.bfloat16)            # cast before padding (half the bytes)
    xp = jnp.pad(x, ((0, 0),
                     (pad, max(0, Hq * s - H - pad)),
                     (pad, max(0, Wq * s - W - pad)),
                     (0, 0)))
    xp = xp[:, :Hq * s, :Wq * s, :]
    xp = xp.reshape(B, Hq, s, Wq, s, Cin)
    xp = jnp.transpose(xp, (0, 1, 3, 2, 4, 5))          # (B,Hq,Wq,ph,pw,C)
    xs2d = xp.reshape(B, Hq * Wq, P)

    # --- weights: (Cout,Cin,k,k) -> (G, P, N_pad), phase-expanded & zero-filled
    N_pad = max(128, _round_up(Cout, 128))
    kpad = g1 * s
    wt = jnp.transpose(w, (2, 3, 1, 0))                 # (k,k,Cin,Cout)
    wt = jnp.pad(wt, ((0, kpad - k), (0, kpad - k), (0, 0), (0, N_pad - Cout)))
    wt = wt.reshape(g1, s, g1, s, Cin, N_pad)
    wt = jnp.transpose(wt, (0, 2, 1, 3, 4, 5))          # (gh,gw,ph,pw,Cin,N)
    wg = wt.reshape(G, P, N_pad).astype(jnp.bfloat16)

    b2 = jnp.pad(b.astype(jnp.float32), (0, N_pad - Cout)).reshape(1, N_pad)

    # slab start (in plane rows) for each tap group; static python ints
    group_offsets = tuple(gh * Wq + gw for gh in range(g1) for gw in range(g1))

    TN = 256 if N_pad % 256 == 0 else 128               # full 256-wide MXU passes
    grid = (B, N_pad // TN)

    out = pl.pallas_call(
        functools.partial(_conv_s2d_kernel, group_offsets=group_offsets,
                          m_rows=M, relu=relu),
        out_shape=jax.ShapeDtypeStruct((B, M, N_pad), jnp.bfloat16),
        grid_spec=pltpu.PrefetchScalarGridSpec(
            num_scalar_prefetch=0,
            grid=grid,
            in_specs=[
                pl.BlockSpec((1, Hq * Wq, P), lambda bb, j: (bb, 0, 0)),   # plane
                pl.BlockSpec((G, P, TN), lambda bb, j: (0, 0, j)),         # weights
                pl.BlockSpec((1, TN), lambda bb, j: (0, j)),               # bias
            ],
            out_specs=pl.BlockSpec((1, M, TN), lambda bb, j: (bb, 0, j)),
        ),
        compiler_params=pltpu.CompilerParams(
            dimension_semantics=("parallel", "parallel"),
            vmem_limit_bytes=32 * 1024 * 1024,
        ),
    )(xs2d, wg, b2)

    # drop junk columns (wo >= Wo) and padded output channels
    out = out.reshape(B, Ho, Wq, N_pad)[:, :, :Wo, :Cout]
    return out


# ----------------------------------------------------------------------------
# Mask nearest-neighbor resize (tiny; integer index math matching
# PyTorch F.interpolate(mode='nearest') exactly)
# ----------------------------------------------------------------------------
def interpolate_mask_nearest(mask_bool, Ho, Wo):
    B, H, W = mask_bool.shape
    ridx = (jnp.arange(Ho) * H) // Ho
    cidx = (jnp.arange(Wo) * W) // Wo
    return mask_bool[:, ridx][:, :, cidx]


# ----------------------------------------------------------------------------
# Synthetic "body" (IntermediateLayerGetter stand-in) + BackboneBase.forward
# ----------------------------------------------------------------------------
def init_backbone_params(key):
    def conv_init(kk, cout, cin, ksz):
        kw, kb = jax.random.split(kk)
        fan_in = cin * ksz * ksz
        w = jax.random.normal(kw, (cout, cin, ksz, ksz), jnp.float32)
        w = w * (1.0 / jnp.sqrt(fan_in))
        b = jax.random.normal(kb, (cout,), jnp.float32) * 0.01
        return {'w': w, 'b': b}

    k0, k1, k2, k3 = jax.random.split(key, 4)
    # scaled-down channel widths standing in for ResNet's [512, 1024, 2048]
    return {
        'stem':   conv_init(k0, 16, 3, 3),      # total stride 4
        'layer2': conv_init(k1, 32, 16, 3),     # total stride 8
        'layer3': conv_init(k2, 64, 32, 3),     # total stride 16
        'layer4': conv_init(k3, 128, 64, 3),    # total stride 32
    }


def backbone_base_forward(params, tensors, mask, return_interm_layers=True):
    """Mirrors BackboneBase.forward(NestedTensor(tensors, mask)); tensors NCHW."""
    # single layout change + bf16 cast at entry; all conv layers run NHWC/bf16
    h = jnp.transpose(tensors, (0, 2, 3, 1)).astype(jnp.bfloat16)

    h = conv2d_relu_pallas_nhwc(h, params['stem']['w'], params['stem']['b'],
                                stride=4, pad=1)
    feats = {}
    h = conv2d_relu_pallas_nhwc(h, params['layer2']['w'], params['layer2']['b'],
                                stride=2, pad=1)
    if return_interm_layers:
        feats['0'] = h
    h = conv2d_relu_pallas_nhwc(h, params['layer3']['w'], params['layer3']['b'],
                                stride=2, pad=1)
    if return_interm_layers:
        feats['1'] = h
    h = conv2d_relu_pallas_nhwc(h, params['layer4']['w'], params['layer4']['b'],
                                stride=2, pad=1)
    feats['2' if return_interm_layers else '0'] = h

    out = {}
    for name, xf in feats.items():
        Hf, Wf = xf.shape[1], xf.shape[2]
        m = interpolate_mask_nearest(mask, Hf, Wf)
        out[name] = {'tensors': jnp.transpose(xf, (0, 3, 1, 2)).astype(jnp.float32),
                     'mask': m}
    return out


# ----------------------------------------------------------------------------
# Pure-JAX reference conv (same bf16 operands, f32 accumulation) for checks.
# ----------------------------------------------------------------------------
def _conv_ref_nhwc(x, w, b, stride, pad, relu=True):
    out = lax.conv_general_dilated(
        x.astype(jnp.bfloat16),
        jnp.transpose(w, (2, 3, 1, 0)).astype(jnp.bfloat16),
        window_strides=(stride, stride),
        padding=((pad, pad), (pad, pad)),
        dimension_numbers=('NHWC', 'HWIO', 'NHWC'),
        preferred_element_type=jnp.float32)
    out = out + b.reshape(1, 1, 1, -1).astype(jnp.float32)
    if relu:
        out = jnp.maximum(out, 0.0)
    return out


if __name__ == "__main__":
    key = jax.random.PRNGKey(0)
    kx, kp, kc = jax.random.split(key, 3)

    B, Cin, H, W = 2, 3, 64, 64
    x = jax.random.normal(kx, (B, Cin, H, W), jnp.float32)
    # padding mask: True = padded pixels (DETR NestedTensor convention)
    mask = jnp.zeros((B, H, W), dtype=jnp.bool_)
    mask = mask.at[0, :, 48:].set(True)
    mask = mask.at[1, 40:, :].set(True)

    params = init_backbone_params(kp)

    fwd = jax.jit(functools.partial(backbone_base_forward,
                                    return_interm_layers=True))
    out = fwd(params, x, mask)
    out = jax.tree_util.tree_map(jax.block_until_ready, out)

    assert out['0']['tensors'].shape == (B, 32, 8, 8)
    assert out['1']['tensors'].shape == (B, 64, 4, 4)
    assert out['2']['tensors'].shape == (B, 128, 2, 2)
    assert out['0']['mask'].shape == (B, 8, 8) and out['0']['mask'].dtype == jnp.bool_
    assert out['1']['mask'].shape == (B, 4, 4)
    assert out['2']['mask'].shape == (B, 2, 2)

    # Correctness spot-checks of the Pallas conv against XLA's conv
    # (both use bf16 operands with f32 accumulation).
    x_nhwc = jnp.transpose(x, (0, 2, 3, 1)).astype(jnp.bfloat16)
    got = conv2d_relu_pallas_nhwc(x_nhwc, params['stem']['w'],
                                  params['stem']['b'], stride=4, pad=1)
    ref = _conv_ref_nhwc(x_nhwc, params['stem']['w'], params['stem']['b'], 4, 1)
    assert jnp.allclose(got.astype(jnp.float32), ref, rtol=2e-2, atol=2e-2)

    # stride-2 layer: exercises the 4-group path and the junk-column slicing
    xc = jax.random.normal(kc, (B, 16, 16, 16), jnp.float32).astype(jnp.bfloat16)
    got2 = conv2d_relu_pallas_nhwc(xc, params['layer2']['w'],
                                   params['layer2']['b'], stride=2, pad=1)
    ref2 = _conv_ref_nhwc(xc, params['layer2']['w'], params['layer2']['b'], 2, 1)
    assert jnp.allclose(got2.astype(jnp.float32), ref2, rtol=2e-2, atol=2e-2)

    jax.block_until_ready((got, got2))
    print("KERNEL_OK")
</pallas_src>

<mosaic_0001>
module attributes {stable_mosaic.version = 11 : i64} {
  func.func @_conv_s2d_kernel(%arg0: i32, %arg1: i32, %arg2: memref<1x256x48xbf16, #tpu.memory_space<vmem>>, %arg3: memref<1x48x128xbf16, #tpu.memory_space<vmem>>, %arg4: memref<1x128xf32, #tpu.memory_space<vmem>>, %arg5: memref<1x256x128xbf16, #tpu.memory_space<vmem>>) attributes {dimension_semantics = [#tpu.dimension_semantics<parallel>, #tpu.dimension_semantics<parallel>], iteration_bounds = array<i64: 2, 1>, scalar_prefetch = 0 : i64, scratch_operands = 0 : i64, tpu.core_type = #tpu.core_type<tc>, window_params = [{transform_indices = @transform_0, window_bounds = array<i64: 1, 256, 48>}, {transform_indices = @transform_1, window_bounds = array<i64: 1, 48, 128>}, {transform_indices = @transform_2, window_bounds = array<i64: 1, 128>}, {transform_indices = @transform_3, window_bounds = array<i64: 1, 256, 128>}]} {
    %c0 = arith.constant 0 : index
    %c0_0 = arith.constant 0 : index
    %c0_1 = arith.constant 0 : index
    %0 = vector.load %arg2[%c0, %c0_0, %c0_1] : memref<1x256x48xbf16, #tpu.memory_space<vmem>>, vector<1x256x48xbf16>
    %1 = vector.shape_cast %0 : vector<1x256x48xbf16> to vector<256x48xbf16>
    %c0_2 = arith.constant 0 : index
    %c0_3 = arith.constant 0 : index
    %c0_4 = arith.constant 0 : index
    %2 = vector.load %arg3[%c0_2, %c0_3, %c0_4] : memref<1x48x128xbf16, #tpu.memory_space<vmem>>, vector<1x48x128xbf16>
    %3 = vector.shape_cast %2 : vector<1x48x128xbf16> to vector<48x128xbf16>
    %cst = arith.constant dense<0.000000e+00> : vector<256x128xf32>
    %4 = tpu.matmul %1, %3, %cst {dimension_numbers = #tpu.dot_dimension_numbers<[1], [0], [0], [1], [0, 0, 1, 1], [], []>} : vector<256x48xbf16>, vector<48x128xbf16>, vector<256x128xf32> -> vector<256x128xf32>
    %c0_5 = arith.constant 0 : index
    %c0_6 = arith.constant 0 : index
    %5 = vector.load %arg4[%c0_5, %c0_6] : memref<1x128xf32, #tpu.memory_space<vmem>>, vector<1x128xf32>
    %6 = vector.broadcast %5 : vector<1x128xf32> to vector<256x128xf32>
    %7 = arith.addf %4, %6 : vector<256x128xf32>
    %cst_7 = arith.constant 0.000000e+00 : f32
    %8 = vector.broadcast %cst_7 : f32 to vector<256x128xf32>
    %9 = arith.maximumf %7, %8 : vector<256x128xf32>
    %10 = arith.truncf %9 : vector<256x128xf32> to vector<256x128xbf16>
    %c0_8 = arith.constant 0 : index
    %c0_9 = arith.constant 0 : index
    %c0_10 = arith.constant 0 : index
    %11 = vector.load %arg5[%c0_8, %c0_9, %c0_10] : memref<1x256x128xbf16, #tpu.memory_space<vmem>>, vector<1x256x128xbf16>
    %12 = vector.shape_cast %11 : vector<1x256x128xbf16> to vector<256x128xbf16>
    %13 = vector.shape_cast %10 : vector<256x128xbf16> to vector<1x256x128xbf16>
    tpu.vector_store %arg5[%c0_8, %c0_9, %c0_10], %13 {strides = array<i32>} : memref<1x256x128xbf16, #tpu.memory_space<vmem>>, vector<1x256x128xbf16>,
    return
  }
  func.func @transform_0(%arg0: i32, %arg1: i32) -> (i32, i32, i32) {
    %c0_i32 = arith.constant 0 : i32
    %c0_i32_0 = arith.constant 0 : i32
    %c0_i32_1 = arith.constant 0 : i32
    return %arg0, %c0_i32, %c0_i32_0 : i32, i32, i32
  }
  func.func @transform_1(%arg0: i32, %arg1: i32) -> (i32, i32, i32) {
    %c0_i32 = arith.constant 0 : i32
    %c0_i32_0 = arith.constant 0 : i32
    %c0_i32_1 = arith.constant 0 : i32
    return %c0_i32, %c0_i32_0, %arg1 : i32, i32, i32
  }
  func.func @transform_2(%arg0: i32, %arg1: i32) -> (i32, i32) {
    %c0_i32 = arith.constant 0 : i32
    %c0_i32_0 = arith.constant 0 : i32
    return %c0_i32, %arg1 : i32, i32
  }
  func.func @transform_3(%arg0: i32, %arg1: i32) -> (i32, i32, i32) {
    %c0_i32 = arith.constant 0 : i32
    %c0_i32_0 = arith.constant 0 : i32
    return %arg0, %c0_i32, %arg1 : i32, i32, i32
  }
}

module attributes {stable_mosaic.version = 11 : i64} {
  func.func @_conv_s2d_kernel(%arg0: i32, %arg1: i32, %arg2: memref<1x90x64xbf16, #tpu.memory_space<vmem>>, %arg3: memref<4x64x128xbf16, #tpu.memory_space<vmem>>, %arg4: memref<1x128xf32, #tpu.memory_space<vmem>>, %arg5: memref<1x72x128xbf16, #tpu.memory_space<vmem>>) attributes {dimension_semantics = [#tpu.dimension_semantics<parallel>, #tpu.dimension_semantics<parallel>], iteration_bounds = array<i64: 2, 1>, scalar_prefetch = 0 : i64, scratch_operands = 0 : i64, tpu.core_type = #tpu.core_type<tc>, window_params = [{transform_indices = @transform_0, window_bounds = array<i64: 1, 90, 64>}, {transform_indices = @transform_1, window_bounds = array<i64: 4, 64, 128>}, {transform_indices = @transform_2, window_bounds = array<i64: 1, 128>}, {transform_indices = @transform_3, window_bounds = array<i64: 1, 72, 128>}]} {
    %c0 = arith.constant 0 : index
    %c0_0 = arith.constant 0 : index
    %c0_1 = arith.constant 0 : index
    %0 = vector.load %arg2[%c0, %c0_0, %c0_1] : memref<1x90x64xbf16, #tpu.memory_space<vmem>>, vector<1x72x64xbf16>
    %1 = vector.shape_cast %0 : vector<1x72x64xbf16> to vector<72x64xbf16>
    %c0_2 = arith.constant 0 : index
    %c0_3 = arith.constant 0 : index
    %c0_4 = arith.constant 0 : index
    %2 = vector.load %arg3[%c0_2, %c0_3, %c0_4] : memref<4x64x128xbf16, #tpu.memory_space<vmem>>, vector<1x64x128xbf16>
    %3 = vector.shape_cast %2 : vector<1x64x128xbf16> to vector<64x128xbf16>
    %cst = arith.constant dense<0.000000e+00> : vector<72x128xf32>
    %4 = tpu.matmul %1, %3, %cst {dimension_numbers = #tpu.dot_dimension_numbers<[1], [0], [0], [1], [0, 0, 1, 1], [], []>} : vector<72x64xbf16>, vector<64x128xbf16>, vector<72x128xf32> -> vector<72x128xf32>
    %c0_5 = arith.constant 0 : index
    %c1 = arith.constant 1 : index
    %c0_6 = arith.constant 0 : index
    %5 = vector.load %arg2[%c0_5, %c1, %c0_6] : memref<1x90x64xbf16, #tpu.memory_space<vmem>>, vector<1x72x64xbf16>
    %6 = vector.shape_cast %5 : vector<1x72x64xbf16> to vector<72x64xbf16>
    %c1_7 = arith.constant 1 : index
    %c0_8 = arith.constant 0 : index
    %c0_9 = arith.constant 0 : index
    %7 = vector.load %arg3[%c1_7, %c0_8, %c0_9] : memref<4x64x128xbf16, #tpu.memory_space<vmem>>, vector<1x64x128xbf16>
    %8 = vector.shape_cast %7 : vector<1x64x128xbf16> to vector<64x128xbf16>
    %cst_10 = arith.constant dense<0.000000e+00> : vector<72x128xf32>
    %9 = tpu.matmul %6, %8, %cst_10 {dimension_numbers = #tpu.dot_dimension_numbers<[1], [0], [0], [1], [0, 0, 1, 1], [], []>} : vector<72x64xbf16>, vector<64x128xbf16>, vector<72x128xf32> -> vector<72x128xf32>
    %10 = arith.addf %4, %9 : vector<72x128xf32>
    %c0_11 = arith.constant 0 : index
    %c9 = arith.constant 9 : index
    %c0_12 = arith.constant 0 : index
    %11 = vector.load %arg2[%c0_11, %c9, %c0_12] : memref<1x90x64xbf16, #tpu.memory_space<vmem>>, vector<1x72x64xbf16>
    %12 = vector.shape_cast %11 : vector<1x72x64xbf16> to vector<72x64xbf16>
    %c2 = arith.constant 2 : index
    %c0_13 = arith.constant 0 : index
    %c0_14 = arith.constant 0 : index
    %13 = vector.load %arg3[%c2, %c0_13, %c0_14] : memref<4x64x128xbf16, #tpu.memory_space<vmem>>, vector<1x64x128xbf16>
    %14 = vector.shape_cast %13 : vector<1x64x128xbf16> to vector<64x128xbf16>
    %cst_15 = arith.constant dense<0.000000e+00> : vector<72x128xf32>
    %15 = tpu.matmul %12, %14, %cst_15 {dimension_numbers = #tpu.dot_dimension_numbers<[1], [0], [0], [1], [0, 0, 1, 1], [], []>} : vector<72x64xbf16>, vector<64x128xbf16>, vector<72x128xf32> -> vector<72x128xf32>
    %16 = arith.addf %10, %15 : vector<72x128xf32>
    %c0_16 = arith.constant 0 : index
    %c10 = arith.constant 10 : index
    %c0_17 = arith.constant 0 : index
    %17 = vector.load %arg2[%c0_16, %c10, %c0_17] : memref<1x90x64xbf16, #tpu.memory_space<vmem>>, vector<1x72x64xbf16>
    %18 = vector.shape_cast %17 : vector<1x72x64xbf16> to vector<72x64xbf16>
    %c3 = arith.constant 3 : index
    %c0_18 = arith.constant 0 : index
    %c0_19 = arith.constant 0 : index
    %19 = vector.load %arg3[%c3, %c0_18, %c0_19] : memref<4x64x128xbf16, #tpu.memory_space<vmem>>, vector<1x64x128xbf16>
    %20 = vector.shape_cast %19 : vector<1x64x128xbf16> to vector<64x128xbf16>
    %cst_20 = arith.constant dense<0.000000e+00> : vector<72x128xf32>
    %21 = tpu.matmul %18, %20, %cst_20 {dimension_numbers = #tpu.dot_dimension_numbers<[1], [0], [0], [1], [0, 0, 1, 1], [], []>} : vector<72x64xbf16>, vector<64x128xbf16>, vector<72x128xf32> -> vector<72x128xf32>
    %22 = arith.addf %16, %21 : vector<72x128xf32>
    %c0_21 = arith.constant 0 : index
    %c0_22 = arith.constant 0 : index
    %23 = vector.load %arg4[%c0_21, %c0_22] : memref<1x128xf32, #tpu.memory_space<vmem>>, vector<1x128xf32>
    %24 = vector.broadcast %23 : vector<1x128xf32> to vector<72x128xf32>
    %25 = arith.addf %22, %24 : vector<72x128xf32>
    %cst_23 = arith.constant 0.000000e+00 : f32
    %26 = vector.broadcast %cst_23 : f32 to vector<72x128xf32>
    %27 = arith.maximumf %25, %26 : vector<72x128xf32>
    %28 = arith.truncf %27 : vector<72x128xf32> to vector<72x128xbf16>
    %c0_24 = arith.constant 0 : index
    %c0_25 = arith.constant 0 : index
    %c0_26 = arith.constant 0 : index
    %29 = vector.load %arg5[%c0_24, %c0_25, %c0_26] : memref<1x72x128xbf16, #tpu.memory_space<vmem>>, vector<1x72x128xbf16>
    %30 = vector.shape_cast %29 : vector<1x72x128xbf16> to vector<72x128xbf16>
    %31 = vector.shape_cast %28 : vector<72x128xbf16> to vector<1x72x128xbf16>
    tpu.vector_store %arg5[%c0_24, %c0_25, %c0_26], %31 {strides = array<i32>} : memref<1x72x128xbf16, #tpu.memory_space<vmem>>, vector<1x72x128xbf16>,
    return
  }
  func.func @transform_0(%arg0: i32, %arg1: i32) -> (i32, i32, i32) {
    %c0_i32 = arith.constant 0 : i32
    %c0_i32_0 = arith.constant 0 : i32
    %c0_i32_1 = arith.constant 0 : i32
    return %arg0, %c0_i32, %c0_i32_0 : i32, i32, i32
  }
  func.func @transform_1(%arg0: i32, %arg1: i32) -> (i32, i32, i32) {
    %c0_i32 = arith.constant 0 : i32
    %c0_i32_0 = arith.constant 0 : i32
    %c0_i32_1 = arith.constant 0 : i32
    return %c0_i32, %c0_i32_0, %arg1 : i32, i32, i32
  }
  func.func @transform_2(%arg0: i32, %arg1: i32) -> (i32, i32) {
    %c0_i32 = arith.constant 0 : i32
    %c0_i32_0 = arith.constant 0 : i32
    return %c0_i32, %arg1 : i32, i32
  }
  func.func @transform_3(%arg0: i32, %arg1: i32) -> (i32, i32, i32) {
    %c0_i32 = arith.constant 0 : i32
    %c0_i32_0 = arith.constant 0 : i32
    return %arg0, %c0_i32, %arg1 : i32, i32, i32
  }
}

module attributes {stable_mosaic.version = 11 : i64} {
  func.func @_conv_s2d_kernel(%arg0: i32, %arg1: i32, %arg2: memref<1x30x128xbf16, #tpu.memory_space<vmem>>, %arg3: memref<4x128x128xbf16, #tpu.memory_space<vmem>>, %arg4: memref<1x128xf32, #tpu.memory_space<vmem>>, %arg5: memref<1x20x128xbf16, #tpu.memory_space<vmem>>) attributes {dimension_semantics = [#tpu.dimension_semantics<parallel>, #tpu.dimension_semantics<parallel>], iteration_bounds = array<i64: 2, 1>, scalar_prefetch = 0 : i64, scratch_operands = 0 : i64, tpu.core_type = #tpu.core_type<tc>, window_params = [{transform_indices = @transform_0, window_bounds = array<i64: 1, 30, 128>}, {transform_indices = @transform_1, window_bounds = array<i64: 4, 128, 128>}, {transform_indices = @transform_2, window_bounds = array<i64: 1, 128>}, {transform_indices = @transform_3, window_bounds = array<i64: 1, 20, 128>}]} {
    %c0 = arith.constant 0 : index
    %c0_0 = arith.constant 0 : index
    %c0_1 = arith.constant 0 : index
    %0 = vector.load %arg2[%c0, %c0_0, %c0_1] : memref<1x30x128xbf16, #tpu.memory_space<vmem>>, vector<1x20x128xbf16>
    %1 = vector.shape_cast %0 : vector<1x20x128xbf16> to vector<20x128xbf16>
    %c0_2 = arith.constant 0 : index
    %c0_3 = arith.constant 0 : index
    %c0_4 = arith.constant 0 : index
    %2 = vector.load %arg3[%c0_2, %c0_3, %c0_4] : memref<4x128x128xbf16, #tpu.memory_space<vmem>>, vector<1x128x128xbf16>
    %3 = vector.shape_cast %2 : vector<1x128x128xbf16> to vector<128x128xbf16>
    %cst = arith.constant dense<0.000000e+00> : vector<20x128xf32>
    %4 = tpu.matmul %1, %3, %cst {dimension_numbers = #tpu.dot_dimension_numbers<[1], [0], [0], [1], [0, 0, 1, 1], [], []>} : vector<20x128xbf16>, vector<128x128xbf16>, vector<20x128xf32> -> vector<20x128xf32>
    %c0_5 = arith.constant 0 : index
    %c1 = arith.constant 1 : index
    %c0_6 = arith.constant 0 : index
    %5 = vector.load %arg2[%c0_5, %c1, %c0_6] : memref<1x30x128xbf16, #tpu.memory_space<vmem>>, vector<1x20x128xbf16>
    %6 = vector.shape_cast %5 : vector<1x20x128xbf16> to vector<20x128xbf16>
    %c1_7 = arith.constant 1 : index
    %c0_8 = arith.constant 0 : index
    %c0_9 = arith.constant 0 : index
    %7 = vector.load %arg3[%c1_7, %c0_8, %c0_9] : memref<4x128x128xbf16, #tpu.memory_space<vmem>>, vector<1x128x128xbf16>
    %8 = vector.shape_cast %7 : vector<1x128x128xbf16> to vector<128x128xbf16>
    %cst_10 = arith.constant dense<0.000000e+00> : vector<20x128xf32>
    %9 = tpu.matmul %6, %8, %cst_10 {dimension_numbers = #tpu.dot_dimension_numbers<[1], [0], [0], [1], [0, 0, 1, 1], [], []>} : vector<20x128xbf16>, vector<128x128xbf16>, vector<20x128xf32> -> vector<20x128xf32>
    %10 = arith.addf %4, %9 : vector<20x128xf32>
    %c0_11 = arith.constant 0 : index
    %c5 = arith.constant 5 : index
    %c0_12 = arith.constant 0 : index
    %11 = vector.load %arg2[%c0_11, %c5, %c0_12] : memref<1x30x128xbf16, #tpu.memory_space<vmem>>, vector<1x20x128xbf16>
    %12 = vector.shape_cast %11 : vector<1x20x128xbf16> to vector<20x128xbf16>
    %c2 = arith.constant 2 : index
    %c0_13 = arith.constant 0 : index
    %c0_14 = arith.constant 0 : index
    %13 = vector.load %arg3[%c2, %c0_13, %c0_14] : memref<4x128x128xbf16, #tpu.memory_space<vmem>>, vector<1x128x128xbf16>
    %14 = vector.shape_cast %13 : vector<1x128x128xbf16> to vector<128x128xbf16>
    %cst_15 = arith.constant dense<0.000000e+00> : vector<20x128xf32>
    %15 = tpu.matmul %12, %14, %cst_15 {dimension_numbers = #tpu.dot_dimension_numbers<[1], [0], [0], [1], [0, 0, 1, 1], [], []>} : vector<20x128xbf16>, vector<128x128xbf16>, vector<20x128xf32> -> vector<20x128xf32>
    %16 = arith.addf %10, %15 : vector<20x128xf32>
    %c0_16 = arith.constant 0 : index
    %c6 = arith.constant 6 : index
    %c0_17 = arith.constant 0 : index
    %17 = vector.load %arg2[%c0_16, %c6, %c0_17] : memref<1x30x128xbf16, #tpu.memory_space<vmem>>, vector<1x20x128xbf16>
    %18 = vector.shape_cast %17 : vector<1x20x128xbf16> to vector<20x128xbf16>
    %c3 = arith.constant 3 : index
    %c0_18 = arith.constant 0 : index
    %c0_19 = arith.constant 0 : index
    %19 = vector.load %arg3[%c3, %c0_18, %c0_19] : memref<4x128x128xbf16, #tpu.memory_space<vmem>>, vector<1x128x128xbf16>
    %20 = vector.shape_cast %19 : vector<1x128x128xbf16> to vector<128x128xbf16>
    %cst_20 = arith.constant dense<0.000000e+00> : vector<20x128xf32>
    %21 = tpu.matmul %18, %20, %cst_20 {dimension_numbers = #tpu.dot_dimension_numbers<[1], [0], [0], [1], [0, 0, 1, 1], [], []>} : vector<20x128xbf16>, vector<128x128xbf16>, vector<20x128xf32> -> vector<20x128xf32>
    %22 = arith.addf %16, %21 : vector<20x128xf32>
    %c0_21 = arith.constant 0 : index
    %c0_22 = arith.constant 0 : index
    %23 = vector.load %arg4[%c0_21, %c0_22] : memref<1x128xf32, #tpu.memory_space<vmem>>, vector<1x128xf32>
    %24 = vector.broadcast %23 : vector<1x128xf32> to vector<20x128xf32>
    %25 = arith.addf %22, %24 : vector<20x128xf32>
    %cst_23 = arith.constant 0.000000e+00 : f32
    %26 = vector.broadcast %cst_23 : f32 to vector<20x128xf32>
    %27 = arith.maximumf %25, %26 : vector<20x128xf32>
    %28 = arith.truncf %27 : vector<20x128xf32> to vector<20x128xbf16>
    %c0_24 = arith.constant 0 : index
    %c0_25 = arith.constant 0 : index
    %c0_26 = arith.constant 0 : index
    %29 = vector.load %arg5[%c0_24, %c0_25, %c0_26] : memref<1x20x128xbf16, #tpu.memory_space<vmem>>, vector<1x20x128xbf16>
    %30 = vector.shape_cast %29 : vector<1x20x128xbf16> to vector<20x128xbf16>
    %31 = vector.shape_cast %28 : vector<20x128xbf16> to vector<1x20x128xbf16>
    tpu.vector_store %arg5[%c0_24, %c0_25, %c0_26], %31 {strides = array<i32>} : memref<1x20x128xbf16, #tpu.memory_space<vmem>>, vector<1x20x128xbf16>,
    return
  }
  func.func @transform_0(%arg0: i32, %arg1: i32) -> (i32, i32, i32) {
    %c0_i32 = arith.constant 0 : i32
    %c0_i32_0 = arith.constant 0 : i32
    %c0_i32_1 = arith.constant 0 : i32
    return %arg0, %c0_i32, %c0_i32_0 : i32, i32, i32
  }
  func.func @transform_1(%arg0: i32, %arg1: i32) -> (i32, i32, i32) {
    %c0_i32 = arith.constant 0 : i32
    %c0_i32_0 = arith.constant 0 : i32
    %c0_i32_1 = arith.constant 0 : i32
    return %c0_i32, %c0_i32_0, %arg1 : i32, i32, i32
  }
  func.func @transform_2(%arg0: i32, %arg1: i32) -> (i32, i32) {
    %c0_i32 = arith.constant 0 : i32
    %c0_i32_0 = arith.constant 0 : i32
    return %c0_i32, %arg1 : i32, i32
  }
  func.func @transform_3(%arg0: i32, %arg1: i32) -> (i32, i32, i32) {
    %c0_i32 = arith.constant 0 : i32
    %c0_i32_0 = arith.constant 0 : i32
    return %arg0, %c0_i32, %arg1 : i32, i32, i32
  }
}

module attributes {stable_mosaic.version = 11 : i64} {
  func.func @_conv_s2d_kernel(%arg0: i32, %arg1: i32, %arg2: memref<1x12x256xbf16, #tpu.memory_space<vmem>>, %arg3: memref<4x256x128xbf16, #tpu.memory_space<vmem>>, %arg4: memref<1x128xf32, #tpu.memory_space<vmem>>, %arg5: memref<1x6x128xbf16, #tpu.memory_space<vmem>>) attributes {dimension_semantics = [#tpu.dimension_semantics<parallel>, #tpu.dimension_semantics<parallel>], iteration_bounds = array<i64: 2, 1>, scalar_prefetch = 0 : i64, scratch_operands = 0 : i64, tpu.core_type = #tpu.core_type<tc>, window_params = [{transform_indices = @transform_0, window_bounds = array<i64: 1, 12, 256>}, {transform_indices = @transform_1, window_bounds = array<i64: 4, 256, 128>}, {transform_indices = @transform_2, window_bounds = array<i64: 1, 128>}, {transform_indices = @transform_3, window_bounds = array<i64: 1, 6, 128>}]} {
    %c0 = arith.constant 0 : index
    %c0_0 = arith.constant 0 : index
    %c0_1 = arith.constant 0 : index
    %0 = vector.load %arg2[%c0, %c0_0, %c0_1] : memref<1x12x256xbf16, #tpu.memory_space<vmem>>, vector<1x6x256xbf16>
    %1 = vector.shape_cast %0 : vector<1x6x256xbf16> to vector<6x256xbf16>
    %c0_2 = arith.constant 0 : index
    %c0_3 = arith.constant 0 : index
    %c0_4 = arith.constant 0 : index
    %2 = vector.load %arg3[%c0_2, %c0_3, %c0_4] : memref<4x256x128xbf16, #tpu.memory_space<vmem>>, vector<1x256x128xbf16>
    %3 = vector.shape_cast %2 : vector<1x256x128xbf16> to vector<256x128xbf16>
    %cst = arith.constant dense<0.000000e+00> : vector<6x128xf32>
    %4 = tpu.matmul %1, %3, %cst {dimension_numbers = #tpu.dot_dimension_numbers<[1], [0], [0], [1], [0, 0, 1, 1], [], []>} : vector<6x256xbf16>, vector<256x128xbf16>, vector<6x128xf32> -> vector<6x128xf32>
    %c0_5 = arith.constant 0 : index
    %c1 = arith.constant 1 : index
    %c0_6 = arith.constant 0 : index
    %5 = vector.load %arg2[%c0_5, %c1, %c0_6] : memref<1x12x256xbf16, #tpu.memory_space<vmem>>, vector<1x6x256xbf16>
    %6 = vector.shape_cast %5 : vector<1x6x256xbf16> to vector<6x256xbf16>
    %c1_7 = arith.constant 1 : index
    %c0_8 = arith.constant 0 : index
    %c0_9 = arith.constant 0 : index
    %7 = vector.load %arg3[%c1_7, %c0_8, %c0_9] : memref<4x256x128xbf16, #tpu.memory_space<vmem>>, vector<1x256x128xbf16>
    %8 = vector.shape_cast %7 : vector<1x256x128xbf16> to vector<256x128xbf16>
    %cst_10 = arith.constant dense<0.000000e+00> : vector<6x128xf32>
    %9 = tpu.matmul %6, %8, %cst_10 {dimension_numbers = #tpu.dot_dimension_numbers<[1], [0], [0], [1], [0, 0, 1, 1], [], []>} : vector<6x256xbf16>, vector<256x128xbf16>, vector<6x128xf32> -> vector<6x128xf32>
    %10 = arith.addf %4, %9 : vector<6x128xf32>
    %c0_11 = arith.constant 0 : index
    %c3 = arith.constant 3 : index
    %c0_12 = arith.constant 0 : index
    %11 = vector.load %arg2[%c0_11, %c3, %c0_12] : memref<1x12x256xbf16, #tpu.memory_space<vmem>>, vector<1x6x256xbf16>
    %12 = vector.shape_cast %11 : vector<1x6x256xbf16> to vector<6x256xbf16>
    %c2 = arith.constant 2 : index
    %c0_13 = arith.constant 0 : index
    %c0_14 = arith.constant 0 : index
    %13 = vector.load %arg3[%c2, %c0_13, %c0_14] : memref<4x256x128xbf16, #tpu.memory_space<vmem>>, vector<1x256x128xbf16>
    %14 = vector.shape_cast %13 : vector<1x256x128xbf16> to vector<256x128xbf16>
    %cst_15 = arith.constant dense<0.000000e+00> : vector<6x128xf32>
    %15 = tpu.matmul %12, %14, %cst_15 {dimension_numbers = #tpu.dot_dimension_numbers<[1], [0], [0], [1], [0, 0, 1, 1], [], []>} : vector<6x256xbf16>, vector<256x128xbf16>, vector<6x128xf32> -> vector<6x128xf32>
    %16 = arith.addf %10, %15 : vector<6x128xf32>
    %c0_16 = arith.constant 0 : index
    %c4 = arith.constant 4 : index
    %c0_17 = arith.constant 0 : index
    %17 = vector.load %arg2[%c0_16, %c4, %c0_17] : memref<1x12x256xbf16, #tpu.memory_space<vmem>>, vector<1x6x256xbf16>
    %18 = vector.shape_cast %17 : vector<1x6x256xbf16> to vector<6x256xbf16>
    %c3_18 = arith.constant 3 : index
    %c0_19 = arith.constant 0 : index
    %c0_20 = arith.constant 0 : index
    %19 = vector.load %arg3[%c3_18, %c0_19, %c0_20] : memref<4x256x128xbf16, #tpu.memory_space<vmem>>, vector<1x256x128xbf16>
    %20 = vector.shape_cast %19 : vector<1x256x128xbf16> to vector<256x128xbf16>
    %cst_21 = arith.constant dense<0.000000e+00> : vector<6x128xf32>
    %21 = tpu.matmul %18, %20, %cst_21 {dimension_numbers = #tpu.dot_dimension_numbers<[1], [0], [0], [1], [0, 0, 1, 1], [], []>} : vector<6x256xbf16>, vector<256x128xbf16>, vector<6x128xf32> -> vector<6x128xf32>
    %22 = arith.addf %16, %21 : vector<6x128xf32>
    %c0_22 = arith.constant 0 : index
    %c0_23 = arith.constant 0 : index
    %23 = vector.load %arg4[%c0_22, %c0_23] : memref<1x128xf32, #tpu.memory_space<vmem>>, vector<1x128xf32>
    %24 = vector.broadcast %23 : vector<1x128xf32> to vector<6x128xf32>
    %25 = arith.addf %22, %24 : vector<6x128xf32>
    %cst_24 = arith.constant 0.000000e+00 : f32
    %26 = vector.broadcast %cst_24 : f32 to vector<6x128xf32>
    %27 = arith.maximumf %25, %26 : vector<6x128xf32>
    %28 = arith.truncf %27 : vector<6x128xf32> to vector<6x128xbf16>
    %c0_25 = arith.constant 0 : index
    %c0_26 = arith.constant 0 : index
    %c0_27 = arith.constant 0 : index
    %29 = vector.load %arg5[%c0_25, %c0_26, %c0_27] : memref<1x6x128xbf16, #tpu.memory_space<vmem>>, vector<1x6x128xbf16>
    %30 = vector.shape_cast %29 : vector<1x6x128xbf16> to vector<6x128xbf16>
    %31 = vector.shape_cast %28 : vector<6x128xbf16> to vector<1x6x128xbf16>
    tpu.vector_store %arg5[%c0_25, %c0_26, %c0_27], %31 {strides = array<i32>} : memref<1x6x128xbf16, #tpu.memory_space<vmem>>, vector<1x6x128xbf16>,
    return
  }
  func.func @transform_0(%arg0: i32, %arg1: i32) -> (i32, i32, i32) {
    %c0_i32 = arith.constant 0 : i32
    %c0_i32_0 = arith.constant 0 : i32
    %c0_i32_1 = arith.constant 0 : i32
    return %arg0, %c0_i32, %c0_i32_0 : i32, i32, i32
  }
  func.func @transform_1(%arg0: i32, %arg1: i32) -> (i32, i32, i32) {
    %c0_i32 = arith.constant 0 : i32
    %c0_i32_0 = arith.constant 0 : i32
    %c0_i32_1 = arith.constant 0 : i32
    return %c0_i32, %c0_i32_0, %arg1 : i32, i32, i32
  }
  func.func @transform_2(%arg0: i32, %arg1: i32) -> (i32, i32) {
    %c0_i32 = arith.constant 0 : i32
    %c0_i32_0 = arith.constant 0 : i32
    return %c0_i32, %arg1 : i32, i32
  }
  func.func @transform_3(%arg0: i32, %arg1: i32) -> (i32, i32, i32) {
    %c0_i32 = arith.constant 0 : i32
    %c0_i32_0 = arith.constant 0 : i32
    return %arg0, %c0_i32, %arg1 : i32, i32, i32
  }
}

</mosaic_0001>

<llo_original>
// kernel: backbone_base_forward.4
$region0: #{backbone_base_forward.4}
  #allocation0 [shape = 'u32[]', space=smem, size = 0x4, offset = 0x4, fixed_abs, tag = 'smem constant byte address 0x4 - core index']
  #allocation1 [shape = 'u32[144,128]{1,0:T(1,128)}', space=vmem, size = 0x12000, scoped, tag = 'internal scratch']
  %s0 = inlined_call_operand.vmem [shape: bf16[2,256,48], index: 0, kind: input, shape index: {}]
  %s1 = inlined_call_operand.vmem [shape: bf16[1,48,128], index: 1, kind: input, shape index: {}]
  %s2 = inlined_call_operand.vmem [shape: f32[1,128], index: 2, kind: input, shape index: {}]
  %s3 = inlined_call_operand.vmem [shape: bf16[2,256,128], index: 3, kind: output, shape index: {}]
  %s4 = sld [smem:[#allocation0]]
  $region45: #{backbone_base_forward.4} parent=0
    _
  %s6 = ssub.s32 1, %s4
  %s7 = scalar_select 0, %s6, %s4
  loop: start=0, step=1, limit=4
  $region2: #{backbone_base_forward.4} parent=0 // loop_pre_header
    _
  $region3: #{backbone_base_forward.4} parent=0 // loop_header
    %s9 = sphi 0, %s13
    %p10 = scmp.ge.s32.totalorder %s9, 4
    %s16 = sphi 0, %s28
    %s17 = sphi 0, %s24
    %s18 = sphi 0, %s16
    %s19 = sphi 0, %s17
    %s20 = sphi 0, %s18
    %s21 = sphi 0, %s19
    %s31 = sphi 0, %s33
    %s34 = sphi 0, %s31
    %s35 = sphi 0, %s34
    %s51 = sphi 0, %s35
    %s57 = sphi 0, %s59
    %s60 = sphi 0, %s57
    %s61 = sphi 0, %s60
    %s77 = sphi 0, %s61
    %s83 = sphi 0, %s85
    %s86 = sphi 0, %s83
    %s87 = sphi 0, %s86
    %s103 = sphi 0, %s87
    %s111 = sphi 0, %s113
    %s114 = sphi 0, %s111
    %s115 = sphi 0, %s114
    %s131 = sphi 0, %s115
  $region4: #{backbone_base_forward.4} parent=0 // loop_header_branch
    %12 = sbr.rel (%p10) target = $region8
  $region5: #{backbone_base_forward.4} parent=0 // loop_body
    %s14 = ssub.s32 %s9, 1
    %s15 = ssub.s32 %s9, 2
    %s22 = sadd.s32 1, %s17
    %p23 = scmp.ge.s32.totalorder %s22, 1
    %s24 = scalar_select %p23, 0, %s22
    %s25 = sadd.s32 1, %s16
    %s26 = scalar_select %p23, %s25, %s16
    %p27 = scmp.ge.s32.totalorder %s26, 2
    %s28 = scalar_select %p27, 0, %s26
    %s29 = ssub.s32 %s16, %s28
    %p30 = scmp.eq.s32.totalorder %s29, 0
    %s32 = sadd.s32 %s31, 1
    %s33 = scalar_select %p30, %s31, %s32
    %p36 = pneg %p30
    %p37 = scmp.eq.s32.totalorder %s9, 1
    %p38 = por %p36, %p37
    %p39 = scmp.ne.s32.totalorder %s31, %s34
    %p40 = scmp.eq.s32.totalorder %s9, 0
    %p41 = por %p39, %p40
    %p42 = scmp.ne.s32.totalorder %s31, %s34
    %p43 = scmp.eq.s32.totalorder %s14, 1
    %p44 = por %p42, %p43
    %p45 = scmp.ne.s32.totalorder %s34, %s35
    %p46 = scmp.eq.s32.totalorder %s14, 0
    %p47 = por %p45, %p46
    %p48 = scmp.ne.s32.totalorder %s34, %s35
    %p49 = scmp.eq.s32.totalorder %s15, 1
    %p50 = por %p48, %p49
    %p52 = scmp.ne.s32.totalorder %s35, %s51
    %p53 = scmp.eq.s32.totalorder %s15, 0
    %p54 = por %p52, %p53
    %s55 = ssub.s32 %s17, %s24
    %p56 = scmp.eq.s32.totalorder %s55, 0
    %s58 = sadd.s32 %s57, 1
    %s59 = scalar_select %p56, %s57, %s58
    %p62 = pneg %p56
    %p63 = scmp.eq.s32.totalorder %s9, 1
    %p64 = por %p62, %p63
    %p65 = scmp.ne.s32.totalorder %s57, %s60
    %p66 = scmp.eq.s32.totalorder %s9, 0
    %p67 = por %p65, %p66
    %p68 = scmp.ne.s32.totalorder %s57, %s60
    %p69 = scmp.eq.s32.totalorder %s14, 1
    %p70 = por %p68, %p69
    %p71 = scmp.ne.s32.totalorder %s60, %s61
    %p72 = scmp.eq.s32.totalorder %s14, 0
    %p73 = por %p71, %p72
    %p74 = scmp.ne.s32.totalorder %s60, %s61
    %p75 = scmp.eq.s32.totalorder %s15, 1
    %p76 = por %p74, %p75
    %p78 = scmp.ne.s32.totalorder %s61, %s77
    %p79 = scmp.eq.s32.totalorder %s15, 0
    %p80 = por %p78, %p79
    %s81 = ssub.s32 %s17, %s24
    %p82 = scmp.eq.s32.totalorder %s81, 0
    %s84 = sadd.s32 %s83, 1
    %s85 = scalar_select %p82, %s83, %s84
    %p88 = pneg %p82
    %p89 = scmp.eq.s32.totalorder %s9, 1
    %p90 = por %p88, %p89
    %p91 = scmp.ne.s32.totalorder %s83, %s86
    %p92 = scmp.eq.s32.totalorder %s9, 0
    %p93 = por %p91, %p92
    %p94 = scmp.ne.s32.totalorder %s83, %s86
    %p95 = scmp.eq.s32.totalorder %s14, 1
    %p96 = por %p94, %p95
    %p97 = scmp.ne.s32.totalorder %s86, %s87
    %p98 = scmp.eq.s32.totalorder %s14, 0
    %p99 = por %p97, %p98
    %p100 = scmp.ne.s32.totalorder %s86, %s87
    %p101 = scmp.eq.s32.totalorder %s15, 1
    %p102 = por %p100, %p101
    %p104 = scmp.ne.s32.totalorder %s87, %s103
    %p105 = scmp.eq.s32.totalorder %s15, 0
    %p106 = por %p104, %p105
    %s107 = ssub.s32 %s16, %s28
    %s108 = ssub.s32 %s17, %s24
    %s109 = sor.u32 %s107, %s108
    %p110 = scmp.eq.s32.totalorder %s109, 0
    %s112 = sadd.s32 %s111, 1
    %s113 = scalar_select %p110, %s111, %s112
    %p116 = pneg %p110
    %p117 = scmp.eq.s32.totalorder %s9, 1
    %p118 = por %p116, %p117
    %p119 = scmp.ne.s32.totalorder %s111, %s114
    %p120 = scmp.eq.s32.totalorder %s9, 0
    %p121 = por %p119, %p120
    %p122 = scmp.ne.s32.totalorder %s111, %s114
    %p123 = scmp.eq.s32.totalorder %s14, 1
    %p124 = por %p122, %p123
    %p125 = scmp.ne.s32.totalorder %s114, %s115
    %p126 = scmp.eq.s32.totalorder %s14, 0
    %p127 = por %p125, %p126
    %p128 = scmp.ne.s32.totalorder %s114, %s115
    %p129 = scmp.eq.s32.totalorder %s15, 1
    %p130 = por %p128, %p129
    %p132 = scmp.ne.s32.totalorder %s115, %s131
    %p133 = scmp.eq.s32.totalorder %s15, 0
    %p134 = por %p132, %p133
    %p135 = scmp.le.s32.totalorder 1, %s9
    %p136 = scmp.lt.s32.totalorder %s9, 3
    %p137 = pnand %p135, %p136
    %p138 = pneg %p137
    // Predicated region
    $region9: #{backbone_base_forward.4} parent=5 // pred_check
      _
    $region10: #{backbone_base_forward.4} parent=5 // pred_check_branch
      %140 = sbr.rel (%p137) target = $region12
    $region11: #{backbone_base_forward.4} parent=5 // pred_region
      %s141 = ssub.s32 %s9, 1
      // Predicated region
      $region13: #{backbone_base_forward.4} parent=11 // pred_check
        %p142 = pneg %p73
      $region14: #{backbone_base_forward.4} parent=11 // pred_check_branch
        %144 = sbr.rel (%p142) target = $region16
      $region15: #{backbone_base_forward.4} parent=11 // pred_region
        %p145 = scmp.lt.s32.totalorder %s19, 0
        %s146 = scalar_select %p145, %s19, 0
        %s147 = smul.addr %s146, 4
        %s148 = scalar_lea.vmem %s1, %s147
      $region16: #{backbone_base_forward.4} parent=11 // pred_fallthru
        _
      // Predicated region
      $region17: #{backbone_base_forward.4} parent=11 // pred_check
        %p149 = pneg %p99
      $region18: #{backbone_base_forward.4} parent=11 // pred_check_branch
        %151 = sbr.rel (%p149) target = $region20
      $region19: #{backbone_base_forward.4} parent=11 // pred_region
        %p152 = scmp.lt.s32.totalorder %s19, 0
        %s153 = scalar_select %p152, %s19, 0
        %s154 = scalar_lea.vmem %s2, %s153
      $region20: #{backbone_base_forward.4} parent=11 // pred_fallthru
        _
    $region12: #{backbone_base_forward.4} parent=5 // pred_fallthru
      _
    %p155 = scmp.lt.s32.totalorder %s9, 2
    // Predicated region
    $region21: #{backbone_base_forward.4} parent=5 // pred_check
      %p156 = pneg %p155
    $region22: #{backbone_base_forward.4} parent=5 // pred_check_branch
      %158 = sbr.rel (%p156) target = $region24
    $region23: #{backbone_base_forward.4} parent=5 // pred_region
      // Predicated region
      $region25: #{backbone_base_forward.4} parent=23 // pred_check
        %p159 = pneg %p41
      $region26: #{backbone_base_forward.4} parent=23 // pred_check_branch
        %161 = sbr.rel (%p159) target = $region28
      $region27: #{backbone_base_forward.4} parent=23 // pred_region
        %p162 = scmp.lt.s32.totalorder %s16, 1
        %s163 = scalar_select %p162, %s16, 1
        %s164 = smul.addr %s163, 32
        %s165 = smul.addr %s164, 4
        %s166 = scalar_lea.vmem %s0, %s165
      $region28: #{backbone_base_forward.4} parent=23 // pred_fallthru
        _
    $region24: #{backbone_base_forward.4} parent=5 // pred_fallthru
      _
    %p167 = scmp.le.s32.totalorder 1, %s9
    %p168 = scmp.lt.s32.totalorder %s9, 3
    %p169 = pnand %p167, %p168
    %p170 = pneg %p169
    // Predicated region
    $region29: #{backbone_base_forward.4} parent=5 // pred_check
      _
    $region30: #{backbone_base_forward.4} parent=5 // pred_check_branch
      %172 = sbr.rel (%p169) target = $region32
    $region31: #{backbone_base_forward.4} parent=5 // pred_region
      %s173 = ssub.s32 %s9, 1
      %p174 = scmp.lt.s32.totalorder %s18, 1
      %s175 = scalar_select %p174, %s18, 1
      %s176 = smul.addr %s175, 32
      %s177 = smul.addr %s176, 4
      %s178 = scalar_lea.vmem %s0, %s177
      %p179 = pneg %p47
      %p180 = pneg %p44
      %p181 = scmp.lt.s32.totalorder %s19, 0
      %s182 = scalar_select %p181, %s19, 0
      %s183 = smul.addr %s182, 4
      %s184 = scalar_lea.vmem %s1, %s183
      %p185 = pneg %p73
      %p186 = pneg %p70
      %p187 = scmp.lt.s32.totalorder %s19, 0
      %s188 = scalar_select %p187, %s19, 0
      %s189 = scalar_lea.vmem %s2, %s188
      %p190 = pneg %p99
      %p191 = pneg %p96
      %p192 = pneg %p127
      %p193 = pneg %p124
      %p194 = scmp.lt.s32.totalorder %s18, 1
      %s195 = scalar_select %p194, %s18, 1
      %p196 = scmp.lt.s32.totalorder %s19, 0
      %s197 = scalar_select %p196, %s19, 0
      %s198 = smul.addr %s195, 32
      %s199 = sadd.s32 %s197, %s198
      %s200 = smul.addr %s199, 4
      %s201 = scalar_lea.vmem %s3, %s200
      %p202 = scmp.lt.s32.totalorder %s18, 1
      %s203 = scalar_select %p202, %s18, 1
      %s204 = smul.addr %s203, 32
      %s205 = smul.addr %s204, 4
      %s206 = scalar_lea.vmem %s0, %s205
      %p207 = scmp.lt.s32.totalorder %s19, 0
      %s208 = scalar_select %p207, %s19, 0
      %s209 = smul.addr %s208, 4
      %s210 = scalar_lea.vmem %s1, %s209
      %p211 = scmp.lt.s32.totalorder %s19, 0
      %s212 = scalar_select %p211, %s19, 0
      %s213 = scalar_lea.vmem %s2, %s212
      %p214 = scmp.lt.s32.totalorder %s18, 1
      %s215 = scalar_select %p214, %s18, 1
      %p216 = scmp.lt.s32.totalorder %s19, 0
      %s217 = scalar_select %p216, %s19, 0
      %s218 = smul.addr %s215, 32
      %s219 = sadd.s32 %s217, %s218
      %s220 = smul.addr %s219, 4
      %s221 = scalar_lea.vmem %s3, %s220
      %v223 = vld [vmem:[%s206] sm:$0xf]
      %v224 = vld [vmem:[%s206 + $0x4] sm:$0xf]
      %v225 = vld [vmem:[%s206 + $0x8] sm:$0xf]
      %v226 = vld [vmem:[%s206 + $0xc] sm:$0xf]
      %v227 = vld [vmem:[%s206 + $0x10] sm:$0xf]
      %v228 = vld [vmem:[%s206 + $0x14] sm:$0xf]
      %v229 = vld [vmem:[%s206 + $0x18] sm:$0xf]
      %v230 = vld [vmem:[%s206 + $0x1c] sm:$0xf]
      %v231 = vld [vmem:[%s206 + $0x20] sm:$0xf]
      %v232 = vld [vmem:[%s206 + $0x24] sm:$0xf]
      %v233 = vld [vmem:[%s206 + $0x28] sm:$0xf]
      %v234 = vld [vmem:[%s206 + $0x2c] sm:$0xf]
      %v235 = vld [vmem:[%s206 + $0x30] sm:$0xf]
      %v236 = vld [vmem:[%s206 + $0x34] sm:$0xf]
      %v237 = vld [vmem:[%s206 + $0x38] sm:$0xf]
      %v238 = vld [vmem:[%s206 + $0x3c] sm:$0xf]
      %v239 = vld [vmem:[%s206 + $0x40] sm:$0xf]
      %v240 = vld [vmem:[%s206 + $0x44] sm:$0xf]
      %v241 = vld [vmem:[%s206 + $0x48] sm:$0xf]
      %v242 = vld [vmem:[%s206 + $0x4c] sm:$0xf]
      %v243 = vld [vmem:[%s206 + $0x50] sm:$0xf]
      %v244 = vld [vmem:[%s206 + $0x54] sm:$0xf]
      %v245 = vld [vmem:[%s206 + $0x58] sm:$0xf]
      %v246 = vld [vmem:[%s206 + $0x5c] sm:$0xf]
      %v247 = vld [vmem:[%s206 + $0x60] sm:$0xf]
      %v248 = vld [vmem:[%s206 + $0x64] sm:$0xf]
      %v249 = vld [vmem:[%s206 + $0x68] sm:$0xf]
      %v250 = vld [vmem:[%s206 + $0x6c] sm:$0xf]
      %v251 = vld [vmem:[%s206 + $0x70] sm:$0xf]
      %v252 = vld [vmem:[%s206 + $0x74] sm:$0xf]
      %v253 = vld [vmem:[%s206 + $0x78] sm:$0xf]
      %v254 = vld [vmem:[%s206 + $0x7c] sm:$0xf]
      %v255 = vld [vmem:[%s210] sm:$0xf]
      %v256 = vld [vmem:[%s210 + $0x4] sm:$0xf]
      %v257 = vld [vmem:[%s210 + $0x8] sm:$0xf]
      %v258 = vld [vmem:[%s210 + $0xc] sm:$0xf]
      %v259 = vld [vmem:[%s210 + $0x10] sm:$0xf]
      %v260 = vld [vmem:[%s210 + $0x14] sm:$0xf]
      %v261 = vld [vmem:[%s213] sm:$0x1]
      %v263 = vlaneseq
      %v264 = vshrl.u32 %v263, 7
      %v265 = vsub.s32 0, %v264
      %v266 = vrot.slane %v261, %v265
      %v300 = vunpack.c.l.b16 %v223
      %v301 = vunpack.c.l.b16 %v224
      %v302 = vunpack.c.l.b16 %v225
      %v303 = vunpack.c.l.b16 %v226
      %v304 = vunpack.c.l.b16 %v227
      %v305 = vunpack.c.l.b16 %v228
      %v306 = vunpack.c.l.b16 %v229
      %v307 = vunpack.c.l.b16 %v230
      %v308 = vunpack.c.l.b16 %v231
      %v309 = vunpack.c.l.b16 %v232
      %v310 = vunpack.c.l.b16 %v233
      %v311 = vunpack.c.l.b16 %v234
      %v312 = vunpack.c.l.b16 %v235
      %v313 = vunpack.c.l.b16 %v236
      %v314 = vunpack.c.l.b16 %v237
      %v315 = vunpack.c.l.b16 %v238
      %v316 = vunpack.c.l.b16 %v239
      %v317 = vunpack.c.l.b16 %v240
      %v318 = vunpack.c.l.b16 %v241
      %v319 = vunpack.c.l.b16 %v242
      %v320 = vunpack.c.l.b16 %v243
      %v321 = vunpack.c.l.b16 %v244
      %v322 = vunpack.c.l.b16 %v245
      %v323 = vunpack.c.l.b16 %v246
      %v324 = vunpack.c.l.b16 %v247
      %v325 = vunpack.c.l.b16 %v248
      %v326 = vunpack.c.l.b16 %v249
      %v327 = vunpack.c.l.b16 %v250
      %v328 = vunpack.c.l.b16 %v251
      %v329 = vunpack.c.l.b16 %v252
      %v330 = vunpack.c.l.b16 %v253
      %v331 = vunpack.c.l.b16 %v254
      %v332 = vpack.c.b16 %v301, %v300
      %v333 = vpack.c.b16 %v303, %v302
      %v334 = vpack.c.b16 %v305, %v304
      %v335 = vpack.c.b16 %v307, %v306
      %v336 = vpack.c.b16 %v309, %v308
      %v337 = vpack.c.b16 %v311, %v310
      %v338 = vpack.c.b16 %v313, %v312
      %v339 = vpack.c.b16 %v315, %v314
      %v340 = vpack.c.b16 %v317, %v316
      %v341 = vpack.c.b16 %v319, %v318
      %v342 = vpack.c.b16 %v321, %v320
      %v343 = vpack.c.b16 %v323, %v322
      %v344 = vpack.c.b16 %v325, %v324
      %v345 = vpack.c.b16 %v327, %v326
      %v346 = vpack.c.b16 %v329, %v328
      %v347 = vpack.c.b16 %v331, %v330
      %v354 = vunpack.c.l.b16 %v255
      %v355 = vunpack.c.l.b16 %v256
      %v356 = vunpack.c.l.b16 %v257
      %v357 = vunpack.c.l.b16 %v258
      %v358 = vunpack.c.l.b16 %v259
      %v359 = vunpack.c.l.b16 %v260
      %v360 = vpack.c.b16 %v355, %v354
      %v361 = vpack.c.b16 %v357, %v356
      %v362 = vpack.c.b16 %v359, %v358
      %vm366 = vcmask 392192
      %v368 = vsel %vm366, %v332, 0
      %v371 = vsel %vm366, %v333, 0
      %v374 = vsel %vm366, %v334, 0
      %v377 = vsel %vm366, %v335, 0
      %v380 = vsel %vm366, %v336, 0
      %v383 = vsel %vm366, %v337, 0
      %v386 = vsel %vm366, %v338, 0
      %v389 = vsel %vm366, %v339, 0
      %v392 = vsel %vm366, %v340, 0
      %v395 = vsel %vm366, %v341, 0
      %v398 = vsel %vm366, %v342, 0
      %v401 = vsel %vm366, %v343, 0
      %v404 = vsel %vm366, %v344, 0
      %v407 = vsel %vm366, %v345, 0
      %v410 = vsel %vm366, %v346, 0
      %v413 = vsel %vm366, %v347, 0
      %415 = vmatprep.subr.bf16.mxu0 0
      %416 = vmatpush1.bf16.msra.mxu0 0
      %417 = vmatprep.subr.bf16.mxu0 0
      %418 = vmatpush1.bf16.msra.mxu0 0
      %419 = vmatprep.subr.bf16.mxu0 0
      %420 = vmatpush1.bf16.msra.mxu0 0
      %421 = vmatprep.subr.bf16.mxu0 0
      %422 = vmatpush1.bf16.msra.mxu0 0
      %423 = vmatprep.subr.bf16.mxu0 0
      %424 = vmatpush1.bf16.msra.mxu0 0
      %425 = vmatprep.subr.bf16.mxu0 0
      %426 = vmatpush1.bf16.msra.mxu0 %v362
      %427 = vmatprep.subr.bf16.mxu0 0
      %428 = vmatpush1.bf16.msra.mxu0 %v361
      %429 = vmatprep.subr.bf16.mxu0 0
      %430 = vmatpush1.bf16.msra.mxu0 %v360
      %431 = vmatprep.subr.bf16.mxu0 0
      %432 = vmatpush2.bf16.msra.mxu0 0
      %433 = vmatprep.subr.bf16.mxu0 0
      %434 = vmatpush2.bf16.msra.mxu0 0
      %435 = vmatprep.subr.bf16.mxu0 0
      %436 = vmatpush2.bf16.msra.mxu0 0
      %437 = vmatprep.subr.bf16.mxu0 0
      %438 = vmatpush2.bf16.msra.mxu0 0
      %439 = vmatprep.subr.bf16.mxu0 0
      %440 = vmatpush2.bf16.msra.mxu0 0
      %441 = vmatprep.subr.bf16.mxu0 0
      %442 = vmatpush2.bf16.msra.mxu0 0
      %443 = vmatprep.subr.bf16.mxu0 0
      %444 = vmatpush2.bf16.msra.mxu0 0
      %445 = vmatprep.subr.bf16.mxu0 0
      %446 = vmatpush2.bf16.msra.mxu0 0
      %447 = vmatprep.mubr.bf16.mxu0 0
      %448 = vmatmul.mubr.bf16.gmra.mxu0 %v368
      %v449 = vpop.f32.mrf.mxu0
      %v450 = vadd.f32 %v266, %v449
      %v451 = vpop.f32.mrf.mxu0
      %v452 = vpop.f32.mrf.mxu0
      %v453 = vadd.f32 %v266, %v452
      %v454 = vpop.f32.mrf.mxu0
      %455 = vmatprep.mubr.bf16.mxu0 0
      %456 = vmatmul.mubr.bf16.gmra.mxu0 %v371
      %v457 = vpop.f32.mrf.mxu0
      %v458 = vadd.f32 %v266, %v457
      %v459 = vpop.f32.mrf.mxu0
      %v460 = vpop.f32.mrf.mxu0
      %v461 = vadd.f32 %v266, %v460
      %v462 = vpop.f32.mrf.mxu0
      %463 = vmatprep.mubr.bf16.mxu0 0
      %464 = vmatmul.mubr.bf16.gmra.mxu0 %v374
      %v465 = vpop.f32.mrf.mxu0
      %v466 = vadd.f32 %v266, %v465
      %v467 = vpop.f32.mrf.mxu0
      %v468 = vpop.f32.mrf.mxu0
      %v469 = vadd.f32 %v266, %v468
      %v470 = vpop.f32.mrf.mxu0
      %471 = vmatprep.mubr.bf16.mxu0 0
      %472 = vmatmul.mubr.bf16.gmra.mxu0 %v377
      %v473 = vpop.f32.mrf.mxu0
      %v474 = vadd.f32 %v266, %v473
      %v475 = vpop.f32.mrf.mxu0
      %v476 = vpop.f32.mrf.mxu0
      %v477 = vadd.f32 %v266, %v476
      %v478 = vpop.f32.mrf.mxu0
      %479 = vmatprep.mubr.bf16.mxu0 0
      %480 = vmatmul.mubr.bf16.gmra.mxu0 %v380
      %v481 = vpop.f32.mrf.mxu0
      %v482 = vadd.f32 %v266, %v481
      %v483 = vpop.f32.mrf.mxu0
      %v484 = vpop.f32.mrf.mxu0
      %v485 = vadd.f32 %v266, %v484
      %v486 = vpop.f32.mrf.mxu0
      %487 = vmatprep.mubr.bf16.mxu0 0
      %488 = vmatmul.mubr.bf16.gmra.mxu0 %v383
      %v489 = vpop.f32.mrf.mxu0
      %v490 = vadd.f32 %v266, %v489
      %v491 = vpop.f32.mrf.mxu0
      %v492 = vpop.f32.mrf.mxu0
      %v493 = vadd.f32 %v266, %v492
      %v494 = vpop.f32.mrf.mxu0
      %495 = vmatprep.mubr.bf16.mxu0 0
      %496 = vmatmul.mubr.bf16.gmra.mxu0 %v386
      %v497 = vpop.f32.mrf.mxu0
      %v498 = vadd.f32 %v266, %v497
      %v499 = vpop.f32.mrf.mxu0
      %v500 = vpop.f32.mrf.mxu0
      %v501 = vadd.f32 %v266, %v500
      %v502 = vpop.f32.mrf.mxu0
      %503 = vmatprep.mubr.bf16.mxu0 0
      %504 = vmatmul.mubr.bf16.gmra.mxu0 %v389
      %v505 = vpop.f32.mrf.mxu0
      %v506 = vadd.f32 %v266, %v505
      %v507 = vpop.f32.mrf.mxu0
      %v508 = vpop.f32.mrf.mxu0
      %v509 = vadd.f32 %v266, %v508
      %v510 = vpop.f32.mrf.mxu0
      %511 = vmatprep.mubr.bf16.mxu0 0
      %512 = vmatmul.mubr.bf16.gmra.mxu0 %v392
      %v513 = vpop.f32.mrf.mxu0
      %v514 = vadd.f32 %v266, %v513
      %v515 = vpop.f32.mrf.mxu0
      %v516 = vpop.f32.mrf.mxu0
      %v517 = vadd.f32 %v266, %v516
      %v518 = vpop.f32.mrf.mxu0
      %519 = vmatprep.mubr.bf16.mxu0 0
      %520 = vmatmul.mubr.bf16.gmra.mxu0 %v395
      %v521 = vpop.f32.mrf.mxu0
      %v522 = vadd.f32 %v266, %v521
      %v523 = vpop.f32.mrf.mxu0
      %v524 = vpop.f32.mrf.mxu0
      %v525 = vadd.f32 %v266, %v524
      %v526 = vpop.f32.mrf.mxu0
      %527 = vmatprep.mubr.bf16.mxu0 0
      %528 = vmatmul.mubr.bf16.gmra.mxu0 %v398
      %v529 = vpop.f32.mrf.mxu0
      %v530 = vadd.f32 %v266, %v529
      %v531 = vpop.f32.mrf.mxu0
      %v532 = vpop.f32.mrf.mxu0
      %v533 = vadd.f32 %v266, %v532
      %v534 = vpop.f32.mrf.mxu0
      %535 = vmatprep.mubr.bf16.mxu0 0
      %536 = vmatmul.mubr.bf16.gmra.mxu0 %v401
      %v537 = vpop.f32.mrf.mxu0
      %v538 = vadd.f32 %v266, %v537
      %v539 = vpop.f32.mrf.mxu0
      %v540 = vpop.f32.mrf.mxu0
      %v541 = vadd.f32 %v266, %v540
      %v542 = vpop.f32.mrf.mxu0
      %543 = vmatprep.mubr.bf16.mxu0 0
      %544 = vmatmul.mubr.bf16.gmra.mxu0 %v404
      %v545 = vpop.f32.mrf.mxu0
      %v546 = vadd.f32 %v266, %v545
      %v547 = vpop.f32.mrf.mxu0
      %v548 = vpop.f32.mrf.mxu0
      %v549 = vadd.f32 %v266, %v548
      %v550 = vpop.f32.mrf.mxu0
      %551 = vmatprep.mubr.bf16.mxu0 0
      %552 = vmatmul.mubr.bf16.gmra.mxu0 %v407
      %v553 = vpop.f32.mrf.mxu0
      %v554 = vadd.f32 %v266, %v553
      %v555 = vpop.f32.mrf.mxu0
      %v556 = vpop.f32.mrf.mxu0
      %v557 = vadd.f32 %v266, %v556
      %v558 = vpop.f32.mrf.mxu0
      %559 = vmatprep.mubr.bf16.mxu0 0
      %560 = vmatmul.mubr.bf16.gmra.mxu0 %v410
      %v561 = vpop.f32.mrf.mxu0
      %v562 = vadd.f32 %v266, %v561
      %v563 = vpop.f32.mrf.mxu0
      %v564 = vpop.f32.mrf.mxu0
      %v565 = vadd.f32 %v266, %v564
      %v566 = vpop.f32.mrf.mxu0
      %567 = vmatprep.mubr.bf16.mxu0 0
      %568 = vmatmul.mubr.bf16.gmra.mxu0 %v413
      %v569 = vpop.f32.mrf.mxu0
      %v570 = vadd.f32 %v266, %v569
      %v571 = vpop.f32.mrf.mxu0
      %v572 = vpop.f32.mrf.mxu0
      %v573 = vadd.f32 %v266, %v572
      %v574 = vpop.f32.mrf.mxu0
      %575 = vdwg.mxu0
      %v576 = vmax.f32 %v450, 0.0
      %v577 = vmax.f32 %v453, 0.0
      %v578 = vmax.f32 %v458, 0.0
      %v579 = vmax.f32 %v461, 0.0
      %v580 = vmax.f32 %v466, 0.0
      %v581 = vmax.f32 %v469, 0.0
      %v582 = vmax.f32 %v474, 0.0
      %v583 = vmax.f32 %v477, 0.0
      %v584 = vmax.f32 %v482, 0.0
      %v585 = vmax.f32 %v485, 0.0
      %v586 = vmax.f32 %v490, 0.0
      %v587 = vmax.f32 %v493, 0.0
      %v588 = vmax.f32 %v498, 0.0
      %v589 = vmax.f32 %v501, 0.0
      %v590 = vmax.f32 %v506, 0.0
      %v591 = vmax.f32 %v509, 0.0
      %v592 = vmax.f32 %v514, 0.0
      %v593 = vmax.f32 %v517, 0.0
      %v594 = vmax.f32 %v522, 0.0
      %v595 = vmax.f32 %v525, 0.0
      %v596 = vmax.f32 %v530, 0.0
      %v597 = vmax.f32 %v533, 0.0
      %v598 = vmax.f32 %v538, 0.0
      %v599 = vmax.f32 %v541, 0.0
      %v600 = vmax.f32 %v546, 0.0
      %v601 = vmax.f32 %v549, 0.0
      %v602 = vmax.f32 %v554, 0.0
      %v603 = vmax.f32 %v557, 0.0
      %v604 = vmax.f32 %v562, 0.0
      %v605 = vmax.f32 %v565, 0.0
      %v606 = vmax.f32 %v570, 0.0
      %v607 = vmax.f32 %v573, 0.0
      %v608 = vpack.c.bf16 %v577, %v576
      %v609 = vpack.c.bf16 %v579, %v578
      %v610 = vpack.c.bf16 %v581, %v580
      %v611 = vpack.c.bf16 %v583, %v582
      %v612 = vpack.c.bf16 %v585, %v584
      %v613 = vpack.c.bf16 %v587, %v586
      %v614 = vpack.c.bf16 %v589, %v588
      %v615 = vpack.c.bf16 %v591, %v590
      %v616 = vpack.c.bf16 %v593, %v592
      %v617 = vpack.c.bf16 %v595, %v594
      %v618 = vpack.c.bf16 %v597, %v596
      %v619 = vpack.c.bf16 %v599, %v598
      %v620 = vpack.c.bf16 %v601, %v600
      %v621 = vpack.c.bf16 %v603, %v602
      %v622 = vpack.c.bf16 %v605, %v604
      %v623 = vpack.c.bf16 %v607, %v606
      %v640 = vunpack.c.l.b16 %v608
      %v641 = vunpack.c.h.b16 %v608
      %v642 = vunpack.c.l.b16 %v609
      %v643 = vunpack.c.h.b16 %v609
      %v644 = vunpack.c.l.b16 %v610
      %v645 = vunpack.c.h.b16 %v610
      %v646 = vunpack.c.l.b16 %v611
      %v647 = vunpack.c.h.b16 %v611
      %v648 = vunpack.c.l.b16 %v612
      %v649 = vunpack.c.h.b16 %v612
      %v650 = vunpack.c.l.b16 %v613
      %v651 = vunpack.c.h.b16 %v613
      %v652 = vunpack.c.l.b16 %v614
      %v653 = vunpack.c.h.b16 %v614
      %v654 = vunpack.c.l.b16 %v615
      %v655 = vunpack.c.h.b16 %v615
      %v656 = vunpack.c.l.b16 %v616
      %v657 = vunpack.c.h.b16 %v616
      %v658 = vunpack.c.l.b16 %v617
      %v659 = vunpack.c.h.b16 %v617
      %v660 = vunpack.c.l.b16 %v618
      %v661 = vunpack.c.h.b16 %v618
      %v662 = vunpack.c.l.b16 %v619
      %v663 = vunpack.c.h.b16 %v619
      %v664 = vunpack.c.l.b16 %v620
      %v665 = vunpack.c.h.b16 %v620
      %v666 = vunpack.c.l.b16 %v621
      %v667 = vunpack.c.h.b16 %v621
      %v668 = vunpack.c.l.b16 %v622
      %v669 = vunpack.c.h.b16 %v622
      %v670 = vunpack.c.l.b16 %v623
      %v671 = vunpack.c.h.b16 %v623
      %v672 = vpack.c.b16 %v640, %v640
      %v673 = vpack.c.b16 %v641, %v641
      %v674 = vpack.c.b16 %v642, %v642
      %v675 = vpack.c.b16 %v643, %v643
      %v676 = vpack.c.b16 %v644, %v644
      %v677 = vpack.c.b16 %v645, %v645
      %v678 = vpack.c.b16 %v646, %v646
      %v679 = vpack.c.b16 %v647, %v647
      %v680 = vpack.c.b16 %v648, %v648
      %v681 = vpack.c.b16 %v649, %v649
      %v682 = vpack.c.b16 %v650, %v650
      %v683 = vpack.c.b16 %v651, %v651
      %v684 = vpack.c.b16 %v652, %v652
      %v685 = vpack.c.b16 %v653, %v653
      %v686 = vpack.c.b16 %v654, %v654
      %v687 = vpack.c.b16 %v655, %v655
      %v688 = vpack.c.b16 %v656, %v656
      %v689 = vpack.c.b16 %v657, %v657
      %v690 = vpack.c.b16 %v658, %v658
      %v691 = vpack.c.b16 %v659, %v659
      %v692 = vpack.c.b16 %v660, %v660
      %v693 = vpack.c.b16 %v661, %v661
      %v694 = vpack.c.b16 %v662, %v662
      %v695 = vpack.c.b16 %v663, %v663
      %v696 = vpack.c.b16 %v664, %v664
      %v697 = vpack.c.b16 %v665, %v665
      %v698 = vpack.c.b16 %v666, %v666
      %v699 = vpack.c.b16 %v667, %v667
      %v700 = vpack.c.b16 %v668, %v668
      %v701 = vpack.c.b16 %v669, %v669
      %v702 = vpack.c.b16 %v670, %v670
      %v703 = vpack.c.b16 %v671, %v671
      %736 = vst [vmem:[%s221] sm:$0xf] %v672
      %737 = vst [vmem:[%s221 + $0x4] sm:$0xf] %v673
      %738 = vst [vmem:[%s221 + $0x8] sm:$0xf] %v674
      %739 = vst [vmem:[%s221 + $0xc] sm:$0xf] %v675
      %740 = vst [vmem:[%s221 + $0x10] sm:$0xf] %v676
      %741 = vst [vmem:[%s221 + $0x14] sm:$0xf] %v677
      %742 = vst [vmem:[%s221 + $0x18] sm:$0xf] %v678
      %743 = vst [vmem:[%s221 + $0x1c] sm:$0xf] %v679
      %744 = vst [vmem:[%s221 + $0x20] sm:$0xf] %v680
      %745 = vst [vmem:[%s221 + $0x24] sm:$0xf] %v681
      %746 = vst [vmem:[%s221 + $0x28] sm:$0xf] %v682
      %747 = vst [vmem:[%s221 + $0x2c] sm:$0xf] %v683
      %748 = vst [vmem:[%s221 + $0x30] sm:$0xf] %v684
      %749 = vst [vmem:[%s221 + $0x34] sm:$0xf] %v685
      %750 = vst [vmem:[%s221 + $0x38] sm:$0xf] %v686
      %751 = vst [vmem:[%s221 + $0x3c] sm:$0xf] %v687
      %752 = vst [vmem:[%s221 + $0x40] sm:$0xf] %v688
      %753 = vst [vmem:[%s221 + $0x44] sm:$0xf] %v689
      %754 = vst [vmem:[%s221 + $0x48] sm:$0xf] %v690
      %755 = vst [vmem:[%s221 + $0x4c] sm:$0xf] %v691
      %756 = vst [vmem:[%s221 + $0x50] sm:$0xf] %v692
      %757 = vst [vmem:[%s221 + $0x54] sm:$0xf] %v693
      %758 = vst [vmem:[%s221 + $0x58] sm:$0xf] %v694
      %759 = vst [vmem:[%s221 + $0x5c] sm:$0xf] %v695
      %760 = vst [vmem:[%s221 + $0x60] sm:$0xf] %v696
      %761 = vst [vmem:[%s221 + $0x64] sm:$0xf] %v697
      %762 = vst [vmem:[%s221 + $0x68] sm:$0xf] %v698
      %763 = vst [vmem:[%s221 + $0x6c] sm:$0xf] %v699
      %764 = vst [vmem:[%s221 + $0x70] sm:$0xf] %v700
      %765 = vst [vmem:[%s221 + $0x74] sm:$0xf] %v701
      %766 = vst [vmem:[%s221 + $0x78] sm:$0xf] %v702
      %767 = vst [vmem:[%s221 + $0x7c] sm:$0xf] %v703
      %p768 = scmp.lt.s32.totalorder %s18, 1
      %s769 = scalar_select %p768, %s18, 1
      %p770 = scmp.lt.s32.totalorder %s19, 0
      %s771 = scalar_select %p770, %s19, 0
      %s772 = smul.addr %s769, 32
      %s773 = sadd.s32 %s771, %s772
      %s774 = smul.addr %s773, 4
      %s775 = scalar_lea.vmem %s3, %s774
      // Predicated region
      $region33: #{backbone_base_forward.4} parent=31 // pred_check
        %p776 = pneg %p124
      $region34: #{backbone_base_forward.4} parent=31 // pred_check_branch
        %778 = sbr.rel (%p776) target = $region36
      $region35: #{backbone_base_forward.4} parent=31 // pred_region
        _
      $region36: #{backbone_base_forward.4} parent=31 // pred_fallthru
        _
    $region32: #{backbone_base_forward.4} parent=5 // pred_fallthru
      _
    %p779 = scmp.le.s32.totalorder 2, %s9
    // Predicated region
    $region37: #{backbone_base_forward.4} parent=5 // pred_check
      %p780 = pneg %p779
    $region38: #{backbone_base_forward.4} parent=5 // pred_check_branch
      %782 = sbr.rel (%p780) target = $region40
    $region39: #{backbone_base_forward.4} parent=5 // pred_region
      %s783 = ssub.s32 %s9, 2
      // Predicated region
      $region41: #{backbone_base_forward.4} parent=39 // pred_check
        %p784 = pneg %p130
      $region42: #{backbone_base_forward.4} parent=39 // pred_check_branch
        %786 = sbr.rel (%p784) target = $region44
      $region43: #{backbone_base_forward.4} parent=39 // pred_region
        %p787 = scmp.lt.s32.totalorder %s20, 1
        %s788 = scalar_select %p787, %s20, 1
        %p789 = scmp.lt.s32.totalorder %s21, 0
        %s790 = scalar_select %p789, %s21, 0
        %s791 = smul.addr %s788, 32
        %s792 = sadd.s32 %s790, %s791
        %s793 = smul.addr %s792, 4
        %s794 = scalar_lea.vmem %s3, %s793
      $region44: #{backbone_base_forward.4} parent=39 // pred_fallthru
        _
    $region40: #{backbone_base_forward.4} parent=5 // pred_fallthru
      _
  $region6: #{backbone_base_forward.4} parent=0 // loop_footer
    %s13 = sadd.s32 1, %s9
  $region7: #{backbone_base_forward.4} parent=0 // loop_footer_branch
    %8 = sbr.rel target = $region3
  $region8: #{backbone_base_forward.4} parent=0 // loop_exit
    _

// kernel: backbone_base_forward.5
$region0: #{backbone_base_forward.5}
  #allocation0 [shape = 'u32[]', space=smem, size = 0x4, offset = 0x4, fixed_abs, tag = 'smem constant byte address 0x4 - core index']
  #allocation1 [shape = 'u32[144,128]{1,0:T(1,128)}', space=vmem, size = 0x12000, scoped, tag = 'internal scratch']
  %s0 = inlined_call_operand.vmem [shape: bf16[2,90,64], index: 0, kind: input, shape index: {}]
  %s1 = inlined_call_operand.vmem [shape: bf16[4,64,128], index: 1, kind: input, shape index: {}]
  %s2 = inlined_call_operand.vmem [shape: f32[1,128], index: 2, kind: input, shape index: {}]
  %s3 = inlined_call_operand.vmem [shape: bf16[2,72,128], index: 3, kind: output, shape index: {}]
  %s4 = sld [smem:[#allocation0]]
  $region45: #{backbone_base_forward.5} parent=0
    _
  %s6 = ssub.s32 1, %s4
  %s7 = scalar_select 0, %s6, %s4
  loop: start=0, step=1, limit=4
  $region2: #{backbone_base_forward.5} parent=0 // loop_pre_header
    _
  $region3: #{backbone_base_forward.5} parent=0 // loop_header
    %s9 = sphi 0, %s13
    %p10 = scmp.ge.s32.totalorder %s9, 4
    %s16 = sphi 0, %s28
    %s17 = sphi 0, %s24
    %s18 = sphi 0, %s16
    %s19 = sphi 0, %s17
    %s20 = sphi 0, %s18
    %s21 = sphi 0, %s19
    %s31 = sphi 0, %s33
    %s34 = sphi 0, %s31
    %s35 = sphi 0, %s34
    %s51 = sphi 0, %s35
    %s57 = sphi 0, %s59
    %s60 = sphi 0, %s57
    %s61 = sphi 0, %s60
    %s77 = sphi 0, %s61
    %s83 = sphi 0, %s85
    %s86 = sphi 0, %s83
    %s87 = sphi 0, %s86
    %s103 = sphi 0, %s87
    %s111 = sphi 0, %s113
    %s114 = sphi 0, %s111
    %s115 = sphi 0, %s114
    %s131 = sphi 0, %s115
  $region4: #{backbone_base_forward.5} parent=0 // loop_header_branch
    %12 = sbr.rel (%p10) target = $region8
  $region5: #{backbone_base_forward.5} parent=0 // loop_body
    %s14 = ssub.s32 %s9, 1
    %s15 = ssub.s32 %s9, 2
    %s22 = sadd.s32 1, %s17
    %p23 = scmp.ge.s32.totalorder %s22, 1
    %s24 = scalar_select %p23, 0, %s22
    %s25 = sadd.s32 1, %s16
    %s26 = scalar_select %p23, %s25, %s16
    %p27 = scmp.ge.s32.totalorder %s26, 2
    %s28 = scalar_select %p27, 0, %s26
    %s29 = ssub.s32 %s16, %s28
    %p30 = scmp.eq.s32.totalorder %s29, 0
    %s32 = sadd.s32 %s31, 1
    %s33 = scalar_select %p30, %s31, %s32
    %p36 = pneg %p30
    %p37 = scmp.eq.s32.totalorder %s9, 1
    %p38 = por %p36, %p37
    %p39 = scmp.ne.s32.totalorder %s31, %s34
    %p40 = scmp.eq.s32.totalorder %s9, 0
    %p41 = por %p39, %p40
    %p42 = scmp.ne.s32.totalorder %s31, %s34
    %p43 = scmp.eq.s32.totalorder %s14, 1
    %p44 = por %p42, %p43
    %p45 = scmp.ne.s32.totalorder %s34, %s35
    %p46 = scmp.eq.s32.totalorder %s14, 0
    %p47 = por %p45, %p46
    %p48 = scmp.ne.s32.totalorder %s34, %s35
    %p49 = scmp.eq.s32.totalorder %s15, 1
    %p50 = por %p48, %p49
    %p52 = scmp.ne.s32.totalorder %s35, %s51
    %p53 = scmp.eq.s32.totalorder %s15, 0
    %p54 = por %p52, %p53
    %s55 = ssub.s32 %s17, %s24
    %p56 = scmp.eq.s32.totalorder %s55, 0
    %s58 = sadd.s32 %s57, 1
    %s59 = scalar_select %p56, %s57, %s58
    %p62 = pneg %p56
    %p63 = scmp.eq.s32.totalorder %s9, 1
    %p64 = por %p62, %p63
    %p65 = scmp.ne.s32.totalorder %s57, %s60
    %p66 = scmp.eq.s32.totalorder %s9, 0
    %p67 = por %p65, %p66
    %p68 = scmp.ne.s32.totalorder %s57, %s60
    %p69 = scmp.eq.s32.totalorder %s14, 1
    %p70 = por %p68, %p69
    %p71 = scmp.ne.s32.totalorder %s60, %s61
    %p72 = scmp.eq.s32.totalorder %s14, 0
    %p73 = por %p71, %p72
    %p74 = scmp.ne.s32.totalorder %s60, %s61
    %p75 = scmp.eq.s32.totalorder %s15, 1
    %p76 = por %p74, %p75
    %p78 = scmp.ne.s32.totalorder %s61, %s77
    %p79 = scmp.eq.s32.totalorder %s15, 0
    %p80 = por %p78, %p79
    %s81 = ssub.s32 %s17, %s24
    %p82 = scmp.eq.s32.totalorder %s81, 0
    %s84 = sadd.s32 %s83, 1
    %s85 = scalar_select %p82, %s83, %s84
    %p88 = pneg %p82
    %p89 = scmp.eq.s32.totalorder %s9, 1
    %p90 = por %p88, %p89
    %p91 = scmp.ne.s32.totalorder %s83, %s86
    %p92 = scmp.eq.s32.totalorder %s9, 0
    %p93 = por %p91, %p92
    %p94 = scmp.ne.s32.totalorder %s83, %s86
    %p95 = scmp.eq.s32.totalorder %s14, 1
    %p96 = por %p94, %p95
    %p97 = scmp.ne.s32.totalorder %s86, %s87
    %p98 = scmp.eq.s32.totalorder %s14, 0
    %p99 = por %p97, %p98
    %p100 = scmp.ne.s32.totalorder %s86, %s87
    %p101 = scmp.eq.s32.totalorder %s15, 1
    %p102 = por %p100, %p101
    %p104 = scmp.ne.s32.totalorder %s87, %s103
    %p105 = scmp.eq.s32.totalorder %s15, 0
    %p106 = por %p104, %p105
    %s107 = ssub.s32 %s16, %s28
    %s108 = ssub.s32 %s17, %s24
    %s109 = sor.u32 %s107, %s108
    %p110 = scmp.eq.s32.totalorder %s109, 0
    %s112 = sadd.s32 %s111, 1
    %s113 = scalar_select %p110, %s111, %s112
    %p116 = pneg %p110
    %p117 = scmp.eq.s32.totalorder %s9, 1
    %p118 = por %p116, %p117
    %p119 = scmp.ne.s32.totalorder %s111, %s114
    %p120 = scmp.eq.s32.totalorder %s9, 0
    %p121 = por %p119, %p120
    %p122 = scmp.ne.s32.totalorder %s111, %s114
    %p123 = scmp.eq.s32.totalorder %s14, 1
    %p124 = por %p122, %p123
    %p125 = scmp.ne.s32.totalorder %s114, %s115
    %p126 = scmp.eq.s32.totalorder %s14, 0
    %p127 = por %p125, %p126
    %p128 = scmp.ne.s32.totalorder %s114, %s115
    %p129 = scmp.eq.s32.totalorder %s15, 1
    %p130 = por %p128, %p129
    %p132 = scmp.ne.s32.totalorder %s115, %s131
    %p133 = scmp.eq.s32.totalorder %s15, 0
    %p134 = por %p132, %p133
    %p135 = scmp.le.s32.totalorder 1, %s9
    %p136 = scmp.lt.s32.totalorder %s9, 3
    %p137 = pnand %p135, %p136
    %p138 = pneg %p137
    // Predicated region
    $region9: #{backbone_base_forward.5} parent=5 // pred_check
      _
    $region10: #{backbone_base_forward.5} parent=5 // pred_check_branch
      %140 = sbr.rel (%p137) target = $region12
    $region11: #{backbone_base_forward.5} parent=5 // pred_region
      %s141 = ssub.s32 %s9, 1
      // Predicated region
      $region13: #{backbone_base_forward.5} parent=11 // pred_check
        %p142 = pneg %p73
      $region14: #{backbone_base_forward.5} parent=11 // pred_check_branch
        %144 = sbr.rel (%p142) target = $region16
      $region15: #{backbone_base_forward.5} parent=11 // pred_region
        %p145 = scmp.lt.s32.totalorder %s19, 0
        %s146 = scalar_select %p145, %s19, 0
        %s147 = smul.addr %s146, 4
        %s148 = scalar_lea.vmem %s1, %s147
      $region16: #{backbone_base_forward.5} parent=11 // pred_fallthru
        _
      // Predicated region
      $region17: #{backbone_base_forward.5} parent=11 // pred_check
        %p149 = pneg %p99
      $region18: #{backbone_base_forward.5} parent=11 // pred_check_branch
        %151 = sbr.rel (%p149) target = $region20
      $region19: #{backbone_base_forward.5} parent=11 // pred_region
        %p152 = scmp.lt.s32.totalorder %s19, 0
        %s153 = scalar_select %p152, %s19, 0
        %s154 = scalar_lea.vmem %s2, %s153
      $region20: #{backbone_base_forward.5} parent=11 // pred_fallthru
        _
    $region12: #{backbone_base_forward.5} parent=5 // pred_fallthru
      _
    %p155 = scmp.lt.s32.totalorder %s9, 2
    // Predicated region
    $region21: #{backbone_base_forward.5} parent=5 // pred_check
      %p156 = pneg %p155
    $region22: #{backbone_base_forward.5} parent=5 // pred_check_branch
      %158 = sbr.rel (%p156) target = $region24
    $region23: #{backbone_base_forward.5} parent=5 // pred_region
      // Predicated region
      $region25: #{backbone_base_forward.5} parent=23 // pred_check
        %p159 = pneg %p41
      $region26: #{backbone_base_forward.5} parent=23 // pred_check_branch
        %161 = sbr.rel (%p159) target = $region28
      $region27: #{backbone_base_forward.5} parent=23 // pred_region
        %p162 = scmp.lt.s32.totalorder %s16, 1
        %s163 = scalar_select %p162, %s16, 1
        %s164 = smul.addr %s163, 12
        %s165 = smul.addr %s164, 4
        %s166 = scalar_lea.vmem %s0, %s165
      $region28: #{backbone_base_forward.5} parent=23 // pred_fallthru
        _
    $region24: #{backbone_base_forward.5} parent=5 // pred_fallthru
      _
    %p167 = scmp.le.s32.totalorder 1, %s9
    %p168 = scmp.lt.s32.totalorder %s9, 3
    %p169 = pnand %p167, %p168
    %p170 = pneg %p169
    // Predicated region
    $region29: #{backbone_base_forward.5} parent=5 // pred_check
      _
    $region30: #{backbone_base_forward.5} parent=5 // pred_check_branch
      %172 = sbr.rel (%p169) target = $region32
    $region31: #{backbone_base_forward.5} parent=5 // pred_region
      %s173 = ssub.s32 %s9, 1
      %p174 = scmp.lt.s32.totalorder %s18, 1
      %s175 = scalar_select %p174, %s18, 1
      %s176 = smul.addr %s175, 12
      %s177 = smul.addr %s176, 4
      %s178 = scalar_lea.vmem %s0, %s177
      %p179 = pneg %p47
      %p180 = pneg %p44
      %p181 = scmp.lt.s32.totalorder %s19, 0
      %s182 = scalar_select %p181, %s19, 0
      %s183 = smul.addr %s182, 4
      %s184 = scalar_lea.vmem %s1, %s183
      %p185 = pneg %p73
      %p186 = pneg %p70
      %p187 = scmp.lt.s32.totalorder %s19, 0
      %s188 = scalar_select %p187, %s19, 0
      %s189 = scalar_lea.vmem %s2, %s188
      %p190 = pneg %p99
      %p191 = pneg %p96
      %p192 = pneg %p127
      %p193 = pneg %p124
      %p194 = scmp.lt.s32.totalorder %s18, 1
      %s195 = scalar_select %p194, %s18, 1
      %p196 = scmp.lt.s32.totalorder %s19, 0
      %s197 = scalar_select %p196, %s19, 0
      %s198 = smul.addr %s195, 9
      %s199 = sadd.s32 %s197, %s198
      %s200 = smul.addr %s199, 4
      %s201 = scalar_lea.vmem %s3, %s200
      %p202 = scmp.lt.s32.totalorder %s18, 1
      %s203 = scalar_select %p202, %s18, 1
      %s204 = smul.addr %s203, 12
      %s205 = smul.addr %s204, 4
      %s206 = scalar_lea.vmem %s0, %s205
      %p207 = scmp.lt.s32.totalorder %s19, 0
      %s208 = scalar_select %p207, %s19, 0
      %s209 = smul.addr %s208, 4
      %s210 = scalar_lea.vmem %s1, %s209
      %p211 = scmp.lt.s32.totalorder %s19, 0
      %s212 = scalar_select %p211, %s19, 0
      %s213 = scalar_lea.vmem %s2, %s212
      %p214 = scmp.lt.s32.totalorder %s18, 1
      %s215 = scalar_select %p214, %s18, 1
      %p216 = scmp.lt.s32.totalorder %s19, 0
      %s217 = scalar_select %p216, %s19, 0
      %s218 = smul.addr %s215, 9
      %s219 = sadd.s32 %s217, %s218
      %s220 = smul.addr %s219, 4
      %s221 = scalar_lea.vmem %s3, %s220
      %v223 = vld [vmem:[%s206] sm:$0xf]
      %v224 = vld [vmem:[%s206 + $0x4] sm:$0xf]
      %v225 = vld [vmem:[%s206 + $0x8] sm:$0xf]
      %v226 = vld [vmem:[%s206 + $0xc] sm:$0xf]
      %v227 = vld [vmem:[%s206 + $0x10] sm:$0xf]
      %v228 = vld [vmem:[%s206 + $0x14] sm:$0xf]
      %v229 = vld [vmem:[%s206 + $0x18] sm:$0xf]
      %v230 = vld [vmem:[%s206 + $0x1c] sm:$0xf]
      %v231 = vld [vmem:[%s206 + $0x20] sm:$0xf]
      %v232 = vld [vmem:[%s210] sm:$0xf]
      %v233 = vld [vmem:[%s210 + $0x4] sm:$0xf]
      %v234 = vld [vmem:[%s210 + $0x8] sm:$0xf]
      %v235 = vld [vmem:[%s210 + $0xc] sm:$0xf]
      %v236 = vld [vmem:[%s210 + $0x10] sm:$0xf]
      %v237 = vld [vmem:[%s210 + $0x14] sm:$0xf]
      %v238 = vld [vmem:[%s210 + $0x18] sm:$0xf]
      %v239 = vld [vmem:[%s210 + $0x1c] sm:$0xf]
      %v240 = vld [vmem:[%s206 + $0x24] sm:$0x1]
      %s241 = scalar_lea.vmem %s210, 32
      %v242 = vld [vmem:[%s241] sm:$0xf]
      %v243 = vld [vmem:[%s241 + $0x4] sm:$0xf]
      %v244 = vld [vmem:[%s241 + $0x8] sm:$0xf]
      %v245 = vld [vmem:[%s241 + $0xc] sm:$0xf]
      %v246 = vld [vmem:[%s241 + $0x10] sm:$0xf]
      %v247 = vld [vmem:[%s241 + $0x14] sm:$0xf]
      %v248 = vld [vmem:[%s241 + $0x18] sm:$0xf]
      %v249 = vld [vmem:[%s241 + $0x1c] sm:$0xf]
      %v260 = vunpack.c.l.b16 %v223
      %v261 = vunpack.c.l.b16 %v224
      %v262 = vunpack.c.l.b16 %v225
      %v263 = vunpack.c.l.b16 %v226
      %v264 = vunpack.c.l.b16 %v227
      %v265 = vunpack.c.l.b16 %v228
      %v266 = vunpack.c.l.b16 %v229
      %v267 = vunpack.c.l.b16 %v230
      %v268 = vunpack.c.l.b16 %v231
      %v269 = vunpack.c.l.b16 %v240
      %v270 = vpack.c.b16 %v261, %v260
      %v271 = vpack.c.b16 %v263, %v262
      %v272 = vpack.c.b16 %v265, %v264
      %v273 = vpack.c.b16 %v267, %v266
      %v274 = vpack.c.b16 %v269, %v268
      %vm275 = vsmask.f32 7424
      %v277 = vshrl.u32 %v270, 16
      %v279 = vshll.u32 %v270, 16
      %v281 = vrot.slane %v279, 1
      %v282 = vor.u32 %v277, %v281
      %v284 = vshll.u32 %v271, 16
      %v286 = vrot.slane %v284, 1
      %v287 = vsel %vm275, %v282, %v286
      %v288 = vshrl.u32 %v271, 16
      %v290 = vor.u32 %v288, %v286
      %v292 = vshll.u32 %v272, 16
      %v294 = vrot.slane %v292, 1
      %v295 = vsel %vm275, %v290, %v294
      %v296 = vshrl.u32 %v272, 16
      %v298 = vor.u32 %v296, %v294
      %v300 = vshll.u32 %v273, 16
      %v302 = vrot.slane %v300, 1
      %v303 = vsel %vm275, %v298, %v302
      %v304 = vshrl.u32 %v273, 16
      %v306 = vor.u32 %v304, %v302
      %v308 = vshll.u32 %v274, 16
      %v310 = vrot.slane %v308, 1
      %v311 = vsel %vm275, %v306, %v310
      %v312 = vshrl.u32 %v274, 16
      %v314 = vor.u32 %v312, %v310
      %v323 = vunpack.c.l.b16 %v242
      %v324 = vunpack.c.l.b16 %v243
      %v325 = vunpack.c.l.b16 %v244
      %v326 = vunpack.c.l.b16 %v245
      %v327 = vunpack.c.l.b16 %v246
      %v328 = vunpack.c.l.b16 %v247
      %v329 = vunpack.c.l.b16 %v248
      %v330 = vunpack.c.l.b16 %v249
      %v331 = vpack.c.b16 %v324, %v323
      %v332 = vpack.c.b16 %v326, %v325
      %v333 = vpack.c.b16 %v328, %v327
      %v334 = vpack.c.b16 %v330, %v329
      %vm339 = vcmask 523264
      %v341 = vsel %vm339, %v287, 0
      %v344 = vsel %vm339, %v295, 0
      %v347 = vsel %vm339, %v303, 0
      %v350 = vsel %vm339, %v311, 0
      %v353 = vsel %vm339, %v314, 0
      %355 = vmatprep.subr.bf16.mxu0 0
      %356 = vmatpush1.bf16.msra.mxu0 0
      %357 = vmatprep.subr.bf16.mxu0 0
      %358 = vmatpush1.bf16.msra.mxu0 0
      %359 = vmatprep.subr.bf16.mxu0 0
      %360 = vmatpush1.bf16.msra.mxu0 0
      %361 = vmatprep.subr.bf16.mxu0 0
      %362 = vmatpush1.bf16.msra.mxu0 0
      %363 = vmatprep.subr.bf16.mxu0 0
      %364 = vmatpush1.bf16.msra.mxu0 %v334
      %365 = vmatprep.subr.bf16.mxu0 0
      %366 = vmatpush1.bf16.msra.mxu0 %v333
      %367 = vmatprep.subr.bf16.mxu0 0
      %368 = vmatpush1.bf16.msra.mxu0 %v332
      %369 = vmatprep.subr.bf16.mxu0 0
      %370 = vmatpush1.bf16.msra.mxu0 %v331
      %371 = vmatprep.subr.bf16.mxu0 0
      %372 = vmatpush2.bf16.msra.mxu0 0
      %373 = vmatprep.subr.bf16.mxu0 0
      %374 = vmatpush2.bf16.msra.mxu0 0
      %375 = vmatprep.subr.bf16.mxu0 0
      %376 = vmatpush2.bf16.msra.mxu0 0
      %377 = vmatprep.subr.bf16.mxu0 0
      %378 = vmatpush2.bf16.msra.mxu0 0
      %379 = vmatprep.subr.bf16.mxu0 0
      %380 = vmatpush2.bf16.msra.mxu0 0
      %381 = vmatprep.subr.bf16.mxu0 0
      %382 = vmatpush2.bf16.msra.mxu0 0
      %383 = vmatprep.subr.bf16.mxu0 0
      %384 = vmatpush2.bf16.msra.mxu0 0
      %385 = vmatprep.subr.bf16.mxu0 0
      %386 = vmatpush2.bf16.msra.mxu0 0
      %387 = vmatprep.mubr.bf16.mxu0 0
      %388 = vmatmul.mubr.bf16.gmra.mxu0 %v341
      %v389 = vpop.f32.mrf.mxu0
      %v390 = vadd.f32 0.0, %v389
      %v391 = vpop.f32.mrf.mxu0
      %v392 = vpop.f32.mrf.mxu0
      %v393 = vadd.f32 0.0, %v392
      %v394 = vpop.f32.mrf.mxu0
      %395 = vmatprep.mubr.bf16.mxu0 0
      %396 = vmatmul.mubr.bf16.gmra.mxu0 %v344
      %v397 = vpop.f32.mrf.mxu0
      %v398 = vadd.f32 0.0, %v397
      %v399 = vpop.f32.mrf.mxu0
      %v400 = vpop.f32.mrf.mxu0
      %v401 = vadd.f32 0.0, %v400
      %v402 = vpop.f32.mrf.mxu0
      %403 = vmatprep.mubr.bf16.mxu0 0
      %404 = vmatmul.mubr.bf16.gmra.mxu0 %v347
      %v405 = vpop.f32.mrf.mxu0
      %v406 = vadd.f32 0.0, %v405
      %v407 = vpop.f32.mrf.mxu0
      %v408 = vpop.f32.mrf.mxu0
      %v409 = vadd.f32 0.0, %v408
      %v410 = vpop.f32.mrf.mxu0
      %411 = vmatprep.mubr.bf16.mxu0 0
      %412 = vmatmul.mubr.bf16.gmra.mxu0 %v350
      %v413 = vpop.f32.mrf.mxu0
      %v414 = vadd.f32 0.0, %v413
      %v415 = vpop.f32.mrf.mxu0
      %v416 = vpop.f32.mrf.mxu0
      %v417 = vadd.f32 0.0, %v416
      %v418 = vpop.f32.mrf.mxu0
      %419 = vmatprep.mubr.bf16.mxu0 0
      %420 = vmatmul.mubr.bf16.gmra.mxu0 %v353
      %v421 = vpop.f32.mrf.mxu0
      %v422 = vadd.f32 0.0, %v421
      %v423 = vpop.f32.mrf.mxu0
      %v424 = vpop.f32.mrf.mxu0
      %v425 = vpop.f32.mrf.mxu0
      %426 = vdwg.mxu0
      %v427 = vpack.c.b16 %v268, %v268
      %v436 = vunpack.c.l.b16 %v232
      %v437 = vunpack.c.l.b16 %v233
      %v438 = vunpack.c.l.b16 %v234
      %v439 = vunpack.c.l.b16 %v235
      %v440 = vunpack.c.l.b16 %v236
      %v441 = vunpack.c.l.b16 %v237
      %v442 = vunpack.c.l.b16 %v238
      %v443 = vunpack.c.l.b16 %v239
      %v444 = vpack.c.b16 %v437, %v436
      %v445 = vpack.c.b16 %v439, %v438
      %v446 = vpack.c.b16 %v441, %v440
      %v447 = vpack.c.b16 %v443, %v442
      %v452 = vsel %vm339, %v270, 0
      %v454 = vsel %vm339, %v271, 0
      %v456 = vsel %vm339, %v272, 0
      %v458 = vsel %vm339, %v273, 0
      %v461 = vsel %vm339, %v427, 0
      %463 = vmatprep.subr.bf16.mxu0 0
      %464 = vmatpush1.bf16.msra.mxu0 0
      %465 = vmatprep.subr.bf16.mxu0 0
      %466 = vmatpush1.bf16.msra.mxu0 0
      %467 = vmatprep.subr.bf16.mxu0 0
      %468 = vmatpush1.bf16.msra.mxu0 0
      %469 = vmatprep.subr.bf16.mxu0 0
      %470 = vmatpush1.bf16.msra.mxu0 0
      %471 = vmatprep.subr.bf16.mxu0 0
      %472 = vmatpush1.bf16.msra.mxu0 %v447
      %473 = vmatprep.subr.bf16.mxu0 0
      %474 = vmatpush1.bf16.msra.mxu0 %v446
      %475 = vmatprep.subr.bf16.mxu0 0
      %476 = vmatpush1.bf16.msra.mxu0 %v445
      %477 = vmatprep.subr.bf16.mxu0 0
      %478 = vmatpush1.bf16.msra.mxu0 %v444
      %479 = vmatprep.subr.bf16.mxu0 0
      %480 = vmatpush2.bf16.msra.mxu0 0
      %481 = vmatprep.subr.bf16.mxu0 0
      %482 = vmatpush2.bf16.msra.mxu0 0
      %483 = vmatprep.subr.bf16.mxu0 0
      %484 = vmatpush2.bf16.msra.mxu0 0
      %485 = vmatprep.subr.bf16.mxu0 0
      %486 = vmatpush2.bf16.msra.mxu0 0
      %487 = vmatprep.subr.bf16.mxu0 0
      %488 = vmatpush2.bf16.msra.mxu0 0
      %489 = vmatprep.subr.bf16.mxu0 0
      %490 = vmatpush2.bf16.msra.mxu0 0
      %491 = vmatprep.subr.bf16.mxu0 0
      %492 = vmatpush2.bf16.msra.mxu0 0
      %493 = vmatprep.subr.bf16.mxu0 0
      %494 = vmatpush2.bf16.msra.mxu0 0
      %495 = vmatprep.mubr.bf16.mxu0 0
      %496 = vmatmul.mubr.bf16.gmra.mxu0 %v452
      %v497 = vpop.f32.mrf.mxu0
      %v498 = vadd.f32 %v390, %v497
      %v499 = vpop.f32.mrf.mxu0
      %v500 = vpop.f32.mrf.mxu0
      %v501 = vadd.f32 %v393, %v500
      %v502 = vpop.f32.mrf.mxu0
      %503 = vmatprep.mubr.bf16.mxu0 0
      %504 = vmatmul.mubr.bf16.gmra.mxu0 %v454
      %v505 = vpop.f32.mrf.mxu0
      %v506 = vadd.f32 %v398, %v505
      %v507 = vpop.f32.mrf.mxu0
      %v508 = vpop.f32.mrf.mxu0
      %v509 = vadd.f32 %v401, %v508
      %v510 = vpop.f32.mrf.mxu0
      %511 = vmatprep.mubr.bf16.mxu0 0
      %512 = vmatmul.mubr.bf16.gmra.mxu0 %v456
      %v513 = vpop.f32.mrf.mxu0
      %v514 = vadd.f32 %v406, %v513
      %v515 = vpop.f32.mrf.mxu0
      %v516 = vpop.f32.mrf.mxu0
      %v517 = vadd.f32 %v409, %v516
      %v518 = vpop.f32.mrf.mxu0
      %519 = vmatprep.mubr.bf16.mxu0 0
      %520 = vmatmul.mubr.bf16.gmra.mxu0 %v458
      %v521 = vpop.f32.mrf.mxu0
      %v522 = vadd.f32 %v414, %v521
      %v523 = vpop.f32.mrf.mxu0
      %v524 = vpop.f32.mrf.mxu0
      %v525 = vadd.f32 %v417, %v524
      %v526 = vpop.f32.mrf.mxu0
      %527 = vmatprep.mubr.bf16.mxu0 0
      %528 = vmatmul.mubr.bf16.gmra.mxu0 %v461
      %v529 = vpop.f32.mrf.mxu0
      %v530 = vadd.f32 %v422, %v529
      %v531 = vpop.f32.mrf.mxu0
      %v532 = vpop.f32.mrf.mxu0
      %v533 = vpop.f32.mrf.mxu0
      %534 = vdwg.mxu0
      %v535 = vld [vmem:[%s206 + $0x4] sm:$0xf]
      %v536 = vld [vmem:[%s206 + $0x8] sm:$0xf]
      %v537 = vld [vmem:[%s206 + $0xc] sm:$0xf]
      %v538 = vld [vmem:[%s206 + $0x10] sm:$0xf]
      %v539 = vld [vmem:[%s206 + $0x14] sm:$0xf]
      %v540 = vld [vmem:[%s206 + $0x18] sm:$0xf]
      %v541 = vld [vmem:[%s206 + $0x1c] sm:$0xf]
      %v542 = vld [vmem:[%s206 + $0x20] sm:$0xf]
      %v543 = vld [vmem:[%s206 + $0x24] sm:$0xf]
      %v544 = vld [vmem:[%s206 + $0x28] sm:$0x1]
      %s545 = scalar_lea.vmem %s210, 64
      %v546 = vld [vmem:[%s545] sm:$0xf]
      %v547 = vld [vmem:[%s545 + $0x4] sm:$0xf]
      %v548 = vld [vmem:[%s545 + $0x8] sm:$0xf]
      %v549 = vld [vmem:[%s545 + $0xc] sm:$0xf]
      %v550 = vld [vmem:[%s545 + $0x10] sm:$0xf]
      %v551 = vld [vmem:[%s545 + $0x14] sm:$0xf]
      %v552 = vld [vmem:[%s545 + $0x18] sm:$0xf]
      %v553 = vld [vmem:[%s545 + $0x1c] sm:$0xf]
      %v564 = vunpack.c.l.b16 %v535
      %v565 = vunpack.c.l.b16 %v536
      %v566 = vunpack.c.l.b16 %v537
      %v567 = vunpack.c.l.b16 %v538
      %v568 = vunpack.c.l.b16 %v539
      %v569 = vunpack.c.l.b16 %v540
      %v570 = vunpack.c.l.b16 %v541
      %v571 = vunpack.c.l.b16 %v542
      %v572 = vunpack.c.l.b16 %v543
      %v573 = vunpack.c.l.b16 %v544
      %v574 = vpack.c.b16 %v565, %v564
      %v575 = vpack.c.b16 %v567, %v566
      %v576 = vpack.c.b16 %v569, %v568
      %v577 = vpack.c.b16 %v571, %v570
      %v578 = vpack.c.b16 %v573, %v572
      %v580 = vshrl.u32 %v574, 16
      %v582 = vshll.u32 %v574, 16
      %v584 = vrot.slane %v582, 1
      %v585 = vor.u32 %v580, %v584
      %v587 = vshll.u32 %v575, 16
      %v589 = vrot.slane %v587, 1
      %v590 = vsel %vm275, %v585, %v589
      %v591 = vshrl.u32 %v575, 16
      %v593 = vor.u32 %v591, %v589
      %v595 = vshll.u32 %v576, 16
      %v597 = vrot.slane %v595, 1
      %v598 = vsel %vm275, %v593, %v597
      %v599 = vshrl.u32 %v576, 16
      %v601 = vor.u32 %v599, %v597
      %v603 = vshll.u32 %v577, 16
      %v605 = vrot.slane %v603, 1
      %v606 = vsel %vm275, %v601, %v605
      %v607 = vshrl.u32 %v577, 16
      %v609 = vor.u32 %v607, %v605
      %v611 = vshll.u32 %v578, 16
      %v613 = vrot.slane %v611, 1
      %v614 = vsel %vm275, %v609, %v613
      %v615 = vshrl.u32 %v578, 16
      %v617 = vor.u32 %v615, %v613
      %v626 = vunpack.c.l.b16 %v546
      %v627 = vunpack.c.l.b16 %v547
      %v628 = vunpack.c.l.b16 %v548
      %v629 = vunpack.c.l.b16 %v549
      %v630 = vunpack.c.l.b16 %v550
      %v631 = vunpack.c.l.b16 %v551
      %v632 = vunpack.c.l.b16 %v552
      %v633 = vunpack.c.l.b16 %v553
      %v634 = vpack.c.b16 %v627, %v626
      %v635 = vpack.c.b16 %v629, %v628
      %v636 = vpack.c.b16 %v631, %v630
      %v637 = vpack.c.b16 %v633, %v632
      %v643 = vsel %vm339, %v590, 0
      %v646 = vsel %vm339, %v598, 0
      %v649 = vsel %vm339, %v606, 0
      %v652 = vsel %vm339, %v614, 0
      %v655 = vsel %vm339, %v617, 0
      %657 = vmatprep.subr.bf16.mxu0 0
      %658 = vmatpush1.bf16.msra.mxu0 0
      %659 = vmatprep.subr.bf16.mxu0 0
      %660 = vmatpush1.bf16.msra.mxu0 0
      %661 = vmatprep.subr.bf16.mxu0 0
      %662 = vmatpush1.bf16.msra.mxu0 0
      %663 = vmatprep.subr.bf16.mxu0 0
      %664 = vmatpush1.bf16.msra.mxu0 0
      %665 = vmatprep.subr.bf16.mxu0 0
      %666 = vmatpush1.bf16.msra.mxu0 %v637
      %667 = vmatprep.subr.bf16.mxu0 0
      %668 = vmatpush1.bf16.msra.mxu0 %v636
      %669 = vmatprep.subr.bf16.mxu0 0
      %670 = vmatpush1.bf16.msra.mxu0 %v635
      %671 = vmatprep.subr.bf16.mxu0 0
      %672 = vmatpush1.bf16.msra.mxu0 %v634
      %673 = vmatprep.subr.bf16.mxu0 0
      %674 = vmatpush2.bf16.msra.mxu0 0
      %675 = vmatprep.subr.bf16.mxu0 0
      %676 = vmatpush2.bf16.msra.mxu0 0
      %677 = vmatprep.subr.bf16.mxu0 0
      %678 = vmatpush2.bf16.msra.mxu0 0
      %679 = vmatprep.subr.bf16.mxu0 0
      %680 = vmatpush2.bf16.msra.mxu0 0
      %681 = vmatprep.subr.bf16.mxu0 0
      %682 = vmatpush2.bf16.msra.mxu0 0
      %683 = vmatprep.subr.bf16.mxu0 0
      %684 = vmatpush2.bf16.msra.mxu0 0
      %685 = vmatprep.subr.bf16.mxu0 0
      %686 = vmatpush2.bf16.msra.mxu0 0
      %687 = vmatprep.subr.bf16.mxu0 0
      %688 = vmatpush2.bf16.msra.mxu0 0
      %689 = vmatprep.mubr.bf16.mxu0 0
      %690 = vmatmul.mubr.bf16.gmra.mxu0 %v643
      %v691 = vpop.f32.mrf.mxu0
      %v692 = vadd.f32 0.0, %v691
      %v693 = vpop.f32.mrf.mxu0
      %v694 = vpop.f32.mrf.mxu0
      %v695 = vadd.f32 0.0, %v694
      %v696 = vpop.f32.mrf.mxu0
      %697 = vmatprep.mubr.bf16.mxu0 0
      %698 = vmatmul.mubr.bf16.gmra.mxu0 %v646
      %v699 = vpop.f32.mrf.mxu0
      %v700 = vadd.f32 0.0, %v699
      %v701 = vpop.f32.mrf.mxu0
      %v702 = vpop.f32.mrf.mxu0
      %v703 = vadd.f32 0.0, %v702
      %v704 = vpop.f32.mrf.mxu0
      %705 = vmatprep.mubr.bf16.mxu0 0
      %706 = vmatmul.mubr.bf16.gmra.mxu0 %v649
      %v707 = vpop.f32.mrf.mxu0
      %v708 = vadd.f32 0.0, %v707
      %v709 = vpop.f32.mrf.mxu0
      %v710 = vpop.f32.mrf.mxu0
      %v711 = vadd.f32 0.0, %v710
      %v712 = vpop.f32.mrf.mxu0
      %713 = vmatprep.mubr.bf16.mxu0 0
      %714 = vmatmul.mubr.bf16.gmra.mxu0 %v652
      %v715 = vpop.f32.mrf.mxu0
      %v716 = vadd.f32 0.0, %v715
      %v717 = vpop.f32.mrf.mxu0
      %v718 = vpop.f32.mrf.mxu0
      %v719 = vadd.f32 0.0, %v718
      %v720 = vpop.f32.mrf.mxu0
      %721 = vmatprep.mubr.bf16.mxu0 0
      %722 = vmatmul.mubr.bf16.gmra.mxu0 %v655
      %v723 = vpop.f32.mrf.mxu0
      %v724 = vadd.f32 0.0, %v723
      %v725 = vpop.f32.mrf.mxu0
      %v726 = vpop.f32.mrf.mxu0
      %v727 = vpop.f32.mrf.mxu0
      %728 = vdwg.mxu0
      %v729 = vadd.f32 %v498, %v692
      %v730 = vadd.f32 %v501, %v695
      %v731 = vadd.f32 %v506, %v700
      %v732 = vadd.f32 %v509, %v703
      %v733 = vadd.f32 %v514, %v708
      %v734 = vadd.f32 %v517, %v711
      %v735 = vadd.f32 %v522, %v716
      %v736 = vadd.f32 %v525, %v719
      %v737 = vadd.f32 %v530, %v724
      %v738 = vld [vmem:[%s206 + $0x4] sm:$0xe]
      %s739 = scalar_lea.vmem %s210, 96
      %v740 = vld [vmem:[%s739] sm:$0xf]
      %v741 = vld [vmem:[%s739 + $0x4] sm:$0xf]
      %v742 = vld [vmem:[%s739 + $0x8] sm:$0xf]
      %v743 = vld [vmem:[%s739 + $0xc] sm:$0xf]
      %v744 = vld [vmem:[%s739 + $0x10] sm:$0xf]
      %v745 = vld [vmem:[%s739 + $0x14] sm:$0xf]
      %v746 = vld [vmem:[%s739 + $0x18] sm:$0xf]
      %v747 = vld [vmem:[%s739 + $0x1c] sm:$0xf]
      %v749 = vunpack.c.l.b16 %v738
      %v750 = vpack.c.b16 %v565, %v749
      %vm751 = vcmask 1046528
      %v752 = vrot.slane %v750, 1
      %v753 = vrot.slane %v575, 1
      %v754 = vsel %vm751, %v752, %v753
      %v755 = vrot.slane %v576, 1
      %v756 = vsel %vm751, %v753, %v755
      %v757 = vrot.slane %v577, 1
      %v758 = vsel %vm751, %v755, %v757
      %v759 = vrot.slane %v578, 1
      %v760 = vsel %vm751, %v757, %v759
      %v769 = vunpack.c.l.b16 %v740
      %v770 = vunpack.c.l.b16 %v741
      %v771 = vunpack.c.l.b16 %v742
      %v772 = vunpack.c.l.b16 %v743
      %v773 = vunpack.c.l.b16 %v744
      %v774 = vunpack.c.l.b16 %v745
      %v775 = vunpack.c.l.b16 %v746
      %v776 = vunpack.c.l.b16 %v747
      %v777 = vpack.c.b16 %v770, %v769
      %v778 = vpack.c.b16 %v772, %v771
      %v779 = vpack.c.b16 %v774, %v773
      %v780 = vpack.c.b16 %v776, %v775
      %v786 = vsel %vm339, %v754, 0
      %v789 = vsel %vm339, %v756, 0
      %v792 = vsel %vm339, %v758, 0
      %v795 = vsel %vm339, %v760, 0
      %v798 = vsel %vm339, %v759, 0
      %800 = vmatprep.subr.bf16.mxu0 0
      %801 = vmatpush1.bf16.msra.mxu0 0
      %802 = vmatprep.subr.bf16.mxu0 0
      %803 = vmatpush1.bf16.msra.mxu0 0
      %804 = vmatprep.subr.bf16.mxu0 0
      %805 = vmatpush1.bf16.msra.mxu0 0
      %806 = vmatprep.subr.bf16.mxu0 0
      %807 = vmatpush1.bf16.msra.mxu0 0
      %808 = vmatprep.subr.bf16.mxu0 0
      %809 = vmatpush1.bf16.msra.mxu0 %v780
      %810 = vmatprep.subr.bf16.mxu0 0
      %811 = vmatpush1.bf16.msra.mxu0 %v779
      %812 = vmatprep.subr.bf16.mxu0 0
      %813 = vmatpush1.bf16.msra.mxu0 %v778
      %814 = vmatprep.subr.bf16.mxu0 0
      %815 = vmatpush1.bf16.msra.mxu0 %v777
      %816 = vmatprep.subr.bf16.mxu0 0
      %817 = vmatpush2.bf16.msra.mxu0 0
      %818 = vmatprep.subr.bf16.mxu0 0
      %819 = vmatpush2.bf16.msra.mxu0 0
      %820 = vmatprep.subr.bf16.mxu0 0
      %821 = vmatpush2.bf16.msra.mxu0 0
      %822 = vmatprep.subr.bf16.mxu0 0
      %823 = vmatpush2.bf16.msra.mxu0 0
      %824 = vmatprep.subr.bf16.mxu0 0
      %825 = vmatpush2.bf16.msra.mxu0 0
      %826 = vmatprep.subr.bf16.mxu0 0
      %827 = vmatpush2.bf16.msra.mxu0 0
      %828 = vmatprep.subr.bf16.mxu0 0
      %829 = vmatpush2.bf16.msra.mxu0 0
      %830 = vmatprep.subr.bf16.mxu0 0
      %831 = vmatpush2.bf16.msra.mxu0 0
      %832 = vmatprep.mubr.bf16.mxu0 0
      %833 = vmatmul.mubr.bf16.gmra.mxu0 %v786
      %v834 = vpop.f32.mrf.mxu0
      %v835 = vadd.f32 0.0, %v834
      %v836 = vpop.f32.mrf.mxu0
      %v837 = vpop.f32.mrf.mxu0
      %v838 = vadd.f32 0.0, %v837
      %v839 = vpop.f32.mrf.mxu0
      %840 = vmatprep.mubr.bf16.mxu0 0
      %841 = vmatmul.mubr.bf16.gmra.mxu0 %v789
      %v842 = vpop.f32.mrf.mxu0
      %v843 = vadd.f32 0.0, %v842
      %v844 = vpop.f32.mrf.mxu0
      %v845 = vpop.f32.mrf.mxu0
      %v846 = vadd.f32 0.0, %v845
      %v847 = vpop.f32.mrf.mxu0
      %848 = vmatprep.mubr.bf16.mxu0 0
      %849 = vmatmul.mubr.bf16.gmra.mxu0 %v792
      %v850 = vpop.f32.mrf.mxu0
      %v851 = vadd.f32 0.0, %v850
      %v852 = vpop.f32.mrf.mxu0
      %v853 = vpop.f32.mrf.mxu0
      %v854 = vadd.f32 0.0, %v853
      %v855 = vpop.f32.mrf.mxu0
      %856 = vmatprep.mubr.bf16.mxu0 0
      %857 = vmatmul.mubr.bf16.gmra.mxu0 %v795
      %v858 = vpop.f32.mrf.mxu0
      %v859 = vadd.f32 0.0, %v858
      %v860 = vpop.f32.mrf.mxu0
      %v861 = vpop.f32.mrf.mxu0
      %v862 = vadd.f32 0.0, %v861
      %v863 = vpop.f32.mrf.mxu0
      %864 = vmatprep.mubr.bf16.mxu0 0
      %865 = vmatmul.mubr.bf16.gmra.mxu0 %v798
      %v866 = vpop.f32.mrf.mxu0
      %v867 = vadd.f32 0.0, %v866
      %v868 = vpop.f32.mrf.mxu0
      %v869 = vpop.f32.mrf.mxu0
      %v870 = vpop.f32.mrf.mxu0
      %871 = vdwg.mxu0
      %v872 = vadd.f32 %v729, %v835
      %v873 = vadd.f32 %v730, %v838
      %v874 = vadd.f32 %v731, %v843
      %v875 = vadd.f32 %v732, %v846
      %v876 = vadd.f32 %v733, %v851
      %v877 = vadd.f32 %v734, %v854
      %v878 = vadd.f32 %v735, %v859
      %v879 = vadd.f32 %v736, %v862
      %v880 = vadd.f32 %v737, %v867
      %v881 = vld [vmem:[%s213] sm:$0x1]
      %v883 = vlaneseq
      %v884 = vshrl.u32 %v883, 7
      %v885 = vsub.s32 0, %v884
      %v886 = vrot.slane %v881, %v885
      %v888 = vadd.f32 %v872, %v886
      %v889 = vadd.f32 %v873, %v886
      %v890 = vadd.f32 %v874, %v886
      %v891 = vadd.f32 %v875, %v886
      %v892 = vadd.f32 %v876, %v886
      %v893 = vadd.f32 %v877, %v886
      %v894 = vadd.f32 %v878, %v886
      %v895 = vadd.f32 %v879, %v886
      %v896 = vadd.f32 %v880, %v886
      %v897 = vmax.f32 %v888, 0.0
      %v898 = vmax.f32 %v889, 0.0
      %v899 = vmax.f32 %v890, 0.0
      %v900 = vmax.f32 %v891, 0.0
      %v901 = vmax.f32 %v892, 0.0
      %v902 = vmax.f32 %v893, 0.0
      %v903 = vmax.f32 %v894, 0.0
      %v904 = vmax.f32 %v895, 0.0
      %v905 = vmax.f32 %v896, 0.0
      %v906 = vpack.c.bf16 %v898, %v897
      %v907 = vpack.c.bf16 %v900, %v899
      %v908 = vpack.c.bf16 %v902, %v901
      %v909 = vpack.c.bf16 %v904, %v903
      %v910 = vpack.c.bf16 %v905, %v905
      %v916 = vunpack.c.l.b16 %v906
      %v917 = vunpack.c.h.b16 %v906
      %v918 = vunpack.c.l.b16 %v907
      %v919 = vunpack.c.h.b16 %v907
      %v920 = vunpack.c.l.b16 %v908
      %v921 = vunpack.c.h.b16 %v908
      %v922 = vunpack.c.l.b16 %v909
      %v923 = vunpack.c.h.b16 %v909
      %v924 = vunpack.c.l.b16 %v910
      %v925 = vpack.c.b16 %v916, %v916
      %v926 = vpack.c.b16 %v917, %v917
      %v927 = vpack.c.b16 %v918, %v918
      %v928 = vpack.c.b16 %v919, %v919
      %v929 = vpack.c.b16 %v920, %v920
      %v930 = vpack.c.b16 %v921, %v921
      %v931 = vpack.c.b16 %v922, %v922
      %v932 = vpack.c.b16 %v923, %v923
      %v933 = vpack.c.b16 %v924, %v924
      %943 = vst [vmem:[%s221] sm:$0xf] %v925
      %944 = vst [vmem:[%s221 + $0x4] sm:$0xf] %v926
      %945 = vst [vmem:[%s221 + $0x8] sm:$0xf] %v927
      %946 = vst [vmem:[%s221 + $0xc] sm:$0xf] %v928
      %947 = vst [vmem:[%s221 + $0x10] sm:$0xf] %v929
      %948 = vst [vmem:[%s221 + $0x14] sm:$0xf] %v930
      %949 = vst [vmem:[%s221 + $0x18] sm:$0xf] %v931
      %950 = vst [vmem:[%s221 + $0x1c] sm:$0xf] %v932
      %951 = vst [vmem:[%s221 + $0x20] sm:$0xf] %v933
      %p952 = scmp.lt.s32.totalorder %s18, 1
      %s953 = scalar_select %p952, %s18, 1
      %p954 = scmp.lt.s32.totalorder %s19, 0
      %s955 = scalar_select %p954, %s19, 0
      %s956 = smul.addr %s953, 9
      %s957 = sadd.s32 %s955, %s956
      %s958 = smul.addr %s957, 4
      %s959 = scalar_lea.vmem %s3, %s958
      // Predicated region
      $region33: #{backbone_base_forward.5} parent=31 // pred_check
        %p960 = pneg %p124
      $region34: #{backbone_base_forward.5} parent=31 // pred_check_branch
        %962 = sbr.rel (%p960) target = $region36
      $region35: #{backbone_base_forward.5} parent=31 // pred_region
        _
      $region36: #{backbone_base_forward.5} parent=31 // pred_fallthru
        _
    $region32: #{backbone_base_forward.5} parent=5 // pred_fallthru
      _
    %p963 = scmp.le.s32.totalorder 2, %s9
    // Predicated region
    $region37: #{backbone_base_forward.5} parent=5 // pred_check
      %p964 = pneg %p963
    $region38: #{backbone_base_forward.5} parent=5 // pred_check_branch
      %966 = sbr.rel (%p964) target = $region40
    $region39: #{backbone_base_forward.5} parent=5 // pred_region
      %s967 = ssub.s32 %s9, 2
      // Predicated region
      $region41: #{backbone_base_forward.5} parent=39 // pred_check
        %p968 = pneg %p130
      $region42: #{backbone_base_forward.5} parent=39 // pred_check_branch
        %970 = sbr.rel (%p968) target = $region44
      $region43: #{backbone_base_forward.5} parent=39 // pred_region
        %p971 = scmp.lt.s32.totalorder %s20, 1
        %s972 = scalar_select %p971, %s20, 1
        %p973 = scmp.lt.s32.totalorder %s21, 0
        %s974 = scalar_select %p973, %s21, 0
        %s975 = smul.addr %s972, 9
        %s976 = sadd.s32 %s974, %s975
        %s977 = smul.addr %s976, 4
        %s978 = scalar_lea.vmem %s3, %s977
      $region44: #{backbone_base_forward.5} parent=39 // pred_fallthru
        _
    $region40: #{backbone_base_forward.5} parent=5 // pred_fallthru
      _
  $region6: #{backbone_base_forward.5} parent=0 // loop_footer
    %s13 = sadd.s32 1, %s9
  $region7: #{backbone_base_forward.5} parent=0 // loop_footer_branch
    %8 = sbr.rel target = $region3
  $region8: #{backbone_base_forward.5} parent=0 // loop_exit
    _

// kernel: backbone_base_forward.6
$region0: #{backbone_base_forward.6}
  #allocation0 [shape = 'u32[]', space=smem, size = 0x4, offset = 0x4, fixed_abs, tag = 'smem constant byte address 0x4 - core index']
  #allocation1 [shape = 'u32[144,128]{1,0:T(1,128)}', space=vmem, size = 0x12000, scoped, tag = 'internal scratch']
  %s0 = inlined_call_operand.vmem [shape: bf16[2,30,128], index: 0, kind: input, shape index: {}]
  %s1 = inlined_call_operand.vmem [shape: bf16[4,128,128], index: 1, kind: input, shape index: {}]
  %s2 = inlined_call_operand.vmem [shape: f32[1,128], index: 2, kind: input, shape index: {}]
  %s3 = inlined_call_operand.vmem [shape: bf16[2,20,128], index: 3, kind: output, shape index: {}]
  %s4 = sld [smem:[#allocation0]]
  $region45: #{backbone_base_forward.6} parent=0
    _
  %s6 = ssub.s32 1, %s4
  %s7 = scalar_select 0, %s6, %s4
  loop: start=0, step=1, limit=4
  $region2: #{backbone_base_forward.6} parent=0 // loop_pre_header
    _
  $region3: #{backbone_base_forward.6} parent=0 // loop_header
    %s9 = sphi 0, %s13
    %p10 = scmp.ge.s32.totalorder %s9, 4
    %s16 = sphi 0, %s28
    %s17 = sphi 0, %s24
    %s18 = sphi 0, %s16
    %s19 = sphi 0, %s17
    %s20 = sphi 0, %s18
    %s21 = sphi 0, %s19
    %s31 = sphi 0, %s33
    %s34 = sphi 0, %s31
    %s35 = sphi 0, %s34
    %s51 = sphi 0, %s35
    %s57 = sphi 0, %s59
    %s60 = sphi 0, %s57
    %s61 = sphi 0, %s60
    %s77 = sphi 0, %s61
    %s83 = sphi 0, %s85
    %s86 = sphi 0, %s83
    %s87 = sphi 0, %s86
    %s103 = sphi 0, %s87
    %s111 = sphi 0, %s113
    %s114 = sphi 0, %s111
    %s115 = sphi 0, %s114
    %s131 = sphi 0, %s115
  $region4: #{backbone_base_forward.6} parent=0 // loop_header_branch
    %12 = sbr.rel (%p10) target = $region8
  $region5: #{backbone_base_forward.6} parent=0 // loop_body
    %s14 = ssub.s32 %s9, 1
    %s15 = ssub.s32 %s9, 2
    %s22 = sadd.s32 1, %s17
    %p23 = scmp.ge.s32.totalorder %s22, 1
    %s24 = scalar_select %p23, 0, %s22
    %s25 = sadd.s32 1, %s16
    %s26 = scalar_select %p23, %s25, %s16
    %p27 = scmp.ge.s32.totalorder %s26, 2
    %s28 = scalar_select %p27, 0, %s26
    %s29 = ssub.s32 %s16, %s28
    %p30 = scmp.eq.s32.totalorder %s29, 0
    %s32 = sadd.s32 %s31, 1
    %s33 = scalar_select %p30, %s31, %s32
    %p36 = pneg %p30
    %p37 = scmp.eq.s32.totalorder %s9, 1
    %p38 = por %p36, %p37
    %p39 = scmp.ne.s32.totalorder %s31, %s34
    %p40 = scmp.eq.s32.totalorder %s9, 0
    %p41 = por %p39, %p40
    %p42 = scmp.ne.s32.totalorder %s31, %s34
    %p43 = scmp.eq.s32.totalorder %s14, 1
    %p44 = por %p42, %p43
    %p45 = scmp.ne.s32.totalorder %s34, %s35
    %p46 = scmp.eq.s32.totalorder %s14, 0
    %p47 = por %p45, %p46
    %p48 = scmp.ne.s32.totalorder %s34, %s35
    %p49 = scmp.eq.s32.totalorder %s15, 1
    %p50 = por %p48, %p49
    %p52 = scmp.ne.s32.totalorder %s35, %s51
    %p53 = scmp.eq.s32.totalorder %s15, 0
    %p54 = por %p52, %p53
    %s55 = ssub.s32 %s17, %s24
    %p56 = scmp.eq.s32.totalorder %s55, 0
    %s58 = sadd.s32 %s57, 1
    %s59 = scalar_select %p56, %s57, %s58
    %p62 = pneg %p56
    %p63 = scmp.eq.s32.totalorder %s9, 1
    %p64 = por %p62, %p63
    %p65 = scmp.ne.s32.totalorder %s57, %s60
    %p66 = scmp.eq.s32.totalorder %s9, 0
    %p67 = por %p65, %p66
    %p68 = scmp.ne.s32.totalorder %s57, %s60
    %p69 = scmp.eq.s32.totalorder %s14, 1
    %p70 = por %p68, %p69
    %p71 = scmp.ne.s32.totalorder %s60, %s61
    %p72 = scmp.eq.s32.totalorder %s14, 0
    %p73 = por %p71, %p72
    %p74 = scmp.ne.s32.totalorder %s60, %s61
    %p75 = scmp.eq.s32.totalorder %s15, 1
    %p76 = por %p74, %p75
    %p78 = scmp.ne.s32.totalorder %s61, %s77
    %p79 = scmp.eq.s32.totalorder %s15, 0
    %p80 = por %p78, %p79
    %s81 = ssub.s32 %s17, %s24
    %p82 = scmp.eq.s32.totalorder %s81, 0
    %s84 = sadd.s32 %s83, 1
    %s85 = scalar_select %p82, %s83, %s84
    %p88 = pneg %p82
    %p89 = scmp.eq.s32.totalorder %s9, 1
    %p90 = por %p88, %p89
    %p91 = scmp.ne.s32.totalorder %s83, %s86
    %p92 = scmp.eq.s32.totalorder %s9, 0
    %p93 = por %p91, %p92
    %p94 = scmp.ne.s32.totalorder %s83, %s86
    %p95 = scmp.eq.s32.totalorder %s14, 1
    %p96 = por %p94, %p95
    %p97 = scmp.ne.s32.totalorder %s86, %s87
    %p98 = scmp.eq.s32.totalorder %s14, 0
    %p99 = por %p97, %p98
    %p100 = scmp.ne.s32.totalorder %s86, %s87
    %p101 = scmp.eq.s32.totalorder %s15, 1
    %p102 = por %p100, %p101
    %p104 = scmp.ne.s32.totalorder %s87, %s103
    %p105 = scmp.eq.s32.totalorder %s15, 0
    %p106 = por %p104, %p105
    %s107 = ssub.s32 %s16, %s28
    %s108 = ssub.s32 %s17, %s24
    %s109 = sor.u32 %s107, %s108
    %p110 = scmp.eq.s32.totalorder %s109, 0
    %s112 = sadd.s32 %s111, 1
    %s113 = scalar_select %p110, %s111, %s112
    %p116 = pneg %p110
    %p117 = scmp.eq.s32.totalorder %s9, 1
    %p118 = por %p116, %p117
    %p119 = scmp.ne.s32.totalorder %s111, %s114
    %p120 = scmp.eq.s32.totalorder %s9, 0
    %p121 = por %p119, %p120
    %p122 = scmp.ne.s32.totalorder %s111, %s114
    %p123 = scmp.eq.s32.totalorder %s14, 1
    %p124 = por %p122, %p123
    %p125 = scmp.ne.s32.totalorder %s114, %s115
    %p126 = scmp.eq.s32.totalorder %s14, 0
    %p127 = por %p125, %p126
    %p128 = scmp.ne.s32.totalorder %s114, %s115
    %p129 = scmp.eq.s32.totalorder %s15, 1
    %p130 = por %p128, %p129
    %p132 = scmp.ne.s32.totalorder %s115, %s131
    %p133 = scmp.eq.s32.totalorder %s15, 0
    %p134 = por %p132, %p133
    %p135 = scmp.le.s32.totalorder 1, %s9
    %p136 = scmp.lt.s32.totalorder %s9, 3
    %p137 = pnand %p135, %p136
    %p138 = pneg %p137
    // Predicated region
    $region9: #{backbone_base_forward.6} parent=5 // pred_check
      _
    $region10: #{backbone_base_forward.6} parent=5 // pred_check_branch
      %140 = sbr.rel (%p137) target = $region12
    $region11: #{backbone_base_forward.6} parent=5 // pred_region
      %s141 = ssub.s32 %s9, 1
      // Predicated region
      $region13: #{backbone_base_forward.6} parent=11 // pred_check
        %p142 = pneg %p73
      $region14: #{backbone_base_forward.6} parent=11 // pred_check_branch
        %144 = sbr.rel (%p142) target = $region16
      $region15: #{backbone_base_forward.6} parent=11 // pred_region
        %p145 = scmp.lt.s32.totalorder %s19, 0
        %s146 = scalar_select %p145, %s19, 0
        %s147 = smul.addr %s146, 4
        %s148 = scalar_lea.vmem %s1, %s147
      $region16: #{backbone_base_forward.6} parent=11 // pred_fallthru
        _
      // Predicated region
      $region17: #{backbone_base_forward.6} parent=11 // pred_check
        %p149 = pneg %p99
      $region18: #{backbone_base_forward.6} parent=11 // pred_check_branch
        %151 = sbr.rel (%p149) target = $region20
      $region19: #{backbone_base_forward.6} parent=11 // pred_region
        %p152 = scmp.lt.s32.totalorder %s19, 0
        %s153 = scalar_select %p152, %s19, 0
        %s154 = scalar_lea.vmem %s2, %s153
      $region20: #{backbone_base_forward.6} parent=11 // pred_fallthru
        _
    $region12: #{backbone_base_forward.6} parent=5 // pred_fallthru
      _
    %p155 = scmp.lt.s32.totalorder %s9, 2
    // Predicated region
    $region21: #{backbone_base_forward.6} parent=5 // pred_check
      %p156 = pneg %p155
    $region22: #{backbone_base_forward.6} parent=5 // pred_check_branch
      %158 = sbr.rel (%p156) target = $region24
    $region23: #{backbone_base_forward.6} parent=5 // pred_region
      // Predicated region
      $region25: #{backbone_base_forward.6} parent=23 // pred_check
        %p159 = pneg %p41
      $region26: #{backbone_base_forward.6} parent=23 // pred_check_branch
        %161 = sbr.rel (%p159) target = $region28
      $region27: #{backbone_base_forward.6} parent=23 // pred_region
        %p162 = scmp.lt.s32.totalorder %s16, 1
        %s163 = scalar_select %p162, %s16, 1
        %s164 = smul.addr %s163, 4
        %s165 = smul.addr %s164, 4
        %s166 = scalar_lea.vmem %s0, %s165
      $region28: #{backbone_base_forward.6} parent=23 // pred_fallthru
        _
    $region24: #{backbone_base_forward.6} parent=5 // pred_fallthru
      _
    %p167 = scmp.le.s32.totalorder 1, %s9
    %p168 = scmp.lt.s32.totalorder %s9, 3
    %p169 = pnand %p167, %p168
    %p170 = pneg %p169
    // Predicated region
    $region29: #{backbone_base_forward.6} parent=5 // pred_check
      _
    $region30: #{backbone_base_forward.6} parent=5 // pred_check_branch
      %172 = sbr.rel (%p169) target = $region32
    $region31: #{backbone_base_forward.6} parent=5 // pred_region
      %s173 = ssub.s32 %s9, 1
      %p174 = scmp.lt.s32.totalorder %s18, 1
      %s175 = scalar_select %p174, %s18, 1
      %s176 = smul.addr %s175, 4
      %s177 = smul.addr %s176, 4
      %s178 = scalar_lea.vmem %s0, %s177
      %p179 = pneg %p47
      %p180 = pneg %p44
      %p181 = scmp.lt.s32.totalorder %s19, 0
      %s182 = scalar_select %p181, %s19, 0
      %s183 = smul.addr %s182, 4
      %s184 = scalar_lea.vmem %s1, %s183
      %p185 = pneg %p73
      %p186 = pneg %p70
      %p187 = scmp.lt.s32.totalorder %s19, 0
      %s188 = scalar_select %p187, %s19, 0
      %s189 = scalar_lea.vmem %s2, %s188
      %p190 = pneg %p99
      %p191 = pneg %p96
      %p192 = pneg %p127
      %p193 = pneg %p124
      %p194 = scmp.lt.s32.totalorder %s18, 1
      %s195 = scalar_select %p194, %s18, 1
      %p196 = scmp.lt.s32.totalorder %s19, 0
      %s197 = scalar_select %p196, %s19, 0
      %s198 = smul.addr %s195, 3
      %s199 = sadd.s32 %s197, %s198
      %s200 = smul.addr %s199, 4
      %s201 = scalar_lea.vmem %s3, %s200
      %p202 = scmp.lt.s32.totalorder %s18, 1
      %s203 = scalar_select %p202, %s18, 1
      %s204 = smul.addr %s203, 4
      %s205 = smul.addr %s204, 4
      %s206 = scalar_lea.vmem %s0, %s205
      %p207 = scmp.lt.s32.totalorder %s19, 0
      %s208 = scalar_select %p207, %s19, 0
      %s209 = smul.addr %s208, 4
      %s210 = scalar_lea.vmem %s1, %s209
      %p211 = scmp.lt.s32.totalorder %s19, 0
      %s212 = scalar_select %p211, %s19, 0
      %s213 = scalar_lea.vmem %s2, %s212
      %p214 = scmp.lt.s32.totalorder %s18, 1
      %s215 = scalar_select %p214, %s18, 1
      %p216 = scmp.lt.s32.totalorder %s19, 0
      %s217 = scalar_select %p216, %s19, 0
      %s218 = smul.addr %s215, 3
      %s219 = sadd.s32 %s217, %s218
      %s220 = smul.addr %s219, 4
      %s221 = scalar_lea.vmem %s3, %s220
      %v223 = vld [vmem:[%s206] sm:$0xf]
      %v224 = vld [vmem:[%s206 + $0x4] sm:$0xf]
      %v225 = vld [vmem:[%s206 + $0x8] sm:$0x3]
      %v226 = vld [vmem:[%s210] sm:$0xf]
      %v227 = vld [vmem:[%s210 + $0x4] sm:$0xf]
      %v228 = vld [vmem:[%s210 + $0x8] sm:$0xf]
      %v229 = vld [vmem:[%s210 + $0xc] sm:$0xf]
      %v230 = vld [vmem:[%s210 + $0x10] sm:$0xf]
      %v231 = vld [vmem:[%s210 + $0x14] sm:$0xf]
      %v232 = vld [vmem:[%s210 + $0x18] sm:$0xf]
      %v233 = vld [vmem:[%s210 + $0x1c] sm:$0xf]
      %v234 = vld [vmem:[%s210 + $0x20] sm:$0xf]
      %v235 = vld [vmem:[%s210 + $0x24] sm:$0xf]
      %v236 = vld [vmem:[%s210 + $0x28] sm:$0xf]
      %v237 = vld [vmem:[%s210 + $0x2c] sm:$0xf]
      %v238 = vld [vmem:[%s210 + $0x30] sm:$0xf]
      %v239 = vld [vmem:[%s210 + $0x34] sm:$0xf]
      %v240 = vld [vmem:[%s210 + $0x38] sm:$0xf]
      %v241 = vld [vmem:[%s210 + $0x3c] sm:$0xf]
      %v242 = vld [vmem:[%s206 + $0x8] sm:$0x7]
      %s243 = scalar_lea.vmem %s210, 64
      %v244 = vld [vmem:[%s243] sm:$0xf]
      %v245 = vld [vmem:[%s243 + $0x4] sm:$0xf]
      %v246 = vld [vmem:[%s243 + $0x8] sm:$0xf]
      %v247 = vld [vmem:[%s243 + $0xc] sm:$0xf]
      %v248 = vld [vmem:[%s243 + $0x10] sm:$0xf]
      %v249 = vld [vmem:[%s243 + $0x14] sm:$0xf]
      %v250 = vld [vmem:[%s243 + $0x18] sm:$0xf]
      %v251 = vld [vmem:[%s243 + $0x1c] sm:$0xf]
      %v252 = vld [vmem:[%s243 + $0x20] sm:$0xf]
      %v253 = vld [vmem:[%s243 + $0x24] sm:$0xf]
      %v254 = vld [vmem:[%s243 + $0x28] sm:$0xf]
      %v255 = vld [vmem:[%s243 + $0x2c] sm:$0xf]
      %v256 = vld [vmem:[%s243 + $0x30] sm:$0xf]
      %v257 = vld [vmem:[%s243 + $0x34] sm:$0xf]
      %v258 = vld [vmem:[%s243 + $0x38] sm:$0xf]
      %v259 = vld [vmem:[%s243 + $0x3c] sm:$0xf]
      %v263 = vunpack.c.l.b16 %v223
      %v264 = vunpack.c.l.b16 %v224
      %v265 = vunpack.c.l.b16 %v242
      %v266 = vpack.c.b16 %v264, %v263
      %v267 = vpack.c.b16 %v265, %v265
      %vm268 = vsmask.f32 7424
      %v270 = vshrl.u32 %v266, 16
      %v272 = vshll.u32 %v266, 16
      %v274 = vrot.slane %v272, 1
      %v275 = vor.u32 %v270, %v274
      %v277 = vshll.u32 %v267, 16
      %v279 = vrot.slane %v277, 1
      %v280 = vsel %vm268, %v275, %v279
      %v281 = vshrl.u32 %v267, 16
      %v283 = vor.u32 %v281, %v279
      %v302 = vunpack.c.l.b16 %v244
      %v303 = vunpack.c.l.b16 %v245
      %v304 = vunpack.c.l.b16 %v246
      %v305 = vunpack.c.l.b16 %v247
      %v306 = vunpack.c.l.b16 %v248
      %v307 = vunpack.c.l.b16 %v249
      %v308 = vunpack.c.l.b16 %v250
      %v309 = vunpack.c.l.b16 %v251
      %v310 = vunpack.c.l.b16 %v252
      %v311 = vunpack.c.l.b16 %v253
      %v312 = vunpack.c.l.b16 %v254
      %v313 = vunpack.c.l.b16 %v255
      %v314 = vunpack.c.l.b16 %v256
      %v315 = vunpack.c.l.b16 %v257
      %v316 = vunpack.c.l.b16 %v258
      %v317 = vunpack.c.l.b16 %v259
      %v318 = vpack.c.b16 %v303, %v302
      %v319 = vpack.c.b16 %v305, %v304
      %v320 = vpack.c.b16 %v307, %v306
      %v321 = vpack.c.b16 %v309, %v308
      %v322 = vpack.c.b16 %v311, %v310
      %v323 = vpack.c.b16 %v313, %v312
      %v324 = vpack.c.b16 %v315, %v314
      %v325 = vpack.c.b16 %v317, %v316
      %334 = vmatprep.subr.bf16.mxu0 0
      %335 = vmatpush1.bf16.msra.mxu0 %v325
      %336 = vmatprep.subr.bf16.mxu0 0
      %337 = vmatpush1.bf16.msra.mxu0 %v324
      %338 = vmatprep.subr.bf16.mxu0 0
      %339 = vmatpush1.bf16.msra.mxu0 %v323
      %340 = vmatprep.subr.bf16.mxu0 0
      %341 = vmatpush1.bf16.msra.mxu0 %v322
      %342 = vmatprep.subr.bf16.mxu0 0
      %343 = vmatpush1.bf16.msra.mxu0 %v321
      %344 = vmatprep.subr.bf16.mxu0 0
      %345 = vmatpush1.bf16.msra.mxu0 %v320
      %346 = vmatprep.subr.bf16.mxu0 0
      %347 = vmatpush1.bf16.msra.mxu0 %v319
      %348 = vmatprep.subr.bf16.mxu0 0
      %349 = vmatpush1.bf16.msra.mxu0 %v318
      %350 = vmatprep.subr.bf16.mxu0 0
      %351 = vmatpush2.bf16.msra.mxu0 0
      %352 = vmatprep.subr.bf16.mxu0 0
      %353 = vmatpush2.bf16.msra.mxu0 0
      %354 = vmatprep.subr.bf16.mxu0 0
      %355 = vmatpush2.bf16.msra.mxu0 0
      %356 = vmatprep.subr.bf16.mxu0 0
      %357 = vmatpush2.bf16.msra.mxu0 0
      %358 = vmatprep.subr.bf16.mxu0 0
      %359 = vmatpush2.bf16.msra.mxu0 0
      %360 = vmatprep.subr.bf16.mxu0 0
      %361 = vmatpush2.bf16.msra.mxu0 0
      %362 = vmatprep.subr.bf16.mxu0 0
      %363 = vmatpush2.bf16.msra.mxu0 0
      %364 = vmatprep.subr.bf16.mxu0 0
      %365 = vmatpush2.bf16.msra.mxu0 0
      %366 = vmatprep.mubr.bf16.mxu0 0
      %367 = vmatmul.mubr.bf16.gmra.mxu0 %v280
      %v368 = vpop.f32.mrf.mxu0
      %v369 = vadd.f32 0.0, %v368
      %v370 = vpop.f32.mrf.mxu0
      %v371 = vpop.f32.mrf.mxu0
      %v372 = vadd.f32 0.0, %v371
      %v373 = vpop.f32.mrf.mxu0
      %374 = vmatprep.mubr.bf16.mxu0 0
      %375 = vmatmul.mubr.bf16.gmra.mxu0 %v283
      %v376 = vpop.f32.mrf.mxu0
      %v377 = vadd.f32 0.0, %v376
      %v378 = vpop.f32.mrf.mxu0
      %v379 = vpop.f32.mrf.mxu0
      %v380 = vpop.f32.mrf.mxu0
      %381 = vdwg.mxu0
      %v383 = vunpack.c.l.b16 %v225
      %v384 = vpack.c.b16 %v383, %v383
      %v403 = vunpack.c.l.b16 %v226
      %v404 = vunpack.c.l.b16 %v227
      %v405 = vunpack.c.l.b16 %v228
      %v406 = vunpack.c.l.b16 %v229
      %v407 = vunpack.c.l.b16 %v230
      %v408 = vunpack.c.l.b16 %v231
      %v409 = vunpack.c.l.b16 %v232
      %v410 = vunpack.c.l.b16 %v233
      %v411 = vunpack.c.l.b16 %v234
      %v412 = vunpack.c.l.b16 %v235
      %v413 = vunpack.c.l.b16 %v236
      %v414 = vunpack.c.l.b16 %v237
      %v415 = vunpack.c.l.b16 %v238
      %v416 = vunpack.c.l.b16 %v239
      %v417 = vunpack.c.l.b16 %v240
      %v418 = vunpack.c.l.b16 %v241
      %v419 = vpack.c.b16 %v404, %v403
      %v420 = vpack.c.b16 %v406, %v405
      %v421 = vpack.c.b16 %v408, %v407
      %v422 = vpack.c.b16 %v410, %v409
      %v423 = vpack.c.b16 %v412, %v411
      %v424 = vpack.c.b16 %v414, %v413
      %v425 = vpack.c.b16 %v416, %v415
      %v426 = vpack.c.b16 %v418, %v417
      %435 = vmatprep.subr.bf16.mxu0 0
      %436 = vmatpush1.bf16.msra.mxu0 %v426
      %437 = vmatprep.subr.bf16.mxu0 0
      %438 = vmatpush1.bf16.msra.mxu0 %v425
      %439 = vmatprep.subr.bf16.mxu0 0
      %440 = vmatpush1.bf16.msra.mxu0 %v424
      %441 = vmatprep.subr.bf16.mxu0 0
      %442 = vmatpush1.bf16.msra.mxu0 %v423
      %443 = vmatprep.subr.bf16.mxu0 0
      %444 = vmatpush1.bf16.msra.mxu0 %v422
      %445 = vmatprep.subr.bf16.mxu0 0
      %446 = vmatpush1.bf16.msra.mxu0 %v421
      %447 = vmatprep.subr.bf16.mxu0 0
      %448 = vmatpush1.bf16.msra.mxu0 %v420
      %449 = vmatprep.subr.bf16.mxu0 0
      %450 = vmatpush1.bf16.msra.mxu0 %v419
      %451 = vmatprep.subr.bf16.mxu0 0
      %452 = vmatpush2.bf16.msra.mxu0 0
      %453 = vmatprep.subr.bf16.mxu0 0
      %454 = vmatpush2.bf16.msra.mxu0 0
      %455 = vmatprep.subr.bf16.mxu0 0
      %456 = vmatpush2.bf16.msra.mxu0 0
      %457 = vmatprep.subr.bf16.mxu0 0
      %458 = vmatpush2.bf16.msra.mxu0 0
      %459 = vmatprep.subr.bf16.mxu0 0
      %460 = vmatpush2.bf16.msra.mxu0 0
      %461 = vmatprep.subr.bf16.mxu0 0
      %462 = vmatpush2.bf16.msra.mxu0 0
      %463 = vmatprep.subr.bf16.mxu0 0
      %464 = vmatpush2.bf16.msra.mxu0 0
      %465 = vmatprep.subr.bf16.mxu0 0
      %466 = vmatpush2.bf16.msra.mxu0 0
      %467 = vmatprep.mubr.bf16.mxu0 0
      %468 = vmatmul.mubr.bf16.gmra.mxu0 %v266
      %v469 = vpop.f32.mrf.mxu0
      %v470 = vadd.f32 %v369, %v469
      %v471 = vpop.f32.mrf.mxu0
      %v472 = vpop.f32.mrf.mxu0
      %v473 = vadd.f32 %v372, %v472
      %v474 = vpop.f32.mrf.mxu0
      %475 = vmatprep.mubr.bf16.mxu0 0
      %476 = vmatmul.mubr.bf16.gmra.mxu0 %v384
      %v477 = vpop.f32.mrf.mxu0
      %v478 = vadd.f32 %v377, %v477
      %v479 = vpop.f32.mrf.mxu0
      %v480 = vpop.f32.mrf.mxu0
      %v481 = vpop.f32.mrf.mxu0
      %482 = vdwg.mxu0
      %v483 = vld [vmem:[%s206] sm:$0xc]
      %v484 = vld [vmem:[%s206 + $0x4] sm:$0xf]
      %v485 = vld [vmem:[%s206 + $0x8] sm:$0xf]
      %v486 = vld [vmem:[%s206 + $0xc] sm:$0x1]
      %s487 = scalar_lea.vmem %s210, 128
      %v488 = vld [vmem:[%s487] sm:$0xf]
      %v489 = vld [vmem:[%s487 + $0x4] sm:$0xf]
      %v490 = vld [vmem:[%s487 + $0x8] sm:$0xf]
      %v491 = vld [vmem:[%s487 + $0xc] sm:$0xf]
      %v492 = vld [vmem:[%s487 + $0x10] sm:$0xf]
      %v493 = vld [vmem:[%s487 + $0x14] sm:$0xf]
      %v494 = vld [vmem:[%s487 + $0x18] sm:$0xf]
      %v495 = vld [vmem:[%s487 + $0x1c] sm:$0xf]
      %v496 = vld [vmem:[%s487 + $0x20] sm:$0xf]
      %v497 = vld [vmem:[%s487 + $0x24] sm:$0xf]
      %v498 = vld [vmem:[%s487 + $0x28] sm:$0xf]
      %v499 = vld [vmem:[%s487 + $0x2c] sm:$0xf]
      %v500 = vld [vmem:[%s487 + $0x30] sm:$0xf]
      %v501 = vld [vmem:[%s487 + $0x34] sm:$0xf]
      %v502 = vld [vmem:[%s487 + $0x38] sm:$0xf]
      %v503 = vld [vmem:[%s487 + $0x3c] sm:$0xf]
      %v508 = vunpack.c.l.b16 %v483
      %v509 = vunpack.c.l.b16 %v484
      %v510 = vunpack.c.l.b16 %v485
      %v511 = vunpack.c.l.b16 %v486
      %v512 = vpack.c.b16 %v509, %v508
      %v513 = vpack.c.b16 %v511, %v510
      %vm514 = vsmask.f32 5376
      %v516 = vshrl.u32 %v512, 16
      %v518 = vrot.slane %v516, 2
      %v519 = vshll.u32 %v512, 16
      %v521 = vrot.slane %v519, 3
      %v522 = vor.u32 %v518, %v521
      %v524 = vshrl.u32 %v513, 16
      %v526 = vrot.slane %v524, 2
      %v527 = vshll.u32 %v513, 16
      %v529 = vrot.slane %v527, 3
      %v530 = vor.u32 %v526, %v529
      %v531 = vsel %vm514, %v522, %v530
      %v550 = vunpack.c.l.b16 %v488
      %v551 = vunpack.c.l.b16 %v489
      %v552 = vunpack.c.l.b16 %v490
      %v553 = vunpack.c.l.b16 %v491
      %v554 = vunpack.c.l.b16 %v492
      %v555 = vunpack.c.l.b16 %v493
      %v556 = vunpack.c.l.b16 %v494
      %v557 = vunpack.c.l.b16 %v495
      %v558 = vunpack.c.l.b16 %v496
      %v559 = vunpack.c.l.b16 %v497
      %v560 = vunpack.c.l.b16 %v498
      %v561 = vunpack.c.l.b16 %v499
      %v562 = vunpack.c.l.b16 %v500
      %v563 = vunpack.c.l.b16 %v501
      %v564 = vunpack.c.l.b16 %v502
      %v565 = vunpack.c.l.b16 %v503
      %v566 = vpack.c.b16 %v551, %v550
      %v567 = vpack.c.b16 %v553, %v552
      %v568 = vpack.c.b16 %v555, %v554
      %v569 = vpack.c.b16 %v557, %v556
      %v570 = vpack.c.b16 %v559, %v558
      %v571 = vpack.c.b16 %v561, %v560
      %v572 = vpack.c.b16 %v563, %v562
      %v573 = vpack.c.b16 %v565, %v564
      %582 = vmatprep.subr.bf16.mxu0 0
      %583 = vmatpush1.bf16.msra.mxu0 %v573
      %584 = vmatprep.subr.bf16.mxu0 0
      %585 = vmatpush1.bf16.msra.mxu0 %v572
      %586 = vmatprep.subr.bf16.mxu0 0
      %587 = vmatpush1.bf16.msra.mxu0 %v571
      %588 = vmatprep.subr.bf16.mxu0 0
      %589 = vmatpush1.bf16.msra.mxu0 %v570
      %590 = vmatprep.subr.bf16.mxu0 0
      %591 = vmatpush1.bf16.msra.mxu0 %v569
      %592 = vmatprep.subr.bf16.mxu0 0
      %593 = vmatpush1.bf16.msra.mxu0 %v568
      %594 = vmatprep.subr.bf16.mxu0 0
      %595 = vmatpush1.bf16.msra.mxu0 %v567
      %596 = vmatprep.subr.bf16.mxu0 0
      %597 = vmatpush1.bf16.msra.mxu0 %v566
      %598 = vmatprep.subr.bf16.mxu0 0
      %599 = vmatpush2.bf16.msra.mxu0 0
      %600 = vmatprep.subr.bf16.mxu0 0
      %601 = vmatpush2.bf16.msra.mxu0 0
      %602 = vmatprep.subr.bf16.mxu0 0
      %603 = vmatpush2.bf16.msra.mxu0 0
      %604 = vmatprep.subr.bf16.mxu0 0
      %605 = vmatpush2.bf16.msra.mxu0 0
      %606 = vmatprep.subr.bf16.mxu0 0
      %607 = vmatpush2.bf16.msra.mxu0 0
      %608 = vmatprep.subr.bf16.mxu0 0
      %609 = vmatpush2.bf16.msra.mxu0 0
      %610 = vmatprep.subr.bf16.mxu0 0
      %611 = vmatpush2.bf16.msra.mxu0 0
      %612 = vmatprep.subr.bf16.mxu0 0
      %613 = vmatpush2.bf16.msra.mxu0 0
      %614 = vmatprep.mubr.bf16.mxu0 0
      %615 = vmatmul.mubr.bf16.gmra.mxu0 %v531
      %v616 = vpop.f32.mrf.mxu0
      %v617 = vadd.f32 0.0, %v616
      %v618 = vpop.f32.mrf.mxu0
      %v619 = vpop.f32.mrf.mxu0
      %v620 = vadd.f32 0.0, %v619
      %v621 = vpop.f32.mrf.mxu0
      %622 = vmatprep.mubr.bf16.mxu0 0
      %623 = vmatmul.mubr.bf16.gmra.mxu0 %v530
      %v624 = vpop.f32.mrf.mxu0
      %v625 = vadd.f32 0.0, %v624
      %v626 = vpop.f32.mrf.mxu0
      %v627 = vpop.f32.mrf.mxu0
      %v628 = vpop.f32.mrf.mxu0
      %629 = vdwg.mxu0
      %v630 = vadd.f32 %v470, %v617
      %v631 = vadd.f32 %v473, %v620
      %v632 = vadd.f32 %v478, %v625
      %v633 = vld [vmem:[%s206] sm:$0x8]
      %s634 = scalar_lea.vmem %s210, 192
      %v635 = vld [vmem:[%s634] sm:$0xf]
      %v636 = vld [vmem:[%s634 + $0x4] sm:$0xf]
      %v637 = vld [vmem:[%s634 + $0x8] sm:$0xf]
      %v638 = vld [vmem:[%s634 + $0xc] sm:$0xf]
      %v639 = vld [vmem:[%s634 + $0x10] sm:$0xf]
      %v640 = vld [vmem:[%s634 + $0x14] sm:$0xf]
      %v641 = vld [vmem:[%s634 + $0x18] sm:$0xf]
      %v642 = vld [vmem:[%s634 + $0x1c] sm:$0xf]
      %v643 = vld [vmem:[%s634 + $0x20] sm:$0xf]
      %v644 = vld [vmem:[%s634 + $0x24] sm:$0xf]
      %v645 = vld [vmem:[%s634 + $0x28] sm:$0xf]
      %v646 = vld [vmem:[%s634 + $0x2c] sm:$0xf]
      %v647 = vld [vmem:[%s634 + $0x30] sm:$0xf]
      %v648 = vld [vmem:[%s634 + $0x34] sm:$0xf]
      %v649 = vld [vmem:[%s634 + $0x38] sm:$0xf]
      %v650 = vld [vmem:[%s634 + $0x3c] sm:$0xf]
      %v652 = vunpack.c.l.b16 %v633
      %v653 = vpack.c.b16 %v509, %v652
      %vm654 = vcmask 1044480
      %v655 = vrot.slane %v653, 3
      %v656 = vrot.slane %v513, 3
      %v657 = vsel %vm654, %v655, %v656
      %v676 = vunpack.c.l.b16 %v635
      %v677 = vunpack.c.l.b16 %v636
      %v678 = vunpack.c.l.b16 %v637
      %v679 = vunpack.c.l.b16 %v638
      %v680 = vunpack.c.l.b16 %v639
      %v681 = vunpack.c.l.b16 %v640
      %v682 = vunpack.c.l.b16 %v641
      %v683 = vunpack.c.l.b16 %v642
      %v684 = vunpack.c.l.b16 %v643
      %v685 = vunpack.c.l.b16 %v644
      %v686 = vunpack.c.l.b16 %v645
      %v687 = vunpack.c.l.b16 %v646
      %v688 = vunpack.c.l.b16 %v647
      %v689 = vunpack.c.l.b16 %v648
      %v690 = vunpack.c.l.b16 %v649
      %v691 = vunpack.c.l.b16 %v650
      %v692 = vpack.c.b16 %v677, %v676
      %v693 = vpack.c.b16 %v679, %v678
      %v694 = vpack.c.b16 %v681, %v680
      %v695 = vpack.c.b16 %v683, %v682
      %v696 = vpack.c.b16 %v685, %v684
      %v697 = vpack.c.b16 %v687, %v686
      %v698 = vpack.c.b16 %v689, %v688
      %v699 = vpack.c.b16 %v691, %v690
      %708 = vmatprep.subr.bf16.mxu0 0
      %709 = vmatpush1.bf16.msra.mxu0 %v699
      %710 = vmatprep.subr.bf16.mxu0 0
      %711 = vmatpush1.bf16.msra.mxu0 %v698
      %712 = vmatprep.subr.bf16.mxu0 0
      %713 = vmatpush1.bf16.msra.mxu0 %v697
      %714 = vmatprep.subr.bf16.mxu0 0
      %715 = vmatpush1.bf16.msra.mxu0 %v696
      %716 = vmatprep.subr.bf16.mxu0 0
      %717 = vmatpush1.bf16.msra.mxu0 %v695
      %718 = vmatprep.subr.bf16.mxu0 0
      %719 = vmatpush1.bf16.msra.mxu0 %v694
      %720 = vmatprep.subr.bf16.mxu0 0
      %721 = vmatpush1.bf16.msra.mxu0 %v693
      %722 = vmatprep.subr.bf16.mxu0 0
      %723 = vmatpush1.bf16.msra.mxu0 %v692
      %724 = vmatprep.subr.bf16.mxu0 0
      %725 = vmatpush2.bf16.msra.mxu0 0
      %726 = vmatprep.subr.bf16.mxu0 0
      %727 = vmatpush2.bf16.msra.mxu0 0
      %728 = vmatprep.subr.bf16.mxu0 0
      %729 = vmatpush2.bf16.msra.mxu0 0
      %730 = vmatprep.subr.bf16.mxu0 0
      %731 = vmatpush2.bf16.msra.mxu0 0
      %732 = vmatprep.subr.bf16.mxu0 0
      %733 = vmatpush2.bf16.msra.mxu0 0
      %734 = vmatprep.subr.bf16.mxu0 0
      %735 = vmatpush2.bf16.msra.mxu0 0
      %736 = vmatprep.subr.bf16.mxu0 0
      %737 = vmatpush2.bf16.msra.mxu0 0
      %738 = vmatprep.subr.bf16.mxu0 0
      %739 = vmatpush2.bf16.msra.mxu0 0
      %740 = vmatprep.mubr.bf16.mxu0 0
      %741 = vmatmul.mubr.bf16.gmra.mxu0 %v657
      %v742 = vpop.f32.mrf.mxu0
      %v743 = vadd.f32 0.0, %v742
      %v744 = vpop.f32.mrf.mxu0
      %v745 = vpop.f32.mrf.mxu0
      %v746 = vadd.f32 0.0, %v745
      %v747 = vpop.f32.mrf.mxu0
      %748 = vmatprep.mubr.bf16.mxu0 0
      %749 = vmatmul.mubr.bf16.gmra.mxu0 %v656
      %v750 = vpop.f32.mrf.mxu0
      %v751 = vadd.f32 0.0, %v750
      %v752 = vpop.f32.mrf.mxu0
      %v753 = vpop.f32.mrf.mxu0
      %v754 = vpop.f32.mrf.mxu0
      %755 = vdwg.mxu0
      %v756 = vadd.f32 %v630, %v743
      %v757 = vadd.f32 %v631, %v746
      %v758 = vadd.f32 %v632, %v751
      %v759 = vld [vmem:[%s213] sm:$0x1]
      %v761 = vlaneseq
      %v762 = vshrl.u32 %v761, 7
      %v763 = vsub.s32 0, %v762
      %v764 = vrot.slane %v759, %v763
      %v766 = vadd.f32 %v756, %v764
      %v767 = vadd.f32 %v757, %v764
      %v768 = vadd.f32 %v758, %v764
      %v769 = vmax.f32 %v766, 0.0
      %v770 = vmax.f32 %v767, 0.0
      %v771 = vmax.f32 %v768, 0.0
      %v772 = vpack.c.bf16 %v770, %v769
      %v773 = vpack.c.bf16 %v771, %v771
      %v776 = vunpack.c.l.b16 %v772
      %v777 = vunpack.c.h.b16 %v772
      %v778 = vunpack.c.l.b16 %v773
      %v779 = vpack.c.b16 %v776, %v776
      %v780 = vpack.c.b16 %v777, %v777
      %v781 = vpack.c.b16 %v778, %v778
      %785 = vst [vmem:[%s221] sm:$0xf] %v779
      %786 = vst [vmem:[%s221 + $0x4] sm:$0xf] %v780
      %787 = vst [vmem:[%s221 + $0x8] sm:$0x3] %v781
      %p788 = scmp.lt.s32.totalorder %s18, 1
      %s789 = scalar_select %p788, %s18, 1
      %p790 = scmp.lt.s32.totalorder %s19, 0
      %s791 = scalar_select %p790, %s19, 0
      %s792 = smul.addr %s789, 3
      %s793 = sadd.s32 %s791, %s792
      %s794 = smul.addr %s793, 4
      %s795 = scalar_lea.vmem %s3, %s794
      // Predicated region
      $region33: #{backbone_base_forward.6} parent=31 // pred_check
        %p796 = pneg %p124
      $region34: #{backbone_base_forward.6} parent=31 // pred_check_branch
        %798 = sbr.rel (%p796) target = $region36
      $region35: #{backbone_base_forward.6} parent=31 // pred_region
        _
      $region36: #{backbone_base_forward.6} parent=31 // pred_fallthru
        _
    $region32: #{backbone_base_forward.6} parent=5 // pred_fallthru
      _
    %p799 = scmp.le.s32.totalorder 2, %s9
    // Predicated region
    $region37: #{backbone_base_forward.6} parent=5 // pred_check
      %p800 = pneg %p799
    $region38: #{backbone_base_forward.6} parent=5 // pred_check_branch
      %802 = sbr.rel (%p800) target = $region40
    $region39: #{backbone_base_forward.6} parent=5 // pred_region
      %s803 = ssub.s32 %s9, 2
      // Predicated region
      $region41: #{backbone_base_forward.6} parent=39 // pred_check
        %p804 = pneg %p130
      $region42: #{backbone_base_forward.6} parent=39 // pred_check_branch
        %806 = sbr.rel (%p804) target = $region44
      $region43: #{backbone_base_forward.6} parent=39 // pred_region
        %p807 = scmp.lt.s32.totalorder %s20, 1
        %s808 = scalar_select %p807, %s20, 1
        %p809 = scmp.lt.s32.totalorder %s21, 0
        %s810 = scalar_select %p809, %s21, 0
        %s811 = smul.addr %s808, 3
        %s812 = sadd.s32 %s810, %s811
        %s813 = smul.addr %s812, 4
        %s814 = scalar_lea.vmem %s3, %s813
      $region44: #{backbone_base_forward.6} parent=39 // pred_fallthru
        _
    $region40: #{backbone_base_forward.6} parent=5 // pred_fallthru
      _
  $region6: #{backbone_base_forward.6} parent=0 // loop_footer
    %s13 = sadd.s32 1, %s9
  $region7: #{backbone_base_forward.6} parent=0 // loop_footer_branch
    %8 = sbr.rel target = $region3
  $region8: #{backbone_base_forward.6} parent=0 // loop_exit
    _

// kernel: backbone_base_forward.7
$region0: #{backbone_base_forward.7}
  #allocation0 [shape = 'u32[]', space=smem, size = 0x4, offset = 0x4, fixed_abs, tag = 'smem constant byte address 0x4 - core index']
  #allocation1 [shape = 'u32[144,128]{1,0:T(1,128)}', space=vmem, size = 0x12000, scoped, tag = 'internal scratch']
  %s0 = inlined_call_operand.vmem [shape: bf16[2,12,256], index: 0, kind: input, shape index: {}]
  %s1 = inlined_call_operand.vmem [shape: bf16[4,256,128], index: 1, kind: input, shape index: {}]
  %s2 = inlined_call_operand.vmem [shape: f32[1,128], index: 2, kind: input, shape index: {}]
  %s3 = inlined_call_operand.vmem [shape: bf16[2,6,128], index: 3, kind: output, shape index: {}]
  %s4 = sld [smem:[#allocation0]]
  $region45: #{backbone_base_forward.7} parent=0
    _
  %s6 = ssub.s32 1, %s4
  %s7 = scalar_select 0, %s6, %s4
  loop: start=0, step=1, limit=4
  $region2: #{backbone_base_forward.7} parent=0 // loop_pre_header
    _
  $region3: #{backbone_base_forward.7} parent=0 // loop_header
    %s9 = sphi 0, %s13
    %p10 = scmp.ge.s32.totalorder %s9, 4
    %s16 = sphi 0, %s28
    %s17 = sphi 0, %s24
    %s18 = sphi 0, %s16
    %s19 = sphi 0, %s17
    %s20 = sphi 0, %s18
    %s21 = sphi 0, %s19
    %s31 = sphi 0, %s33
    %s34 = sphi 0, %s31
    %s35 = sphi 0, %s34
    %s51 = sphi 0, %s35
    %s57 = sphi 0, %s59
    %s60 = sphi 0, %s57
    %s61 = sphi 0, %s60
    %s77 = sphi 0, %s61
    %s83 = sphi 0, %s85
    %s86 = sphi 0, %s83
    %s87 = sphi 0, %s86
    %s103 = sphi 0, %s87
    %s111 = sphi 0, %s113
    %s114 = sphi 0, %s111
    %s115 = sphi 0, %s114
    %s131 = sphi 0, %s115
  $region4: #{backbone_base_forward.7} parent=0 // loop_header_branch
    %12 = sbr.rel (%p10) target = $region8
  $region5: #{backbone_base_forward.7} parent=0 // loop_body
    %s14 = ssub.s32 %s9, 1
    %s15 = ssub.s32 %s9, 2
    %s22 = sadd.s32 1, %s17
    %p23 = scmp.ge.s32.totalorder %s22, 1
    %s24 = scalar_select %p23, 0, %s22
    %s25 = sadd.s32 1, %s16
    %s26 = scalar_select %p23, %s25, %s16
    %p27 = scmp.ge.s32.totalorder %s26, 2
    %s28 = scalar_select %p27, 0, %s26
    %s29 = ssub.s32 %s16, %s28
    %p30 = scmp.eq.s32.totalorder %s29, 0
    %s32 = sadd.s32 %s31, 1
    %s33 = scalar_select %p30, %s31, %s32
    %p36 = pneg %p30
    %p37 = scmp.eq.s32.totalorder %s9, 1
    %p38 = por %p36, %p37
    %p39 = scmp.ne.s32.totalorder %s31, %s34
    %p40 = scmp.eq.s32.totalorder %s9, 0
    %p41 = por %p39, %p40
    %p42 = scmp.ne.s32.totalorder %s31, %s34
    %p43 = scmp.eq.s32.totalorder %s14, 1
    %p44 = por %p42, %p43
    %p45 = scmp.ne.s32.totalorder %s34, %s35
    %p46 = scmp.eq.s32.totalorder %s14, 0
    %p47 = por %p45, %p46
    %p48 = scmp.ne.s32.totalorder %s34, %s35
    %p49 = scmp.eq.s32.totalorder %s15, 1
    %p50 = por %p48, %p49
    %p52 = scmp.ne.s32.totalorder %s35, %s51
    %p53 = scmp.eq.s32.totalorder %s15, 0
    %p54 = por %p52, %p53
    %s55 = ssub.s32 %s17, %s24
    %p56 = scmp.eq.s32.totalorder %s55, 0
    %s58 = sadd.s32 %s57, 1
    %s59 = scalar_select %p56, %s57, %s58
    %p62 = pneg %p56
    %p63 = scmp.eq.s32.totalorder %s9, 1
    %p64 = por %p62, %p63
    %p65 = scmp.ne.s32.totalorder %s57, %s60
    %p66 = scmp.eq.s32.totalorder %s9, 0
    %p67 = por %p65, %p66
    %p68 = scmp.ne.s32.totalorder %s57, %s60
    %p69 = scmp.eq.s32.totalorder %s14, 1
    %p70 = por %p68, %p69
    %p71 = scmp.ne.s32.totalorder %s60, %s61
    %p72 = scmp.eq.s32.totalorder %s14, 0
    %p73 = por %p71, %p72
    %p74 = scmp.ne.s32.totalorder %s60, %s61
    %p75 = scmp.eq.s32.totalorder %s15, 1
    %p76 = por %p74, %p75
    %p78 = scmp.ne.s32.totalorder %s61, %s77
    %p79 = scmp.eq.s32.totalorder %s15, 0
    %p80 = por %p78, %p79
    %s81 = ssub.s32 %s17, %s24
    %p82 = scmp.eq.s32.totalorder %s81, 0
    %s84 = sadd.s32 %s83, 1
    %s85 = scalar_select %p82, %s83, %s84
    %p88 = pneg %p82
    %p89 = scmp.eq.s32.totalorder %s9, 1
    %p90 = por %p88, %p89
    %p91 = scmp.ne.s32.totalorder %s83, %s86
    %p92 = scmp.eq.s32.totalorder %s9, 0
    %p93 = por %p91, %p92
    %p94 = scmp.ne.s32.totalorder %s83, %s86
    %p95 = scmp.eq.s32.totalorder %s14, 1
    %p96 = por %p94, %p95
    %p97 = scmp.ne.s32.totalorder %s86, %s87
    %p98 = scmp.eq.s32.totalorder %s14, 0
    %p99 = por %p97, %p98
    %p100 = scmp.ne.s32.totalorder %s86, %s87
    %p101 = scmp.eq.s32.totalorder %s15, 1
    %p102 = por %p100, %p101
    %p104 = scmp.ne.s32.totalorder %s87, %s103
    %p105 = scmp.eq.s32.totalorder %s15, 0
    %p106 = por %p104, %p105
    %s107 = ssub.s32 %s16, %s28
    %s108 = ssub.s32 %s17, %s24
    %s109 = sor.u32 %s107, %s108
    %p110 = scmp.eq.s32.totalorder %s109, 0
    %s112 = sadd.s32 %s111, 1
    %s113 = scalar_select %p110, %s111, %s112
    %p116 = pneg %p110
    %p117 = scmp.eq.s32.totalorder %s9, 1
    %p118 = por %p116, %p117
    %p119 = scmp.ne.s32.totalorder %s111, %s114
    %p120 = scmp.eq.s32.totalorder %s9, 0
    %p121 = por %p119, %p120
    %p122 = scmp.ne.s32.totalorder %s111, %s114
    %p123 = scmp.eq.s32.totalorder %s14, 1
    %p124 = por %p122, %p123
    %p125 = scmp.ne.s32.totalorder %s114, %s115
    %p126 = scmp.eq.s32.totalorder %s14, 0
    %p127 = por %p125, %p126
    %p128 = scmp.ne.s32.totalorder %s114, %s115
    %p129 = scmp.eq.s32.totalorder %s15, 1
    %p130 = por %p128, %p129
    %p132 = scmp.ne.s32.totalorder %s115, %s131
    %p133 = scmp.eq.s32.totalorder %s15, 0
    %p134 = por %p132, %p133
    %p135 = scmp.le.s32.totalorder 1, %s9
    %p136 = scmp.lt.s32.totalorder %s9, 3
    %p137 = pnand %p135, %p136
    %p138 = pneg %p137
    // Predicated region
    $region9: #{backbone_base_forward.7} parent=5 // pred_check
      _
    $region10: #{backbone_base_forward.7} parent=5 // pred_check_branch
      %140 = sbr.rel (%p137) target = $region12
    $region11: #{backbone_base_forward.7} parent=5 // pred_region
      %s141 = ssub.s32 %s9, 1
      // Predicated region
      $region13: #{backbone_base_forward.7} parent=11 // pred_check
        %p142 = pneg %p73
      $region14: #{backbone_base_forward.7} parent=11 // pred_check_branch
        %144 = sbr.rel (%p142) target = $region16
      $region15: #{backbone_base_forward.7} parent=11 // pred_region
        %p145 = scmp.lt.s32.totalorder %s19, 0
        %s146 = scalar_select %p145, %s19, 0
        %s147 = smul.addr %s146, 4
        %s148 = scalar_lea.vmem %s1, %s147
      $region16: #{backbone_base_forward.7} parent=11 // pred_fallthru
        _
      // Predicated region
      $region17: #{backbone_base_forward.7} parent=11 // pred_check
        %p149 = pneg %p99
      $region18: #{backbone_base_forward.7} parent=11 // pred_check_branch
        %151 = sbr.rel (%p149) target = $region20
      $region19: #{backbone_base_forward.7} parent=11 // pred_region
        %p152 = scmp.lt.s32.totalorder %s19, 0
        %s153 = scalar_select %p152, %s19, 0
        %s154 = scalar_lea.vmem %s2, %s153
      $region20: #{backbone_base_forward.7} parent=11 // pred_fallthru
        _
    $region12: #{backbone_base_forward.7} parent=5 // pred_fallthru
      _
    %p155 = scmp.lt.s32.totalorder %s9, 2
    // Predicated region
    $region21: #{backbone_base_forward.7} parent=5 // pred_check
      %p156 = pneg %p155
    $region22: #{backbone_base_forward.7} parent=5 // pred_check_branch
      %158 = sbr.rel (%p156) target = $region24
    $region23: #{backbone_base_forward.7} parent=5 // pred_region
      // Predicated region
      $region25: #{backbone_base_forward.7} parent=23 // pred_check
        %p159 = pneg %p41
      $region26: #{backbone_base_forward.7} parent=23 // pred_check_branch
        %161 = sbr.rel (%p159) target = $region28
      $region27: #{backbone_base_forward.7} parent=23 // pred_region
        %p162 = scmp.lt.s32.totalorder %s16, 1
        %s163 = scalar_select %p162, %s16, 1
        %s164 = smul.addr %s163, 4
        %s165 = smul.addr %s164, 4
        %s166 = scalar_lea.vmem %s0, %s165
      $region28: #{backbone_base_forward.7} parent=23 // pred_fallthru
        _
    $region24: #{backbone_base_forward.7} parent=5 // pred_fallthru
      _
    %p167 = scmp.le.s32.totalorder 1, %s9
    %p168 = scmp.lt.s32.totalorder %s9, 3
    %p169 = pnand %p167, %p168
    %p170 = pneg %p169
    // Predicated region
    $region29: #{backbone_base_forward.7} parent=5 // pred_check
      _
    $region30: #{backbone_base_forward.7} parent=5 // pred_check_branch
      %172 = sbr.rel (%p169) target = $region32
    $region31: #{backbone_base_forward.7} parent=5 // pred_region
      %s173 = ssub.s32 %s9, 1
      %p174 = scmp.lt.s32.totalorder %s18, 1
      %s175 = scalar_select %p174, %s18, 1
      %s176 = smul.addr %s175, 4
      %s177 = smul.addr %s176, 4
      %s178 = scalar_lea.vmem %s0, %s177
      %p179 = pneg %p47
      %p180 = pneg %p44
      %p181 = scmp.lt.s32.totalorder %s19, 0
      %s182 = scalar_select %p181, %s19, 0
      %s183 = smul.addr %s182, 4
      %s184 = scalar_lea.vmem %s1, %s183
      %p185 = pneg %p73
      %p186 = pneg %p70
      %p187 = scmp.lt.s32.totalorder %s19, 0
      %s188 = scalar_select %p187, %s19, 0
      %s189 = scalar_lea.vmem %s2, %s188
      %p190 = pneg %p99
      %p191 = pneg %p96
      %p192 = pneg %p127
      %p193 = pneg %p124
      %p194 = scmp.lt.s32.totalorder %s18, 1
      %s195 = scalar_select %p194, %s18, 1
      %p196 = scmp.lt.s32.totalorder %s19, 0
      %s197 = scalar_select %p196, %s19, 0
      %s198 = sadd.s32 %s197, %s195
      %s199 = smul.addr %s198, 4
      %s200 = scalar_lea.vmem %s3, %s199
      %p201 = scmp.lt.s32.totalorder %s18, 1
      %s202 = scalar_select %p201, %s18, 1
      %s203 = smul.addr %s202, 4
      %s204 = smul.addr %s203, 4
      %s205 = scalar_lea.vmem %s0, %s204
      %p206 = scmp.lt.s32.totalorder %s19, 0
      %s207 = scalar_select %p206, %s19, 0
      %s208 = smul.addr %s207, 4
      %s209 = scalar_lea.vmem %s1, %s208
      %p210 = scmp.lt.s32.totalorder %s19, 0
      %s211 = scalar_select %p210, %s19, 0
      %s212 = scalar_lea.vmem %s2, %s211
      %p213 = scmp.lt.s32.totalorder %s18, 1
      %s214 = scalar_select %p213, %s18, 1
      %p215 = scmp.lt.s32.totalorder %s19, 0
      %s216 = scalar_select %p215, %s19, 0
      %s217 = sadd.s32 %s216, %s214
      %s218 = smul.addr %s217, 4
      %s219 = scalar_lea.vmem %s3, %s218
      %v221 = vld [vmem:[%s205] sm:$0x77]
      %v222 = vld [vmem:[%s209] sm:$0xf]
      %v223 = vld [vmem:[%s209 + $0x4] sm:$0xf]
      %v224 = vld [vmem:[%s209 + $0x8] sm:$0xf]
      %v225 = vld [vmem:[%s209 + $0xc] sm:$0xf]
      %v226 = vld [vmem:[%s209 + $0x10] sm:$0xf]
      %v227 = vld [vmem:[%s209 + $0x14] sm:$0xf]
      %v228 = vld [vmem:[%s209 + $0x18] sm:$0xf]
      %v229 = vld [vmem:[%s209 + $0x1c] sm:$0xf]
      %v230 = vld [vmem:[%s209 + $0x20] sm:$0xf]
      %v231 = vld [vmem:[%s209 + $0x24] sm:$0xf]
      %v232 = vld [vmem:[%s209 + $0x28] sm:$0xf]
      %v233 = vld [vmem:[%s209 + $0x2c] sm:$0xf]
      %v234 = vld [vmem:[%s209 + $0x30] sm:$0xf]
      %v235 = vld [vmem:[%s209 + $0x34] sm:$0xf]
      %v236 = vld [vmem:[%s209 + $0x38] sm:$0xf]
      %v237 = vld [vmem:[%s209 + $0x3c] sm:$0xf]
      %v238 = vld [vmem:[%s209 + $0x40] sm:$0xf]
      %v239 = vld [vmem:[%s209 + $0x44] sm:$0xf]
      %v240 = vld [vmem:[%s209 + $0x48] sm:$0xf]
      %v241 = vld [vmem:[%s209 + $0x4c] sm:$0xf]
      %v242 = vld [vmem:[%s209 + $0x50] sm:$0xf]
      %v243 = vld [vmem:[%s209 + $0x54] sm:$0xf]
      %v244 = vld [vmem:[%s209 + $0x58] sm:$0xf]
      %v245 = vld [vmem:[%s209 + $0x5c] sm:$0xf]
      %v246 = vld [vmem:[%s209 + $0x60] sm:$0xf]
      %v247 = vld [vmem:[%s209 + $0x64] sm:$0xf]
      %v248 = vld [vmem:[%s209 + $0x68] sm:$0xf]
      %v249 = vld [vmem:[%s209 + $0x6c] sm:$0xf]
      %v250 = vld [vmem:[%s209 + $0x70] sm:$0xf]
      %v251 = vld [vmem:[%s209 + $0x74] sm:$0xf]
      %v252 = vld [vmem:[%s209 + $0x78] sm:$0xf]
      %v253 = vld [vmem:[%s209 + $0x7c] sm:$0xf]
      %v254 = vld [vmem:[%s205] sm:$0xff]
      %s255 = scalar_lea.vmem %s209, 128
      %v256 = vld [vmem:[%s255] sm:$0xf]
      %v257 = vld [vmem:[%s255 + $0x4] sm:$0xf]
      %v258 = vld [vmem:[%s255 + $0x8] sm:$0xf]
      %v259 = vld [vmem:[%s255 + $0xc] sm:$0xf]
      %v260 = vld [vmem:[%s255 + $0x10] sm:$0xf]
      %v261 = vld [vmem:[%s255 + $0x14] sm:$0xf]
      %v262 = vld [vmem:[%s255 + $0x18] sm:$0xf]
      %v263 = vld [vmem:[%s255 + $0x1c] sm:$0xf]
      %v264 = vld [vmem:[%s255 + $0x20] sm:$0xf]
      %v265 = vld [vmem:[%s255 + $0x24] sm:$0xf]
      %v266 = vld [vmem:[%s255 + $0x28] sm:$0xf]
      %v267 = vld [vmem:[%s255 + $0x2c] sm:$0xf]
      %v268 = vld [vmem:[%s255 + $0x30] sm:$0xf]
      %v269 = vld [vmem:[%s255 + $0x34] sm:$0xf]
      %v270 = vld [vmem:[%s255 + $0x38] sm:$0xf]
      %v271 = vld [vmem:[%s255 + $0x3c] sm:$0xf]
      %v272 = vld [vmem:[%s255 + $0x40] sm:$0xf]
      %v273 = vld [vmem:[%s255 + $0x44] sm:$0xf]
      %v274 = vld [vmem:[%s255 + $0x48] sm:$0xf]
      %v275 = vld [vmem:[%s255 + $0x4c] sm:$0xf]
      %v276 = vld [vmem:[%s255 + $0x50] sm:$0xf]
      %v277 = vld [vmem:[%s255 + $0x54] sm:$0xf]
      %v278 = vld [vmem:[%s255 + $0x58] sm:$0xf]
      %v279 = vld [vmem:[%s255 + $0x5c] sm:$0xf]
      %v280 = vld [vmem:[%s255 + $0x60] sm:$0xf]
      %v281 = vld [vmem:[%s255 + $0x64] sm:$0xf]
      %v282 = vld [vmem:[%s255 + $0x68] sm:$0xf]
      %v283 = vld [vmem:[%s255 + $0x6c] sm:$0xf]
      %v284 = vld [vmem:[%s255 + $0x70] sm:$0xf]
      %v285 = vld [vmem:[%s255 + $0x74] sm:$0xf]
      %v286 = vld [vmem:[%s255 + $0x78] sm:$0xf]
      %v287 = vld [vmem:[%s255 + $0x7c] sm:$0xf]
      %v289 = vunpack.c.l.b16 %v254
      %v290 = vunpack.c.h.b16 %v254
      %v291 = vpack.c.b16 %v289, %v289
      %v292 = vpack.c.b16 %v290, %v290
      %v294 = vshrl.u32 %v291, 16
      %v296 = vshll.u32 %v291, 16
      %v298 = vrot.slane %v296, 1
      %v299 = vor.u32 %v294, %v298
      %v301 = vshrl.u32 %v292, 16
      %v303 = vshll.u32 %v292, 16
      %v305 = vrot.slane %v303, 1
      %v306 = vor.u32 %v301, %v305
      %v341 = vunpack.c.l.b16 %v256
      %v342 = vunpack.c.l.b16 %v257
      %v343 = vunpack.c.l.b16 %v258
      %v344 = vunpack.c.l.b16 %v259
      %v345 = vunpack.c.l.b16 %v260
      %v346 = vunpack.c.l.b16 %v261
      %v347 = vunpack.c.l.b16 %v262
      %v348 = vunpack.c.l.b16 %v263
      %v349 = vunpack.c.l.b16 %v264
      %v350 = vunpack.c.l.b16 %v265
      %v351 = vunpack.c.l.b16 %v266
      %v352 = vunpack.c.l.b16 %v267
      %v353 = vunpack.c.l.b16 %v268
      %v354 = vunpack.c.l.b16 %v269
      %v355 = vunpack.c.l.b16 %v270
      %v356 = vunpack.c.l.b16 %v271
      %v357 = vunpack.c.l.b16 %v272
      %v358 = vunpack.c.l.b16 %v273
      %v359 = vunpack.c.l.b16 %v274
      %v360 = vunpack.c.l.b16 %v275
      %v361 = vunpack.c.l.b16 %v276
      %v362 = vunpack.c.l.b16 %v277
      %v363 = vunpack.c.l.b16 %v278
      %v364 = vunpack.c.l.b16 %v279
      %v365 = vunpack.c.l.b16 %v280
      %v366 = vunpack.c.l.b16 %v281
      %v367 = vunpack.c.l.b16 %v282
      %v368 = vunpack.c.l.b16 %v283
      %v369 = vunpack.c.l.b16 %v284
      %v370 = vunpack.c.l.b16 %v285
      %v371 = vunpack.c.l.b16 %v286
      %v372 = vunpack.c.l.b16 %v287
      %v373 = vpack.c.b16 %v342, %v341
      %v374 = vpack.c.b16 %v344, %v343
      %v375 = vpack.c.b16 %v346, %v345
      %v376 = vpack.c.b16 %v348, %v347
      %v377 = vpack.c.b16 %v350, %v349
      %v378 = vpack.c.b16 %v352, %v351
      %v379 = vpack.c.b16 %v354, %v353
      %v380 = vpack.c.b16 %v356, %v355
      %v381 = vpack.c.b16 %v358, %v357
      %v382 = vpack.c.b16 %v360, %v359
      %v383 = vpack.c.b16 %v362, %v361
      %v384 = vpack.c.b16 %v364, %v363
      %v385 = vpack.c.b16 %v366, %v365
      %v386 = vpack.c.b16 %v368, %v367
      %v387 = vpack.c.b16 %v370, %v369
      %v388 = vpack.c.b16 %v372, %v371
      %405 = vmatprep.subr.bf16.mxu0 0
      %406 = vmatpush1.bf16.msra.mxu0 %v380
      %407 = vmatprep.subr.bf16.mxu0 0
      %408 = vmatpush1.bf16.msra.mxu0 %v379
      %409 = vmatprep.subr.bf16.mxu0 0
      %410 = vmatpush1.bf16.msra.mxu0 %v378
      %411 = vmatprep.subr.bf16.mxu0 0
      %412 = vmatpush1.bf16.msra.mxu0 %v377
      %413 = vmatprep.subr.bf16.mxu0 0
      %414 = vmatpush1.bf16.msra.mxu0 %v376
      %415 = vmatprep.subr.bf16.mxu0 0
      %416 = vmatpush1.bf16.msra.mxu0 %v375
      %417 = vmatprep.subr.bf16.mxu0 0
      %418 = vmatpush1.bf16.msra.mxu0 %v374
      %419 = vmatprep.subr.bf16.mxu0 0
      %420 = vmatpush1.bf16.msra.mxu0 %v373
      %421 = vmatprep.subr.bf16.mxu0 0
      %422 = vmatpush2.bf16.msra.mxu0 %v388
      %423 = vmatprep.subr.bf16.mxu0 0
      %424 = vmatpush2.bf16.msra.mxu0 %v387
      %425 = vmatprep.subr.bf16.mxu0 0
      %426 = vmatpush2.bf16.msra.mxu0 %v386
      %427 = vmatprep.subr.bf16.mxu0 0
      %428 = vmatpush2.bf16.msra.mxu0 %v385
      %429 = vmatprep.subr.bf16.mxu0 0
      %430 = vmatpush2.bf16.msra.mxu0 %v384
      %431 = vmatprep.subr.bf16.mxu0 0
      %432 = vmatpush2.bf16.msra.mxu0 %v383
      %433 = vmatprep.subr.bf16.mxu0 0
      %434 = vmatpush2.bf16.msra.mxu0 %v382
      %435 = vmatprep.subr.bf16.mxu0 0
      %436 = vmatpush2.bf16.msra.mxu0 %v381
      %437 = vmatprep.mubr.bf16.mxu0 %v306
      %438 = vmatmul.mubr.bf16.gmra.mxu0 %v299
      %v439 = vpop.f32.mrf.mxu0
      %v440 = vadd.f32 0.0, %v439
      %v441 = vpop.f32.mrf.mxu0
      %v442 = vpop.f32.mrf.mxu0
      %v443 = vpop.f32.mrf.mxu0
      %444 = vdwg.mxu0
      %v446 = vunpack.c.l.b16 %v221
      %v447 = vunpack.c.h.b16 %v221
      %v448 = vpack.c.b16 %v446, %v446
      %v449 = vpack.c.b16 %v447, %v447
      %v484 = vunpack.c.l.b16 %v222
      %v485 = vunpack.c.l.b16 %v223
      %v486 = vunpack.c.l.b16 %v224
      %v487 = vunpack.c.l.b16 %v225
      %v488 = vunpack.c.l.b16 %v226
      %v489 = vunpack.c.l.b16 %v227
      %v490 = vunpack.c.l.b16 %v228
      %v491 = vunpack.c.l.b16 %v229
      %v492 = vunpack.c.l.b16 %v230
      %v493 = vunpack.c.l.b16 %v231
      %v494 = vunpack.c.l.b16 %v232
      %v495 = vunpack.c.l.b16 %v233
      %v496 = vunpack.c.l.b16 %v234
      %v497 = vunpack.c.l.b16 %v235
      %v498 = vunpack.c.l.b16 %v236
      %v499 = vunpack.c.l.b16 %v237
      %v500 = vunpack.c.l.b16 %v238
      %v501 = vunpack.c.l.b16 %v239
      %v502 = vunpack.c.l.b16 %v240
      %v503 = vunpack.c.l.b16 %v241
      %v504 = vunpack.c.l.b16 %v242
      %v505 = vunpack.c.l.b16 %v243
      %v506 = vunpack.c.l.b16 %v244
      %v507 = vunpack.c.l.b16 %v245
      %v508 = vunpack.c.l.b16 %v246
      %v509 = vunpack.c.l.b16 %v247
      %v510 = vunpack.c.l.b16 %v248
      %v511 = vunpack.c.l.b16 %v249
      %v512 = vunpack.c.l.b16 %v250
      %v513 = vunpack.c.l.b16 %v251
      %v514 = vunpack.c.l.b16 %v252
      %v515 = vunpack.c.l.b16 %v253
      %v516 = vpack.c.b16 %v485, %v484
      %v517 = vpack.c.b16 %v487, %v486
      %v518 = vpack.c.b16 %v489, %v488
      %v519 = vpack.c.b16 %v491, %v490
      %v520 = vpack.c.b16 %v493, %v492
      %v521 = vpack.c.b16 %v495, %v494
      %v522 = vpack.c.b16 %v497, %v496
      %v523 = vpack.c.b16 %v499, %v498
      %v524 = vpack.c.b16 %v501, %v500
      %v525 = vpack.c.b16 %v503, %v502
      %v526 = vpack.c.b16 %v505, %v504
      %v527 = vpack.c.b16 %v507, %v506
      %v528 = vpack.c.b16 %v509, %v508
      %v529 = vpack.c.b16 %v511, %v510
      %v530 = vpack.c.b16 %v513, %v512
      %v531 = vpack.c.b16 %v515, %v514
      %548 = vmatprep.subr.bf16.mxu0 0
      %549 = vmatpush1.bf16.msra.mxu0 %v523
      %550 = vmatprep.subr.bf16.mxu0 0
      %551 = vmatpush1.bf16.msra.mxu0 %v522
      %552 = vmatprep.subr.bf16.mxu0 0
      %553 = vmatpush1.bf16.msra.mxu0 %v521
      %554 = vmatprep.subr.bf16.mxu0 0
      %555 = vmatpush1.bf16.msra.mxu0 %v520
      %556 = vmatprep.subr.bf16.mxu0 0
      %557 = vmatpush1.bf16.msra.mxu0 %v519
      %558 = vmatprep.subr.bf16.mxu0 0
      %559 = vmatpush1.bf16.msra.mxu0 %v518
      %560 = vmatprep.subr.bf16.mxu0 0
      %561 = vmatpush1.bf16.msra.mxu0 %v517
      %562 = vmatprep.subr.bf16.mxu0 0
      %563 = vmatpush1.bf16.msra.mxu0 %v516
      %564 = vmatprep.subr.bf16.mxu0 0
      %565 = vmatpush2.bf16.msra.mxu0 %v531
      %566 = vmatprep.subr.bf16.mxu0 0
      %567 = vmatpush2.bf16.msra.mxu0 %v530
      %568 = vmatprep.subr.bf16.mxu0 0
      %569 = vmatpush2.bf16.msra.mxu0 %v529
      %570 = vmatprep.subr.bf16.mxu0 0
      %571 = vmatpush2.bf16.msra.mxu0 %v528
      %572 = vmatprep.subr.bf16.mxu0 0
      %573 = vmatpush2.bf16.msra.mxu0 %v527
      %574 = vmatprep.subr.bf16.mxu0 0
      %575 = vmatpush2.bf16.msra.mxu0 %v526
      %576 = vmatprep.subr.bf16.mxu0 0
      %577 = vmatpush2.bf16.msra.mxu0 %v525
      %578 = vmatprep.subr.bf16.mxu0 0
      %579 = vmatpush2.bf16.msra.mxu0 %v524
      %580 = vmatprep.mubr.bf16.mxu0 %v449
      %581 = vmatmul.mubr.bf16.gmra.mxu0 %v448
      %v582 = vpop.f32.mrf.mxu0
      %v583 = vadd.f32 %v440, %v582
      %v584 = vpop.f32.mrf.mxu0
      %v585 = vpop.f32.mrf.mxu0
      %v586 = vpop.f32.mrf.mxu0
      %587 = vdwg.mxu0
      %v588 = vld [vmem:[%s205] sm:$0xee]
      %v589 = vld [vmem:[%s205 + $0x8] sm:$0x11]
      %s590 = scalar_lea.vmem %s209, 256
      %v591 = vld [vmem:[%s590] sm:$0xf]
      %v592 = vld [vmem:[%s590 + $0x4] sm:$0xf]
      %v593 = vld [vmem:[%s590 + $0x8] sm:$0xf]
      %v594 = vld [vmem:[%s590 + $0xc] sm:$0xf]
      %v595 = vld [vmem:[%s590 + $0x10] sm:$0xf]
      %v596 = vld [vmem:[%s590 + $0x14] sm:$0xf]
      %v597 = vld [vmem:[%s590 + $0x18] sm:$0xf]
      %v598 = vld [vmem:[%s590 + $0x1c] sm:$0xf]
      %v599 = vld [vmem:[%s590 + $0x20] sm:$0xf]
      %v600 = vld [vmem:[%s590 + $0x24] sm:$0xf]
      %v601 = vld [vmem:[%s590 + $0x28] sm:$0xf]
      %v602 = vld [vmem:[%s590 + $0x2c] sm:$0xf]
      %v603 = vld [vmem:[%s590 + $0x30] sm:$0xf]
      %v604 = vld [vmem:[%s590 + $0x34] sm:$0xf]
      %v605 = vld [vmem:[%s590 + $0x38] sm:$0xf]
      %v606 = vld [vmem:[%s590 + $0x3c] sm:$0xf]
      %v607 = vld [vmem:[%s590 + $0x40] sm:$0xf]
      %v608 = vld [vmem:[%s590 + $0x44] sm:$0xf]
      %v609 = vld [vmem:[%s590 + $0x48] sm:$0xf]
      %v610 = vld [vmem:[%s590 + $0x4c] sm:$0xf]
      %v611 = vld [vmem:[%s590 + $0x50] sm:$0xf]
      %v612 = vld [vmem:[%s590 + $0x54] sm:$0xf]
      %v613 = vld [vmem:[%s590 + $0x58] sm:$0xf]
      %v614 = vld [vmem:[%s590 + $0x5c] sm:$0xf]
      %v615 = vld [vmem:[%s590 + $0x60] sm:$0xf]
      %v616 = vld [vmem:[%s590 + $0x64] sm:$0xf]
      %v617 = vld [vmem:[%s590 + $0x68] sm:$0xf]
      %v618 = vld [vmem:[%s590 + $0x6c] sm:$0xf]
      %v619 = vld [vmem:[%s590 + $0x70] sm:$0xf]
      %v620 = vld [vmem:[%s590 + $0x74] sm:$0xf]
      %v621 = vld [vmem:[%s590 + $0x78] sm:$0xf]
      %v622 = vld [vmem:[%s590 + $0x7c] sm:$0xf]
      %v625 = vunpack.c.l.b16 %v588
      %v626 = vunpack.c.h.b16 %v588
      %v627 = vunpack.c.l.b16 %v589
      %v628 = vunpack.c.h.b16 %v589
      %v629 = vpack.c.b16 %v627, %v625
      %v630 = vpack.c.b16 %v628, %v626
      %v632 = vshrl.u32 %v629, 16
      %v634 = vrot.slane %v632, 1
      %v635 = vshll.u32 %v629, 16
      %v637 = vrot.slane %v635, 2
      %v638 = vor.u32 %v634, %v637
      %v640 = vshrl.u32 %v630, 16
      %v642 = vrot.slane %v640, 1
      %v643 = vshll.u32 %v630, 16
      %v645 = vrot.slane %v643, 2
      %v646 = vor.u32 %v642, %v645
      %v681 = vunpack.c.l.b16 %v591
      %v682 = vunpack.c.l.b16 %v592
      %v683 = vunpack.c.l.b16 %v593
      %v684 = vunpack.c.l.b16 %v594
      %v685 = vunpack.c.l.b16 %v595
      %v686 = vunpack.c.l.b16 %v596
      %v687 = vunpack.c.l.b16 %v597
      %v688 = vunpack.c.l.b16 %v598
      %v689 = vunpack.c.l.b16 %v599
      %v690 = vunpack.c.l.b16 %v600
      %v691 = vunpack.c.l.b16 %v601
      %v692 = vunpack.c.l.b16 %v602
      %v693 = vunpack.c.l.b16 %v603
      %v694 = vunpack.c.l.b16 %v604
      %v695 = vunpack.c.l.b16 %v605
      %v696 = vunpack.c.l.b16 %v606
      %v697 = vunpack.c.l.b16 %v607
      %v698 = vunpack.c.l.b16 %v608
      %v699 = vunpack.c.l.b16 %v609
      %v700 = vunpack.c.l.b16 %v610
      %v701 = vunpack.c.l.b16 %v611
      %v702 = vunpack.c.l.b16 %v612
      %v703 = vunpack.c.l.b16 %v613
      %v704 = vunpack.c.l.b16 %v614
      %v705 = vunpack.c.l.b16 %v615
      %v706 = vunpack.c.l.b16 %v616
      %v707 = vunpack.c.l.b16 %v617
      %v708 = vunpack.c.l.b16 %v618
      %v709 = vunpack.c.l.b16 %v619
      %v710 = vunpack.c.l.b16 %v620
      %v711 = vunpack.c.l.b16 %v621
      %v712 = vunpack.c.l.b16 %v622
      %v713 = vpack.c.b16 %v682, %v681
      %v714 = vpack.c.b16 %v684, %v683
      %v715 = vpack.c.b16 %v686, %v685
      %v716 = vpack.c.b16 %v688, %v687
      %v717 = vpack.c.b16 %v690, %v689
      %v718 = vpack.c.b16 %v692, %v691
      %v719 = vpack.c.b16 %v694, %v693
      %v720 = vpack.c.b16 %v696, %v695
      %v721 = vpack.c.b16 %v698, %v697
      %v722 = vpack.c.b16 %v700, %v699
      %v723 = vpack.c.b16 %v702, %v701
      %v724 = vpack.c.b16 %v704, %v703
      %v725 = vpack.c.b16 %v706, %v705
      %v726 = vpack.c.b16 %v708, %v707
      %v727 = vpack.c.b16 %v710, %v709
      %v728 = vpack.c.b16 %v712, %v711
      %745 = vmatprep.subr.bf16.mxu0 0
      %746 = vmatpush1.bf16.msra.mxu0 %v720
      %747 = vmatprep.subr.bf16.mxu0 0
      %748 = vmatpush1.bf16.msra.mxu0 %v719
      %749 = vmatprep.subr.bf16.mxu0 0
      %750 = vmatpush1.bf16.msra.mxu0 %v718
      %751 = vmatprep.subr.bf16.mxu0 0
      %752 = vmatpush1.bf16.msra.mxu0 %v717
      %753 = vmatprep.subr.bf16.mxu0 0
      %754 = vmatpush1.bf16.msra.mxu0 %v716
      %755 = vmatprep.subr.bf16.mxu0 0
      %756 = vmatpush1.bf16.msra.mxu0 %v715
      %757 = vmatprep.subr.bf16.mxu0 0
      %758 = vmatpush1.bf16.msra.mxu0 %v714
      %759 = vmatprep.subr.bf16.mxu0 0
      %760 = vmatpush1.bf16.msra.mxu0 %v713
      %761 = vmatprep.subr.bf16.mxu0 0
      %762 = vmatpush2.bf16.msra.mxu0 %v728
      %763 = vmatprep.subr.bf16.mxu0 0
      %764 = vmatpush2.bf16.msra.mxu0 %v727
      %765 = vmatprep.subr.bf16.mxu0 0
      %766 = vmatpush2.bf16.msra.mxu0 %v726
      %767 = vmatprep.subr.bf16.mxu0 0
      %768 = vmatpush2.bf16.msra.mxu0 %v725
      %769 = vmatprep.subr.bf16.mxu0 0
      %770 = vmatpush2.bf16.msra.mxu0 %v724
      %771 = vmatprep.subr.bf16.mxu0 0
      %772 = vmatpush2.bf16.msra.mxu0 %v723
      %773 = vmatprep.subr.bf16.mxu0 0
      %774 = vmatpush2.bf16.msra.mxu0 %v722
      %775 = vmatprep.subr.bf16.mxu0 0
      %776 = vmatpush2.bf16.msra.mxu0 %v721
      %777 = vmatprep.mubr.bf16.mxu0 %v646
      %778 = vmatmul.mubr.bf16.gmra.mxu0 %v638
      %v779 = vpop.f32.mrf.mxu0
      %v780 = vadd.f32 0.0, %v779
      %v781 = vpop.f32.mrf.mxu0
      %v782 = vpop.f32.mrf.mxu0
      %v783 = vpop.f32.mrf.mxu0
      %784 = vdwg.mxu0
      %v785 = vadd.f32 %v583, %v780
      %v786 = vld [vmem:[%s205] sm:$0xcc]
      %s787 = scalar_lea.vmem %s209, 384
      %v788 = vld [vmem:[%s787] sm:$0xf]
      %v789 = vld [vmem:[%s787 + $0x4] sm:$0xf]
      %v790 = vld [vmem:[%s787 + $0x8] sm:$0xf]
      %v791 = vld [vmem:[%s787 + $0xc] sm:$0xf]
      %v792 = vld [vmem:[%s787 + $0x10] sm:$0xf]
      %v793 = vld [vmem:[%s787 + $0x14] sm:$0xf]
      %v794 = vld [vmem:[%s787 + $0x18] sm:$0xf]
      %v795 = vld [vmem:[%s787 + $0x1c] sm:$0xf]
      %v796 = vld [vmem:[%s787 + $0x20] sm:$0xf]
      %v797 = vld [vmem:[%s787 + $0x24] sm:$0xf]
      %v798 = vld [vmem:[%s787 + $0x28] sm:$0xf]
      %v799 = vld [vmem:[%s787 + $0x2c] sm:$0xf]
      %v800 = vld [vmem:[%s787 + $0x30] sm:$0xf]
      %v801 = vld [vmem:[%s787 + $0x34] sm:$0xf]
      %v802 = vld [vmem:[%s787 + $0x38] sm:$0xf]
      %v803 = vld [vmem:[%s787 + $0x3c] sm:$0xf]
      %v804 = vld [vmem:[%s787 + $0x40] sm:$0xf]
      %v805 = vld [vmem:[%s787 + $0x44] sm:$0xf]
      %v806 = vld [vmem:[%s787 + $0x48] sm:$0xf]
      %v807 = vld [vmem:[%s787 + $0x4c] sm:$0xf]
      %v808 = vld [vmem:[%s787 + $0x50] sm:$0xf]
      %v809 = vld [vmem:[%s787 + $0x54] sm:$0xf]
      %v810 = vld [vmem:[%s787 + $0x58] sm:$0xf]
      %v811 = vld [vmem:[%s787 + $0x5c] sm:$0xf]
      %v812 = vld [vmem:[%s787 + $0x60] sm:$0xf]
      %v813 = vld [vmem:[%s787 + $0x64] sm:$0xf]
      %v814 = vld [vmem:[%s787 + $0x68] sm:$0xf]
      %v815 = vld [vmem:[%s787 + $0x6c] sm:$0xf]
      %v816 = vld [vmem:[%s787 + $0x70] sm:$0xf]
      %v817 = vld [vmem:[%s787 + $0x74] sm:$0xf]
      %v818 = vld [vmem:[%s787 + $0x78] sm:$0xf]
      %v819 = vld [vmem:[%s787 + $0x7c] sm:$0xf]
      %v821 = vunpack.c.l.b16 %v786
      %v822 = vunpack.c.h.b16 %v786
      %v823 = vpack.c.b16 %v627, %v821
      %v824 = vpack.c.b16 %v628, %v822
      %v825 = vrot.slane %v823, 2
      %v826 = vrot.slane %v824, 2
      %v861 = vunpack.c.l.b16 %v788
      %v862 = vunpack.c.l.b16 %v789
      %v863 = vunpack.c.l.b16 %v790
      %v864 = vunpack.c.l.b16 %v791
      %v865 = vunpack.c.l.b16 %v792
      %v866 = vunpack.c.l.b16 %v793
      %v867 = vunpack.c.l.b16 %v794
      %v868 = vunpack.c.l.b16 %v795
      %v869 = vunpack.c.l.b16 %v796
      %v870 = vunpack.c.l.b16 %v797
      %v871 = vunpack.c.l.b16 %v798
      %v872 = vunpack.c.l.b16 %v799
      %v873 = vunpack.c.l.b16 %v800
      %v874 = vunpack.c.l.b16 %v801
      %v875 = vunpack.c.l.b16 %v802
      %v876 = vunpack.c.l.b16 %v803
      %v877 = vunpack.c.l.b16 %v804
      %v878 = vunpack.c.l.b16 %v805
      %v879 = vunpack.c.l.b16 %v806
      %v880 = vunpack.c.l.b16 %v807
      %v881 = vunpack.c.l.b16 %v808
      %v882 = vunpack.c.l.b16 %v809
      %v883 = vunpack.c.l.b16 %v810
      %v884 = vunpack.c.l.b16 %v811
      %v885 = vunpack.c.l.b16 %v812
      %v886 = vunpack.c.l.b16 %v813
      %v887 = vunpack.c.l.b16 %v814
      %v888 = vunpack.c.l.b16 %v815
      %v889 = vunpack.c.l.b16 %v816
      %v890 = vunpack.c.l.b16 %v817
      %v891 = vunpack.c.l.b16 %v818
      %v892 = vunpack.c.l.b16 %v819
      %v893 = vpack.c.b16 %v862, %v861
      %v894 = vpack.c.b16 %v864, %v863
      %v895 = vpack.c.b16 %v866, %v865
      %v896 = vpack.c.b16 %v868, %v867
      %v897 = vpack.c.b16 %v870, %v869
      %v898 = vpack.c.b16 %v872, %v871
      %v899 = vpack.c.b16 %v874, %v873
      %v900 = vpack.c.b16 %v876, %v875
      %v901 = vpack.c.b16 %v878, %v877
      %v902 = vpack.c.b16 %v880, %v879
      %v903 = vpack.c.b16 %v882, %v881
      %v904 = vpack.c.b16 %v884, %v883
      %v905 = vpack.c.b16 %v886, %v885
      %v906 = vpack.c.b16 %v888, %v887
      %v907 = vpack.c.b16 %v890, %v889
      %v908 = vpack.c.b16 %v892, %v891
      %925 = vmatprep.subr.bf16.mxu0 0
      %926 = vmatpush1.bf16.msra.mxu0 %v900
      %927 = vmatprep.subr.bf16.mxu0 0
      %928 = vmatpush1.bf16.msra.mxu0 %v899
      %929 = vmatprep.subr.bf16.mxu0 0
      %930 = vmatpush1.bf16.msra.mxu0 %v898
      %931 = vmatprep.subr.bf16.mxu0 0
      %932 = vmatpush1.bf16.msra.mxu0 %v897
      %933 = vmatprep.subr.bf16.mxu0 0
      %934 = vmatpush1.bf16.msra.mxu0 %v896
      %935 = vmatprep.subr.bf16.mxu0 0
      %936 = vmatpush1.bf16.msra.mxu0 %v895
      %937 = vmatprep.subr.bf16.mxu0 0
      %938 = vmatpush1.bf16.msra.mxu0 %v894
      %939 = vmatprep.subr.bf16.mxu0 0
      %940 = vmatpush1.bf16.msra.mxu0 %v893
      %941 = vmatprep.subr.bf16.mxu0 0
      %942 = vmatpush2.bf16.msra.mxu0 %v908
      %943 = vmatprep.subr.bf16.mxu0 0
      %944 = vmatpush2.bf16.msra.mxu0 %v907
      %945 = vmatprep.subr.bf16.mxu0 0
      %946 = vmatpush2.bf16.msra.mxu0 %v906
      %947 = vmatprep.subr.bf16.mxu0 0
      %948 = vmatpush2.bf16.msra.mxu0 %v905
      %949 = vmatprep.subr.bf16.mxu0 0
      %950 = vmatpush2.bf16.msra.mxu0 %v904
      %951 = vmatprep.subr.bf16.mxu0 0
      %952 = vmatpush2.bf16.msra.mxu0 %v903
      %953 = vmatprep.subr.bf16.mxu0 0
      %954 = vmatpush2.bf16.msra.mxu0 %v902
      %955 = vmatprep.subr.bf16.mxu0 0
      %956 = vmatpush2.bf16.msra.mxu0 %v901
      %957 = vmatprep.mubr.bf16.mxu0 %v826
      %958 = vmatmul.mubr.bf16.gmra.mxu0 %v825
      %v959 = vpop.f32.mrf.mxu0
      %v960 = vadd.f32 0.0, %v959
      %v961 = vpop.f32.mrf.mxu0
      %v962 = vpop.f32.mrf.mxu0
      %v963 = vpop.f32.mrf.mxu0
      %964 = vdwg.mxu0
      %v965 = vadd.f32 %v785, %v960
      %v966 = vld [vmem:[%s212] sm:$0x1]
      %v968 = vlaneseq
      %v969 = vshrl.u32 %v968, 7
      %v970 = vsub.s32 0, %v969
      %v971 = vrot.slane %v966, %v970
      %v973 = vadd.f32 %v965, %v971
      %v974 = vmax.f32 %v973, 0.0
      %v975 = vpack.c.bf16 %v974, %v974
      %976 = vst [vmem:[%s219] sm:$0x7] %v975
      %p977 = scmp.lt.s32.totalorder %s18, 1
      %s978 = scalar_select %p977, %s18, 1
      %p979 = scmp.lt.s32.totalorder %s19, 0
      %s980 = scalar_select %p979, %s19, 0
      %s981 = sadd.s32 %s980, %s978
      %s982 = smul.addr %s981, 4
      %s983 = scalar_lea.vmem %s3, %s982
      // Predicated region
      $region33: #{backbone_base_forward.7} parent=31 // pred_check
        %p984 = pneg %p124
      $region34: #{backbone_base_forward.7} parent=31 // pred_check_branch
        %986 = sbr.rel (%p984) target = $region36
      $region35: #{backbone_base_forward.7} parent=31 // pred_region
        _
      $region36: #{backbone_base_forward.7} parent=31 // pred_fallthru
        _
    $region32: #{backbone_base_forward.7} parent=5 // pred_fallthru
      _
    %p987 = scmp.le.s32.totalorder 2, %s9
    // Predicated region
    $region37: #{backbone_base_forward.7} parent=5 // pred_check
      %p988 = pneg %p987
    $region38: #{backbone_base_forward.7} parent=5 // pred_check_branch
      %990 = sbr.rel (%p988) target = $region40
    $region39: #{backbone_base_forward.7} parent=5 // pred_region
      %s991 = ssub.s32 %s9, 2
      // Predicated region
      $region41: #{backbone_base_forward.7} parent=39 // pred_check
        %p992 = pneg %p130
      $region42: #{backbone_base_forward.7} parent=39 // pred_check_branch
        %994 = sbr.rel (%p992) target = $region44
      $region43: #{backbone_base_forward.7} parent=39 // pred_region
        %p995 = scmp.lt.s32.totalorder %s20, 1
        %s996 = scalar_select %p995, %s20, 1
        %p997 = scmp.lt.s32.totalorder %s21, 0
        %s998 = scalar_select %p997, %s21, 0
        %s999 = sadd.s32 %s998, %s996
        %s1000 = smul.addr %s999, 4
        %s1001 = scalar_lea.vmem %s3, %s1000
      $region44: #{backbone_base_forward.7} parent=39 // pred_fallthru
        _
    $region40: #{backbone_base_forward.7} parent=5 // pred_fallthru
      _
  $region6: #{backbone_base_forward.7} parent=0 // loop_footer
    %s13 = sadd.s32 1, %s9
  $region7: #{backbone_base_forward.7} parent=0 // loop_footer_branch
    %8 = sbr.rel target = $region3
  $region8: #{backbone_base_forward.7} parent=0 // loop_exit
    _

</llo_original>
